<compile_context>
chip_gen: v5e
topology: v5e:2x2
jax: 0.10.0
libtpu: 0.0.40
codegen_flags: <defaults>
</compile_context>

<pallas_src>
import functools
import math

import jax
import jax.numpy as jnp
from jax.experimental import pallas as pl
from jax.experimental.pallas import tpu as pltpu


# ----------------------------- fused kernel --------------------------------

def _decoder_layer_kernel(
    x_ref, ctx_ref,                                   # [Lin, D], [Lk, D]
    twcat_ref, tbcat_ref,                             # [D, 4D], [1, 4D]
    cf4_ref, sf4_ref,                                 # [4, m, Lin] each
    klwe_ref, klwo_ref,                               # [2m, D, D/2] each
    idft_ref,                                         # [4, S, 2m] (cie,sie,cio,sio)
    wq_ref, bq_ref, wkv_ref, bkv_ref, wo_ref, bo_ref, ln1_ref,
    w1_ref, fb1_ref, w2_ref, fb2_ref, ln2_ref,
    o_ref,                                            # [S, D]
    *, m, num_heads, eps):
  f32 = jnp.float32
  S, D = o_ref.shape
  Lk = ctx_ref.shape[0]
  dh = D // num_heads

  x = x_ref[...]                                      # [Lin, D]
  ctx = ctx_ref[...]                                  # [Lk, D]

  # ---- ConvTranspose1d(kernel=4, stride=4) as one lane-dense matmul --------
  # taps[t, k*D + o] == x1[4t + k, o]  (x1 = conv-transpose output, NLD)
  taps = jnp.dot(x, twcat_ref[...], preferred_element_type=f32) + tbcat_ref[...]

  # ---- FEB_f stage 1: torch.fft.fft(x1, n=m, dim=-2) (real / imag parts) ---
  # re/im = DFT over the first m rows of x1, expressed per conv tap with
  # precomputed (column-permuted, zero-padded) DFT matrices.
  re = jnp.zeros((m, D), f32)
  im = jnp.zeros((m, D), f32)
  for k in range(4):
    tap_k = taps[:, k * D:(k + 1) * D]                # [Lin, D]
    re = re + jnp.dot(cf4_ref[k], tap_k, preferred_element_type=f32)
    im = im + jnp.dot(sf4_ref[k], tap_k, preferred_element_type=f32)
  xcat = jnp.concatenate([re, im], axis=0)            # [2m, D]

  # ---- Kernel_Layer: y[j, o] = sum_i xcat[j, i] * W[j, i, o] ---------------
  # Weights are pre-split host-side into even/odd output columns so the
  # view_as_complex deinterleave needs no in-kernel strided gather.
  # TODO(synk): kept as a VPU broadcast-reduce (proven to lower on Mosaic); an
  # MXU batched dot_general over j gains nothing at these tiny shapes.
  y2e = jnp.sum(xcat[:, :, None] * klwe_ref[...], axis=1)   # [2m, D/2]
  y2o = jnp.sum(xcat[:, :, None] * klwo_ref[...], axis=1)   # [2m, D/2]

  # ---- reshape + view_as_complex + real(ifft(., n=S)) as constant matmuls --
  x2_lo = (jnp.dot(idft_ref[0], y2e, preferred_element_type=f32)
           - jnp.dot(idft_ref[1], y2o, preferred_element_type=f32))
  x2_hi = (jnp.dot(idft_ref[2], y2e, preferred_element_type=f32)
           - jnp.dot(idft_ref[3], y2o, preferred_element_type=f32))
  x2 = jnp.concatenate([x2_lo, x2_hi], axis=1)        # [S, D]

  # ---- cross attention (all heads of this batch element in one pass) -------
  q = jnp.dot(x2, wq_ref[...], preferred_element_type=f32) + bq_ref[...]
  kv = jnp.dot(ctx, wkv_ref[...], preferred_element_type=f32) + bkv_ref[...]
  kk = kv[:, :D]
  vv = kv[:, D:]

  # look-ahead mask built in-kernel (finite negative -> no NaN for masked rows)
  row = jax.lax.broadcasted_iota(jnp.int32, (S, Lk), 0)
  col = jax.lax.broadcasted_iota(jnp.int32, (S, Lk), 1)
  neg = jnp.where(col > row, jnp.float32(-1e30), jnp.float32(0.0))

  scale = 1.0 / math.sqrt(dh)
  heads = []
  for h in range(num_heads):
    qh = q[:, h * dh:(h + 1) * dh] * scale
    kh = kk[:, h * dh:(h + 1) * dh]
    vh = vv[:, h * dh:(h + 1) * dh]
    s = jax.lax.dot_general(qh, kh, (((1,), (1,)), ((), ())),
                            preferred_element_type=f32) + neg       # [S, Lk]
    s = s - jnp.max(s, axis=-1, keepdims=True)
    p = jnp.exp(s)
    p = p * pl.reciprocal(jnp.sum(p, axis=-1, keepdims=True), approx=True)
    heads.append(jnp.dot(p, vh, preferred_element_type=f32))        # [S, dh]
  attn = jnp.concatenate(heads, axis=1)                             # [S, D]
  attn = jnp.dot(attn, wo_ref[...], preferred_element_type=f32) + bo_ref[...]
  # TODO(synk): attention / FFN dropout (p=0.1) uses eval-mode identity;
  # averaged attention weights (last_attn_scores) are not emitted.

  def layer_norm(y, ln):
    g = ln[0:1, :]
    b = ln[1:2, :]
    mu = jnp.mean(y, axis=-1, keepdims=True)
    var = jnp.mean(jnp.square(y - mu), axis=-1, keepdims=True)
    return (y - mu) * jax.lax.rsqrt(var + eps) * g + b

  x3 = layer_norm(x2 + attn, ln1_ref[...])

  # ---- FFN + residual + LayerNorm ------------------------------------------
  hcur = jnp.maximum(
      jnp.dot(x3, w1_ref[...], preferred_element_type=f32) + fb1_ref[...], 0.0)
  ff = jnp.dot(hcur, w2_ref[...], preferred_element_type=f32) + fb2_ref[...]
  o_ref[...] = layer_norm(x3 + ff, ln2_ref[...])


# ------------------------------ parameters ----------------------------------

def init_params(key, m, num_heads, d_model, dff):
  ks = jax.random.split(key, 9)
  s = 0.1
  p = {"m": m, "num_heads": num_heads}
  # ConvTranspose1d(d_model, d_model, kernel_size=4, stride=4): weight (in, out, k)
  p["tconv_w"] = s * jax.random.normal(ks[0], (d_model, d_model, 4), jnp.float32)
  p["tconv_b"] = s * jax.random.normal(ks[1], (d_model,), jnp.float32)
  # Kernel_Layer(m=2m, d_in=d_model, d_out=d_model): nn.init.normal_
  p["kl_w"] = jax.random.normal(ks[2], (2 * m, d_model, d_model), jnp.float32)
  # MultiheadAttention projections (stored pre-transposed: y = x @ W + b)
  p["wq"] = s * jax.random.normal(ks[3], (d_model, d_model), jnp.float32)
  p["wk"] = s * jax.random.normal(ks[4], (d_model, d_model), jnp.float32)
  p["wv"] = s * jax.random.normal(ks[5], (d_model, d_model), jnp.float32)
  p["bq"] = jnp.zeros((d_model,), jnp.float32)
  p["bk"] = jnp.zeros((d_model,), jnp.float32)
  p["bv"] = jnp.zeros((d_model,), jnp.float32)
  p["wo"] = s * jax.random.normal(ks[6], (d_model, d_model), jnp.float32)
  p["bo"] = jnp.zeros((d_model,), jnp.float32)
  p["ln1_g"] = jnp.ones((d_model,), jnp.float32)
  p["ln1_b"] = jnp.zeros((d_model,), jnp.float32)
  p["w1"] = s * jax.random.normal(ks[7], (d_model, dff), jnp.float32)
  p["b1"] = jnp.zeros((dff,), jnp.float32)
  p["w2"] = s * jax.random.normal(ks[8], (dff, d_model), jnp.float32)
  p["b2"] = jnp.zeros((d_model,), jnp.float32)
  p["ln2_g"] = jnp.ones((d_model,), jnp.float32)
  p["ln2_b"] = jnp.zeros((d_model,), jnp.float32)
  return p


def fold_params(params, Lin):
  """One-time host-side parameter re-layout + DFT constant precompute."""
  m = params["m"]
  num_heads = params["num_heads"]
  D = params["tconv_w"].shape[0]
  dff = params["w1"].shape[1]
  S = 4 * Lin
  assert S >= m, "implementation assumes fft length m <= conv output length"
  assert D % 2 == 0 and D % num_heads == 0

  f = {"m": m, "num_heads": num_heads}

  # ConvTranspose1d -> single [D, 4D] matmul (column block k == tap k).
  f["twcat"] = jnp.transpose(params["tconv_w"], (0, 2, 1)).reshape(D, 4 * D)
  f["tbcat"] = jnp.tile(params["tconv_b"], 4).reshape(1, 4 * D)

  # Truncated forward DFT (fft(.., n=m, dim=-2)) expressed per conv tap.
  j = jnp.arange(m, dtype=jnp.float32)
  ang_f = 2.0 * jnp.pi * jnp.outer(j, j) / m
  cf = jnp.cos(ang_f)                                 # Re part of DFT matrix
  sf = -jnp.sin(ang_f)                                # Im part of DFT matrix
  t = jnp.arange(Lin)
  cf4, sf4 = [], []
  for k in range(4):
    p = 4 * t + k                                     # conv-output row index
    valid = p < m
    p_c = jnp.where(valid, p, 0)
    cf4.append(jnp.where(valid[None, :], cf[:, p_c], 0.0))
    sf4.append(jnp.where(valid[None, :], sf[:, p_c], 0.0))
  f["cf4"] = jnp.stack(cf4)                           # [4, m, Lin]
  f["sf4"] = jnp.stack(sf4)

  # Kernel_Layer weights split into even/odd output columns (matches the
  # torch reshape(..., 2) + view_as_complex deinterleave).
  f["klwe"] = params["kl_w"][:, :, 0::2]              # [2m, D, D/2]
  f["klwo"] = params["kl_w"][:, :, 1::2]

  # real(ifft(z, n=S)) with row-parity of the deinterleave and the 1/S scale
  # folded into four [S, 2m] constant matrices.
  s_idx = jnp.arange(S, dtype=jnp.float32)
  p_idx = jnp.arange(m, dtype=jnp.float32)
  ang_i = 2.0 * jnp.pi * jnp.outer(s_idx, p_idx) / S
  ci = jnp.cos(ang_i) / S
  si = jnp.sin(ang_i) / S
  z = jnp.zeros_like(ci)
  cie = jnp.stack([ci, z], axis=-1).reshape(S, 2 * m)
  sie = jnp.stack([si, z], axis=-1).reshape(S, 2 * m)
  cio = jnp.stack([z, ci], axis=-1).reshape(S, 2 * m)
  sio = jnp.stack([z, si], axis=-1).reshape(S, 2 * m)
  f["idft"] = jnp.stack([cie, sie, cio, sio])         # [4, S, 2m]

  # Attention (fused K/V projection) and FFN.
  f["wq"] = params["wq"]
  f["bq"] = params["bq"].reshape(1, D)
  f["wkv"] = jnp.concatenate([params["wk"], params["wv"]], axis=1)
  f["bkv"] = jnp.concatenate([params["bk"], params["bv"]]).reshape(1, 2 * D)
  f["wo"] = params["wo"]
  f["bo"] = params["bo"].reshape(1, D)
  f["ln1"] = jnp.stack([params["ln1_g"], params["ln1_b"]])
  f["w1"] = params["w1"]
  f["fb1"] = params["b1"].reshape(1, dff)
  f["w2"] = params["w2"]
  f["fb2"] = params["b2"].reshape(1, D)
  f["ln2"] = jnp.stack([params["ln2_g"], params["ln2_b"]])
  return f


# ------------------------------ forward pass ---------------------------------

def decoder_layer_up(x, context, folded):
  N, Lin, D = x.shape
  Lk = context.shape[1]
  S = 4 * Lin
  m = folded["m"]
  H = folded["num_heads"]

  kern = functools.partial(_decoder_layer_kernel, m=m, num_heads=H, eps=1e-5)

  def const_spec(arr):
    nd = arr.ndim
    return pl.BlockSpec(arr.shape, lambda n, nd=nd: (0,) * nd)

  weight_names = ["twcat", "tbcat", "cf4", "sf4", "klwe", "klwo", "idft",
                  "wq", "bq", "wkv", "bkv", "wo", "bo", "ln1",
                  "w1", "fb1", "w2", "fb2", "ln2"]
  weights = [folded[k] for k in weight_names]

  in_specs = [
      pl.BlockSpec((None, Lin, D), lambda n: (n, 0, 0)),
      pl.BlockSpec((None, Lk, D), lambda n: (n, 0, 0)),
  ] + [const_spec(w) for w in weights]

  return pl.pallas_call(
      kern,
      out_shape=jax.ShapeDtypeStruct((N, S, D), jnp.float32),
      grid=(N,),
      in_specs=in_specs,
      out_specs=pl.BlockSpec((None, S, D), lambda n: (n, 0, 0)),
      compiler_params=pltpu.CompilerParams(dimension_semantics=("parallel",)),
  )(x, context, *weights)


# --------------------------- pure-JAX reference ------------------------------

def decoder_layer_up_reference(x, context, params):
  """Eval-mode reference mirroring the PyTorch module (uses jnp.fft)."""
  N, Lin, D = x.shape
  m, H = params["m"], params["num_heads"]
  dh = D // H
  S = 4 * Lin
  Lk = context.shape[1]

  taps = jnp.einsum("nti,iok->ntko", x, params["tconv_w"]) + params["tconv_b"]
  x1 = taps.reshape(N, S, D)

  zf = jnp.fft.fft(x1, n=m, axis=-2)
  xc = jnp.concatenate([jnp.real(zf), jnp.imag(zf)], axis=-2)      # [N, 2m, D]
  y = jnp.einsum("nji,jio->njo", xc, params["kl_w"])               # [N, 2m, D]
  zc = y.reshape(N, m, D, 2)
  zz = zc[..., 0] + 1j * zc[..., 1]
  x2 = jnp.real(jnp.fft.ifft(zz, n=S, axis=-2))                    # [N, S, D]

  q = x2 @ params["wq"] + params["bq"]
  k = context @ params["wk"] + params["bk"]
  v = context @ params["wv"] + params["bv"]
  q = q.reshape(N, S, H, dh).transpose(0, 2, 1, 3)
  k = k.reshape(N, Lk, H, dh).transpose(0, 2, 1, 3)
  v = v.reshape(N, Lk, H, dh).transpose(0, 2, 1, 3)
  mask = jnp.where(jnp.arange(Lk)[None, :] > jnp.arange(S)[:, None],
                   -jnp.inf, 0.0)
  s = jnp.einsum("nhqd,nhkd->nhqk", q, k) / math.sqrt(dh) + mask
  p = jax.nn.softmax(s, axis=-1)
  attn = jnp.einsum("nhqk,nhkd->nhqd", p, v)
  attn = attn.transpose(0, 2, 1, 3).reshape(N, S, D)
  attn = attn @ params["wo"] + params["bo"]

  def ln(y, g, b, eps=1e-5):
    mu = jnp.mean(y, axis=-1, keepdims=True)
    var = jnp.mean((y - mu) ** 2, axis=-1, keepdims=True)
    return (y - mu) / jnp.sqrt(var + eps) * g + b

  x3 = ln(x2 + attn, params["ln1_g"], params["ln1_b"])
  hcur = jnp.maximum(x3 @ params["w1"] + params["b1"], 0.0)
  ff = hcur @ params["w2"] + params["b2"]
  return ln(x3 + ff, params["ln2_g"], params["ln2_b"])


# --------------------------------- main ---------------------------------------

if __name__ == "__main__":
  m = 8
  num_heads = 4
  d_model = 32
  dff = 64
  N, Lin, Lctx = 2, 8, 16

  key = jax.random.PRNGKey(0)
  kx, kc, kp = jax.random.split(key, 3)
  x = jax.random.normal(kx, (N, Lin, d_model), jnp.float32)
  context = jax.random.normal(kc, (N, Lctx, d_model), jnp.float32)
  params = init_params(kp, m, num_heads, d_model, dff)

  folded = fold_params(params, Lin)                 # once, outside jit
  fwd = jax.jit(lambda a, b: decoder_layer_up(a, b, folded))
  out = jax.block_until_ready(fwd(x, context))

  assert out.shape == (N, 4 * Lin, d_model), out.shape
  assert bool(jnp.all(jnp.isfinite(out)))

  ref = decoder_layer_up_reference(x, context, params)
  max_diff = float(jnp.max(jnp.abs(out - ref)))
  assert max_diff < 5e-2, f"mismatch vs reference: max abs diff {max_diff}"

  print("KERNEL_OK")
</pallas_src>

<mosaic_0001>
module attributes {stable_mosaic.version = 11 : i64} {
  func.func @_decoder_layer_kernel(%arg0: i32, %arg1: memref<1x8x32xf32, #tpu.memory_space<vmem>>, %arg2: memref<1x16x32xf32, #tpu.memory_space<vmem>>, %arg3: memref<32x128xf32, #tpu.memory_space<vmem>>, %arg4: memref<1x128xf32, #tpu.memory_space<vmem>>, %arg5: memref<4x8x8xf32, #tpu.memory_space<vmem>>, %arg6: memref<4x8x8xf32, #tpu.memory_space<vmem>>, %arg7: memref<16x32x16xf32, #tpu.memory_space<vmem>>, %arg8: memref<16x32x16xf32, #tpu.memory_space<vmem>>, %arg9: memref<4x32x16xf32, #tpu.memory_space<vmem>>, %arg10: memref<32x32xf32, #tpu.memory_space<vmem>>, %arg11: memref<1x32xf32, #tpu.memory_space<vmem>>, %arg12: memref<32x64xf32, #tpu.memory_space<vmem>>, %arg13: memref<1x64xf32, #tpu.memory_space<vmem>>, %arg14: memref<32x32xf32, #tpu.memory_space<vmem>>, %arg15: memref<1x32xf32, #tpu.memory_space<vmem>>, %arg16: memref<2x32xf32, #tpu.memory_space<vmem>>, %arg17: memref<32x64xf32, #tpu.memory_space<vmem>>, %arg18: memref<1x64xf32, #tpu.memory_space<vmem>>, %arg19: memref<64x32xf32, #tpu.memory_space<vmem>>, %arg20: memref<1x32xf32, #tpu.memory_space<vmem>>, %arg21: memref<2x32xf32, #tpu.memory_space<vmem>>, %arg22: memref<1x32x32xf32, #tpu.memory_space<vmem>>) attributes {dimension_semantics = [#tpu.dimension_semantics<parallel>], iteration_bounds = array<i64: 2>, scalar_prefetch = 0 : i64, scratch_operands = 0 : i64, tpu.core_type = #tpu.core_type<tc>, window_params = [{transform_indices = @transform_0, window_bounds = array<i64: 1, 8, 32>}, {transform_indices = @transform_1, window_bounds = array<i64: 1, 16, 32>}, {pipeline_mode = #tpu.pipeline_mode<synchronous>, transform_indices = @transform_2, window_bounds = array<i64: 32, 128>}, {pipeline_mode = #tpu.pipeline_mode<synchronous>, transform_indices = @transform_3, window_bounds = array<i64: 1, 128>}, {pipeline_mode = #tpu.pipeline_mode<synchronous>, transform_indices = @transform_4, window_bounds = array<i64: 4, 8, 8>}, {pipeline_mode = #tpu.pipeline_mode<synchronous>, transform_indices = @transform_5, window_bounds = array<i64: 4, 8, 8>}, {pipeline_mode = #tpu.pipeline_mode<synchronous>, transform_indices = @transform_6, window_bounds = array<i64: 16, 32, 16>}, {pipeline_mode = #tpu.pipeline_mode<synchronous>, transform_indices = @transform_7, window_bounds = array<i64: 16, 32, 16>}, {pipeline_mode = #tpu.pipeline_mode<synchronous>, transform_indices = @transform_8, window_bounds = array<i64: 4, 32, 16>}, {pipeline_mode = #tpu.pipeline_mode<synchronous>, transform_indices = @transform_9, window_bounds = array<i64: 32, 32>}, {pipeline_mode = #tpu.pipeline_mode<synchronous>, transform_indices = @transform_10, window_bounds = array<i64: 1, 32>}, {pipeline_mode = #tpu.pipeline_mode<synchronous>, transform_indices = @transform_11, window_bounds = array<i64: 32, 64>}, {pipeline_mode = #tpu.pipeline_mode<synchronous>, transform_indices = @transform_12, window_bounds = array<i64: 1, 64>}, {pipeline_mode = #tpu.pipeline_mode<synchronous>, transform_indices = @transform_13, window_bounds = array<i64: 32, 32>}, {pipeline_mode = #tpu.pipeline_mode<synchronous>, transform_indices = @transform_14, window_bounds = array<i64: 1, 32>}, {pipeline_mode = #tpu.pipeline_mode<synchronous>, transform_indices = @transform_15, window_bounds = array<i64: 2, 32>}, {pipeline_mode = #tpu.pipeline_mode<synchronous>, transform_indices = @transform_16, window_bounds = array<i64: 32, 64>}, {pipeline_mode = #tpu.pipeline_mode<synchronous>, transform_indices = @transform_17, window_bounds = array<i64: 1, 64>}, {pipeline_mode = #tpu.pipeline_mode<synchronous>, transform_indices = @transform_18, window_bounds = array<i64: 64, 32>}, {pipeline_mode = #tpu.pipeline_mode<synchronous>, transform_indices = @transform_19, window_bounds = array<i64: 1, 32>}, {pipeline_mode = #tpu.pipeline_mode<synchronous>, transform_indices = @transform_20, window_bounds = array<i64: 2, 32>}, {transform_indices = @transform_21, window_bounds = array<i64: 1, 32, 32>}]} {
    %c0 = arith.constant 0 : index
    %c0_0 = arith.constant 0 : index
    %c0_1 = arith.constant 0 : index
    %0 = vector.load %arg1[%c0, %c0_0, %c0_1] : memref<1x8x32xf32, #tpu.memory_space<vmem>>, vector<1x8x32xf32>
    %1 = vector.shape_cast %0 : vector<1x8x32xf32> to vector<8x32xf32>
    %c0_2 = arith.constant 0 : index
    %c0_3 = arith.constant 0 : index
    %c0_4 = arith.constant 0 : index
    %2 = vector.load %arg2[%c0_2, %c0_3, %c0_4] : memref<1x16x32xf32, #tpu.memory_space<vmem>>, vector<1x16x32xf32>
    %3 = vector.shape_cast %2 : vector<1x16x32xf32> to vector<16x32xf32>
    %c0_5 = arith.constant 0 : index
    %c0_6 = arith.constant 0 : index
    %4 = vector.load %arg3[%c0_5, %c0_6] : memref<32x128xf32, #tpu.memory_space<vmem>>, vector<32x128xf32>
    %cst = arith.constant dense<0.000000e+00> : vector<8x128xf32>
    %5 = tpu.matmul %1, %4, %cst {dimension_numbers = #tpu.dot_dimension_numbers<[1], [0], [0], [1], [0, 0, 1, 1], [], []>} : vector<8x32xf32>, vector<32x128xf32>, vector<8x128xf32> -> vector<8x128xf32>
    %c0_7 = arith.constant 0 : index
    %c0_8 = arith.constant 0 : index
    %6 = vector.load %arg4[%c0_7, %c0_8] : memref<1x128xf32, #tpu.memory_space<vmem>>, vector<1x128xf32>
    %7 = vector.broadcast %6 : vector<1x128xf32> to vector<8x128xf32>
    %8 = arith.addf %5, %7 : vector<8x128xf32>
    %cst_9 = arith.constant 0.000000e+00 : f32
    %9 = vector.broadcast %cst_9 : f32 to vector<8x32xf32>
    %cst_10 = arith.constant 0.000000e+00 : f32
    %10 = vector.broadcast %cst_10 : f32 to vector<8x32xf32>
    %11 = vector.extract_strided_slice %8 {offsets = [0, 0], sizes = [8, 32], strides = [1, 1]} : vector<8x128xf32> to vector<8x32xf32>
    %c0_11 = arith.constant 0 : index
    %c0_12 = arith.constant 0 : index
    %c0_13 = arith.constant 0 : index
    %12 = vector.load %arg5[%c0_11, %c0_12, %c0_13] : memref<4x8x8xf32, #tpu.memory_space<vmem>>, vector<1x8x8xf32>
    %13 = vector.shape_cast %12 : vector<1x8x8xf32> to vector<8x8xf32>
    %cst_14 = arith.constant dense<0.000000e+00> : vector<8x32xf32>
    %14 = tpu.matmul %13, %11, %cst_14 {dimension_numbers = #tpu.dot_dimension_numbers<[1], [0], [0], [1], [0, 0, 1, 1], [], []>} : vector<8x8xf32>, vector<8x32xf32>, vector<8x32xf32> -> vector<8x32xf32>
    %15 = arith.addf %9, %14 : vector<8x32xf32>
    %c0_15 = arith.constant 0 : index
    %c0_16 = arith.constant 0 : index
    %c0_17 = arith.constant 0 : index
    %16 = vector.load %arg6[%c0_15, %c0_16, %c0_17] : memref<4x8x8xf32, #tpu.memory_space<vmem>>, vector<1x8x8xf32>
    %17 = vector.shape_cast %16 : vector<1x8x8xf32> to vector<8x8xf32>
    %cst_18 = arith.constant dense<0.000000e+00> : vector<8x32xf32>
    %18 = tpu.matmul %17, %11, %cst_18 {dimension_numbers = #tpu.dot_dimension_numbers<[1], [0], [0], [1], [0, 0, 1, 1], [], []>} : vector<8x8xf32>, vector<8x32xf32>, vector<8x32xf32> -> vector<8x32xf32>
    %19 = arith.addf %10, %18 : vector<8x32xf32>
    %20 = vector.extract_strided_slice %8 {offsets = [0, 32], sizes = [8, 32], strides = [1, 1]} : vector<8x128xf32> to vector<8x32xf32>
    %c1 = arith.constant 1 : index
    %c0_19 = arith.constant 0 : index
    %c0_20 = arith.constant 0 : index
    %21 = vector.load %arg5[%c1, %c0_19, %c0_20] : memref<4x8x8xf32, #tpu.memory_space<vmem>>, vector<1x8x8xf32>
    %22 = vector.shape_cast %21 : vector<1x8x8xf32> to vector<8x8xf32>
    %cst_21 = arith.constant dense<0.000000e+00> : vector<8x32xf32>
    %23 = tpu.matmul %22, %20, %cst_21 {dimension_numbers = #tpu.dot_dimension_numbers<[1], [0], [0], [1], [0, 0, 1, 1], [], []>} : vector<8x8xf32>, vector<8x32xf32>, vector<8x32xf32> -> vector<8x32xf32>
    %24 = arith.addf %15, %23 : vector<8x32xf32>
    %c1_22 = arith.constant 1 : index
    %c0_23 = arith.constant 0 : index
    %c0_24 = arith.constant 0 : index
    %25 = vector.load %arg6[%c1_22, %c0_23, %c0_24] : memref<4x8x8xf32, #tpu.memory_space<vmem>>, vector<1x8x8xf32>
    %26 = vector.shape_cast %25 : vector<1x8x8xf32> to vector<8x8xf32>
    %cst_25 = arith.constant dense<0.000000e+00> : vector<8x32xf32>
    %27 = tpu.matmul %26, %20, %cst_25 {dimension_numbers = #tpu.dot_dimension_numbers<[1], [0], [0], [1], [0, 0, 1, 1], [], []>} : vector<8x8xf32>, vector<8x32xf32>, vector<8x32xf32> -> vector<8x32xf32>
    %28 = arith.addf %19, %27 : vector<8x32xf32>
    %29 = vector.extract_strided_slice %8 {offsets = [0, 64], sizes = [8, 32], strides = [1, 1]} : vector<8x128xf32> to vector<8x32xf32>
    %c2 = arith.constant 2 : index
    %c0_26 = arith.constant 0 : index
    %c0_27 = arith.constant 0 : index
    %30 = vector.load %arg5[%c2, %c0_26, %c0_27] : memref<4x8x8xf32, #tpu.memory_space<vmem>>, vector<1x8x8xf32>
    %31 = vector.shape_cast %30 : vector<1x8x8xf32> to vector<8x8xf32>
    %cst_28 = arith.constant dense<0.000000e+00> : vector<8x32xf32>
    %32 = tpu.matmul %31, %29, %cst_28 {dimension_numbers = #tpu.dot_dimension_numbers<[1], [0], [0], [1], [0, 0, 1, 1], [], []>} : vector<8x8xf32>, vector<8x32xf32>, vector<8x32xf32> -> vector<8x32xf32>
    %33 = arith.addf %24, %32 : vector<8x32xf32>
    %c2_29 = arith.constant 2 : index
    %c0_30 = arith.constant 0 : index
    %c0_31 = arith.constant 0 : index
    %34 = vector.load %arg6[%c2_29, %c0_30, %c0_31] : memref<4x8x8xf32, #tpu.memory_space<vmem>>, vector<1x8x8xf32>
    %35 = vector.shape_cast %34 : vector<1x8x8xf32> to vector<8x8xf32>
    %cst_32 = arith.constant dense<0.000000e+00> : vector<8x32xf32>
    %36 = tpu.matmul %35, %29, %cst_32 {dimension_numbers = #tpu.dot_dimension_numbers<[1], [0], [0], [1], [0, 0, 1, 1], [], []>} : vector<8x8xf32>, vector<8x32xf32>, vector<8x32xf32> -> vector<8x32xf32>
    %37 = arith.addf %28, %36 : vector<8x32xf32>
    %38 = vector.extract_strided_slice %8 {offsets = [0, 96], sizes = [8, 32], strides = [1, 1]} : vector<8x128xf32> to vector<8x32xf32>
    %c3 = arith.constant 3 : index
    %c0_33 = arith.constant 0 : index
    %c0_34 = arith.constant 0 : index
    %39 = vector.load %arg5[%c3, %c0_33, %c0_34] : memref<4x8x8xf32, #tpu.memory_space<vmem>>, vector<1x8x8xf32>
    %40 = vector.shape_cast %39 : vector<1x8x8xf32> to vector<8x8xf32>
    %cst_35 = arith.constant dense<0.000000e+00> : vector<8x32xf32>
    %41 = tpu.matmul %40, %38, %cst_35 {dimension_numbers = #tpu.dot_dimension_numbers<[1], [0], [0], [1], [0, 0, 1, 1], [], []>} : vector<8x8xf32>, vector<8x32xf32>, vector<8x32xf32> -> vector<8x32xf32>
    %42 = arith.addf %33, %41 : vector<8x32xf32>
    %c3_36 = arith.constant 3 : index
    %c0_37 = arith.constant 0 : index
    %c0_38 = arith.constant 0 : index
    %43 = vector.load %arg6[%c3_36, %c0_37, %c0_38] : memref<4x8x8xf32, #tpu.memory_space<vmem>>, vector<1x8x8xf32>
    %44 = vector.shape_cast %43 : vector<1x8x8xf32> to vector<8x8xf32>
    %cst_39 = arith.constant dense<0.000000e+00> : vector<8x32xf32>
    %45 = tpu.matmul %44, %38, %cst_39 {dimension_numbers = #tpu.dot_dimension_numbers<[1], [0], [0], [1], [0, 0, 1, 1], [], []>} : vector<8x8xf32>, vector<8x32xf32>, vector<8x32xf32> -> vector<8x32xf32>
    %46 = arith.addf %37, %45 : vector<8x32xf32>
    %47 = tpu.concatenate %42, %46 in 0 : vector<8x32xf32>, vector<8x32xf32> -> vector<16x32xf32>
    %48 = vector.shape_cast %47 : vector<16x32xf32> to vector<16x32x1xf32>
    %c0_40 = arith.constant 0 : index
    %c0_41 = arith.constant 0 : index
    %c0_42 = arith.constant 0 : index
    %49 = vector.load %arg7[%c0_40, %c0_41, %c0_42] : memref<16x32x16xf32, #tpu.memory_space<vmem>>, vector<16x32x16xf32>
    %50 = vector.broadcast %48 : vector<16x32x1xf32> to vector<16x32x16xf32>
    %51 = arith.mulf %50, %49 : vector<16x32x16xf32>
    %cst_43 = arith.constant dense<0.000000e+00> : vector<16x16xf32>
    %52 = vector.multi_reduction <add>, %51, %cst_43 [1] : vector<16x32x16xf32> to vector<16x16xf32>
    %53 = vector.shape_cast %47 : vector<16x32xf32> to vector<16x32x1xf32>
    %c0_44 = arith.constant 0 : index
    %c0_45 = arith.constant 0 : index
    %c0_46 = arith.constant 0 : index
    %54 = vector.load %arg8[%c0_44, %c0_45, %c0_46] : memref<16x32x16xf32, #tpu.memory_space<vmem>>, vector<16x32x16xf32>
    %55 = vector.broadcast %53 : vector<16x32x1xf32> to vector<16x32x16xf32>
    %56 = arith.mulf %55, %54 : vector<16x32x16xf32>
    %cst_47 = arith.constant dense<0.000000e+00> : vector<16x16xf32>
    %57 = vector.multi_reduction <add>, %56, %cst_47 [1] : vector<16x32x16xf32> to vector<16x16xf32>
    %c0_48 = arith.constant 0 : index
    %c0_49 = arith.constant 0 : index
    %c0_50 = arith.constant 0 : index
    %58 = vector.load %arg9[%c0_48, %c0_49, %c0_50] : memref<4x32x16xf32, #tpu.memory_space<vmem>>, vector<1x32x16xf32>
    %59 = vector.shape_cast %58 : vector<1x32x16xf32> to vector<32x16xf32>
    %cst_51 = arith.constant dense<0.000000e+00> : vector<32x16xf32>
    %60 = tpu.matmul %59, %52, %cst_51 {dimension_numbers = #tpu.dot_dimension_numbers<[1], [0], [0], [1], [0, 0, 1, 1], [], []>} : vector<32x16xf32>, vector<16x16xf32>, vector<32x16xf32> -> vector<32x16xf32>
    %c1_52 = arith.constant 1 : index
    %c0_53 = arith.constant 0 : index
    %c0_54 = arith.constant 0 : index
    %61 = vector.load %arg9[%c1_52, %c0_53, %c0_54] : memref<4x32x16xf32, #tpu.memory_space<vmem>>, vector<1x32x16xf32>
    %62 = vector.shape_cast %61 : vector<1x32x16xf32> to vector<32x16xf32>
    %cst_55 = arith.constant dense<0.000000e+00> : vector<32x16xf32>
    %63 = tpu.matmul %62, %57, %cst_55 {dimension_numbers = #tpu.dot_dimension_numbers<[1], [0], [0], [1], [0, 0, 1, 1], [], []>} : vector<32x16xf32>, vector<16x16xf32>, vector<32x16xf32> -> vector<32x16xf32>
    %64 = arith.subf %60, %63 : vector<32x16xf32>
    %c2_56 = arith.constant 2 : index
    %c0_57 = arith.constant 0 : index
    %c0_58 = arith.constant 0 : index
    %65 = vector.load %arg9[%c2_56, %c0_57, %c0_58] : memref<4x32x16xf32, #tpu.memory_space<vmem>>, vector<1x32x16xf32>
    %66 = vector.shape_cast %65 : vector<1x32x16xf32> to vector<32x16xf32>
    %cst_59 = arith.constant dense<0.000000e+00> : vector<32x16xf32>
    %67 = tpu.matmul %66, %52, %cst_59 {dimension_numbers = #tpu.dot_dimension_numbers<[1], [0], [0], [1], [0, 0, 1, 1], [], []>} : vector<32x16xf32>, vector<16x16xf32>, vector<32x16xf32> -> vector<32x16xf32>
    %c3_60 = arith.constant 3 : index
    %c0_61 = arith.constant 0 : index
    %c0_62 = arith.constant 0 : index
    %68 = vector.load %arg9[%c3_60, %c0_61, %c0_62] : memref<4x32x16xf32, #tpu.memory_space<vmem>>, vector<1x32x16xf32>
    %69 = vector.shape_cast %68 : vector<1x32x16xf32> to vector<32x16xf32>
    %cst_63 = arith.constant dense<0.000000e+00> : vector<32x16xf32>
    %70 = tpu.matmul %69, %57, %cst_63 {dimension_numbers = #tpu.dot_dimension_numbers<[1], [0], [0], [1], [0, 0, 1, 1], [], []>} : vector<32x16xf32>, vector<16x16xf32>, vector<32x16xf32> -> vector<32x16xf32>
    %71 = arith.subf %67, %70 : vector<32x16xf32>
    %72 = tpu.concatenate %64, %71 in 1 : vector<32x16xf32>, vector<32x16xf32> -> vector<32x32xf32>
    %c0_64 = arith.constant 0 : index
    %c0_65 = arith.constant 0 : index
    %73 = vector.load %arg10[%c0_64, %c0_65] : memref<32x32xf32, #tpu.memory_space<vmem>>, vector<32x32xf32>
    %cst_66 = arith.constant dense<0.000000e+00> : vector<32x32xf32>
    %74 = tpu.matmul %72, %73, %cst_66 {dimension_numbers = #tpu.dot_dimension_numbers<[1], [0], [0], [1], [0, 0, 1, 1], [], []>} : vector<32x32xf32>, vector<32x32xf32>, vector<32x32xf32> -> vector<32x32xf32>
    %c0_67 = arith.constant 0 : index
    %c0_68 = arith.constant 0 : index
    %75 = vector.load %arg11[%c0_67, %c0_68] : memref<1x32xf32, #tpu.memory_space<vmem>>, vector<1x32xf32>
    %76 = vector.broadcast %75 : vector<1x32xf32> to vector<32x32xf32>
    %77 = arith.addf %74, %76 : vector<32x32xf32>
    %c0_69 = arith.constant 0 : index
    %c0_70 = arith.constant 0 : index
    %78 = vector.load %arg12[%c0_69, %c0_70] : memref<32x64xf32, #tpu.memory_space<vmem>>, vector<32x64xf32>
    %cst_71 = arith.constant dense<0.000000e+00> : vector<16x64xf32>
    %79 = tpu.matmul %3, %78, %cst_71 {dimension_numbers = #tpu.dot_dimension_numbers<[1], [0], [0], [1], [0, 0, 1, 1], [], []>} : vector<16x32xf32>, vector<32x64xf32>, vector<16x64xf32> -> vector<16x64xf32>
    %c0_72 = arith.constant 0 : index
    %c0_73 = arith.constant 0 : index
    %80 = vector.load %arg13[%c0_72, %c0_73] : memref<1x64xf32, #tpu.memory_space<vmem>>, vector<1x64xf32>
    %81 = vector.broadcast %80 : vector<1x64xf32> to vector<16x64xf32>
    %82 = arith.addf %79, %81 : vector<16x64xf32>
    %83 = vector.extract_strided_slice %82 {offsets = [0, 0], sizes = [16, 32], strides = [1, 1]} : vector<16x64xf32> to vector<16x32xf32>
    %84 = vector.extract_strided_slice %82 {offsets = [0, 32], sizes = [16, 32], strides = [1, 1]} : vector<16x64xf32> to vector<16x32xf32>
    %85 = tpu.iota {dimensions = array<i32: 0>} : vector<32x16xi32>
    %86 = tpu.iota {dimensions = array<i32: 1>} : vector<32x16xi32>
    %87 = arith.cmpi sgt, %86, %85 : vector<32x16xi32>
    %cst_74 = arith.constant -1.000000e+30 : f32
    %cst_75 = arith.constant 0.000000e+00 : f32
    %88 = vector.broadcast %cst_74 : f32 to vector<32x16xf32>
    %89 = vector.broadcast %cst_75 : f32 to vector<32x16xf32>
    %90 = arith.select %87, %88, %89 : vector<32x16xi1>, vector<32x16xf32>
    %91 = vector.extract_strided_slice %77 {offsets = [0, 0], sizes = [32, 8], strides = [1, 1]} : vector<32x32xf32> to vector<32x8xf32>
    %cst_76 = arith.constant 0.353553385 : f32
    %92 = vector.broadcast %cst_76 : f32 to vector<32x8xf32>
    %93 = arith.mulf %91, %92 : vector<32x8xf32>
    %94 = vector.extract_strided_slice %83 {offsets = [0, 0], sizes = [16, 8], strides = [1, 1]} : vector<16x32xf32> to vector<16x8xf32>
    %95 = vector.extract_strided_slice %84 {offsets = [0, 0], sizes = [16, 8], strides = [1, 1]} : vector<16x32xf32> to vector<16x8xf32>
    %cst_77 = arith.constant dense<0.000000e+00> : vector<32x16xf32>
    %96 = tpu.matmul %93, %94, %cst_77 {dimension_numbers = #tpu.dot_dimension_numbers<[1], [1], [0], [0], [0, 0, 1, 0], [], []>} : vector<32x8xf32>, vector<16x8xf32>, vector<32x16xf32> -> vector<32x16xf32>
    %97 = arith.addf %96, %90 : vector<32x16xf32>
    %cst_78 = arith.constant dense<0xFF800000> : vector<32xf32>
    %98 = vector.multi_reduction <maximumf>, %97, %cst_78 [1] : vector<32x16xf32> to vector<32xf32>
    %99 = vector.shape_cast %98 : vector<32xf32> to vector<32x1xf32>
    %100 = vector.broadcast %99 : vector<32x1xf32> to vector<32x16xf32>
    %101 = arith.subf %97, %100 : vector<32x16xf32>
    %102 = math.exp %101 : vector<32x16xf32>
    %cst_79 = arith.constant dense<0.000000e+00> : vector<32xf32>
    %103 = vector.multi_reduction <add>, %102, %cst_79 [1] : vector<32x16xf32> to vector<32xf32>
    %104 = vector.shape_cast %103 : vector<32xf32> to vector<32x1xf32>
    %105 = tpu.reciprocal %104 {approx = true} : vector<32x1xf32> -> vector<32x1xf32>
    %106 = vector.broadcast %105 : vector<32x1xf32> to vector<32x16xf32>
    %107 = arith.mulf %102, %106 : vector<32x16xf32>
    %cst_80 = arith.constant dense<0.000000e+00> : vector<32x8xf32>
    %108 = tpu.matmul %107, %95, %cst_80 {dimension_numbers = #tpu.dot_dimension_numbers<[1], [0], [0], [1], [0, 0, 1, 1], [], []>} : vector<32x16xf32>, vector<16x8xf32>, vector<32x8xf32> -> vector<32x8xf32>
    %109 = vector.extract_strided_slice %77 {offsets = [0, 8], sizes = [32, 8], strides = [1, 1]} : vector<32x32xf32> to vector<32x8xf32>
    %cst_81 = arith.constant 0.353553385 : f32
    %110 = vector.broadcast %cst_81 : f32 to vector<32x8xf32>
    %111 = arith.mulf %109, %110 : vector<32x8xf32>
    %112 = vector.extract_strided_slice %83 {offsets = [0, 8], sizes = [16, 8], strides = [1, 1]} : vector<16x32xf32> to vector<16x8xf32>
    %113 = vector.extract_strided_slice %84 {offsets = [0, 8], sizes = [16, 8], strides = [1, 1]} : vector<16x32xf32> to vector<16x8xf32>
    %cst_82 = arith.constant dense<0.000000e+00> : vector<32x16xf32>
    %114 = tpu.matmul %111, %112, %cst_82 {dimension_numbers = #tpu.dot_dimension_numbers<[1], [1], [0], [0], [0, 0, 1, 0], [], []>} : vector<32x8xf32>, vector<16x8xf32>, vector<32x16xf32> -> vector<32x16xf32>
    %115 = arith.addf %114, %90 : vector<32x16xf32>
    %cst_83 = arith.constant dense<0xFF800000> : vector<32xf32>
    %116 = vector.multi_reduction <maximumf>, %115, %cst_83 [1] : vector<32x16xf32> to vector<32xf32>
    %117 = vector.shape_cast %116 : vector<32xf32> to vector<32x1xf32>
    %118 = vector.broadcast %117 : vector<32x1xf32> to vector<32x16xf32>
    %119 = arith.subf %115, %118 : vector<32x16xf32>
    %120 = math.exp %119 : vector<32x16xf32>
    %cst_84 = arith.constant dense<0.000000e+00> : vector<32xf32>
    %121 = vector.multi_reduction <add>, %120, %cst_84 [1] : vector<32x16xf32> to vector<32xf32>
    %122 = vector.shape_cast %121 : vector<32xf32> to vector<32x1xf32>
    %123 = tpu.reciprocal %122 {approx = true} : vector<32x1xf32> -> vector<32x1xf32>
    %124 = vector.broadcast %123 : vector<32x1xf32> to vector<32x16xf32>
    %125 = arith.mulf %120, %124 : vector<32x16xf32>
    %cst_85 = arith.constant dense<0.000000e+00> : vector<32x8xf32>
    %126 = tpu.matmul %125, %113, %cst_85 {dimension_numbers = #tpu.dot_dimension_numbers<[1], [0], [0], [1], [0, 0, 1, 1], [], []>} : vector<32x16xf32>, vector<16x8xf32>, vector<32x8xf32> -> vector<32x8xf32>
    %127 = vector.extract_strided_slice %77 {offsets = [0, 16], sizes = [32, 8], strides = [1, 1]} : vector<32x32xf32> to vector<32x8xf32>
    %cst_86 = arith.constant 0.353553385 : f32
    %128 = vector.broadcast %cst_86 : f32 to vector<32x8xf32>
    %129 = arith.mulf %127, %128 : vector<32x8xf32>
    %130 = vector.extract_strided_slice %83 {offsets = [0, 16], sizes = [16, 8], strides = [1, 1]} : vector<16x32xf32> to vector<16x8xf32>
    %131 = vector.extract_strided_slice %84 {offsets = [0, 16], sizes = [16, 8], strides = [1, 1]} : vector<16x32xf32> to vector<16x8xf32>
    %cst_87 = arith.constant dense<0.000000e+00> : vector<32x16xf32>
    %132 = tpu.matmul %129, %130, %cst_87 {dimension_numbers = #tpu.dot_dimension_numbers<[1], [1], [0], [0], [0, 0, 1, 0], [], []>} : vector<32x8xf32>, vector<16x8xf32>, vector<32x16xf32> -> vector<32x16xf32>
    %133 = arith.addf %132, %90 : vector<32x16xf32>
    %cst_88 = arith.constant dense<0xFF800000> : vector<32xf32>
    %134 = vector.multi_reduction <maximumf>, %133, %cst_88 [1] : vector<32x16xf32> to vector<32xf32>
    %135 = vector.shape_cast %134 : vector<32xf32> to vector<32x1xf32>
    %136 = vector.broadcast %135 : vector<32x1xf32> to vector<32x16xf32>
    %137 = arith.subf %133, %136 : vector<32x16xf32>
    %138 = math.exp %137 : vector<32x16xf32>
    %cst_89 = arith.constant dense<0.000000e+00> : vector<32xf32>
    %139 = vector.multi_reduction <add>, %138, %cst_89 [1] : vector<32x16xf32> to vector<32xf32>
    %140 = vector.shape_cast %139 : vector<32xf32> to vector<32x1xf32>
    %141 = tpu.reciprocal %140 {approx = true} : vector<32x1xf32> -> vector<32x1xf32>
    %142 = vector.broadcast %141 : vector<32x1xf32> to vector<32x16xf32>
    %143 = arith.mulf %138, %142 : vector<32x16xf32>
    %cst_90 = arith.constant dense<0.000000e+00> : vector<32x8xf32>
    %144 = tpu.matmul %143, %131, %cst_90 {dimension_numbers = #tpu.dot_dimension_numbers<[1], [0], [0], [1], [0, 0, 1, 1], [], []>} : vector<32x16xf32>, vector<16x8xf32>, vector<32x8xf32> -> vector<32x8xf32>
    %145 = vector.extract_strided_slice %77 {offsets = [0, 24], sizes = [32, 8], strides = [1, 1]} : vector<32x32xf32> to vector<32x8xf32>
    %cst_91 = arith.constant 0.353553385 : f32
    %146 = vector.broadcast %cst_91 : f32 to vector<32x8xf32>
    %147 = arith.mulf %145, %146 : vector<32x8xf32>
    %148 = vector.extract_strided_slice %83 {offsets = [0, 24], sizes = [16, 8], strides = [1, 1]} : vector<16x32xf32> to vector<16x8xf32>
    %149 = vector.extract_strided_slice %84 {offsets = [0, 24], sizes = [16, 8], strides = [1, 1]} : vector<16x32xf32> to vector<16x8xf32>
    %cst_92 = arith.constant dense<0.000000e+00> : vector<32x16xf32>
    %150 = tpu.matmul %147, %148, %cst_92 {dimension_numbers = #tpu.dot_dimension_numbers<[1], [1], [0], [0], [0, 0, 1, 0], [], []>} : vector<32x8xf32>, vector<16x8xf32>, vector<32x16xf32> -> vector<32x16xf32>
    %151 = arith.addf %150, %90 : vector<32x16xf32>
    %cst_93 = arith.constant dense<0xFF800000> : vector<32xf32>
    %152 = vector.multi_reduction <maximumf>, %151, %cst_93 [1] : vector<32x16xf32> to vector<32xf32>
    %153 = vector.shape_cast %152 : vector<32xf32> to vector<32x1xf32>
    %154 = vector.broadcast %153 : vector<32x1xf32> to vector<32x16xf32>
    %155 = arith.subf %151, %154 : vector<32x16xf32>
    %156 = math.exp %155 : vector<32x16xf32>
    %cst_94 = arith.constant dense<0.000000e+00> : vector<32xf32>
    %157 = vector.multi_reduction <add>, %156, %cst_94 [1] : vector<32x16xf32> to vector<32xf32>
    %158 = vector.shape_cast %157 : vector<32xf32> to vector<32x1xf32>
    %159 = tpu.reciprocal %158 {approx = true} : vector<32x1xf32> -> vector<32x1xf32>
    %160 = vector.broadcast %159 : vector<32x1xf32> to vector<32x16xf32>
    %161 = arith.mulf %156, %160 : vector<32x16xf32>
    %cst_95 = arith.constant dense<0.000000e+00> : vector<32x8xf32>
    %162 = tpu.matmul %161, %149, %cst_95 {dimension_numbers = #tpu.dot_dimension_numbers<[1], [0], [0], [1], [0, 0, 1, 1], [], []>} : vector<32x16xf32>, vector<16x8xf32>, vector<32x8xf32> -> vector<32x8xf32>
    %163 = tpu.concatenate %108, %126, %144, %162 in 1 : vector<32x8xf32>, vector<32x8xf32>, vector<32x8xf32>, vector<32x8xf32> -> vector<32x32xf32>
    %c0_96 = arith.constant 0 : index
    %c0_97 = arith.constant 0 : index
    %164 = vector.load %arg14[%c0_96, %c0_97] : memref<32x32xf32, #tpu.memory_space<vmem>>, vector<32x32xf32>
    %cst_98 = arith.constant dense<0.000000e+00> : vector<32x32xf32>
    %165 = tpu.matmul %163, %164, %cst_98 {dimension_numbers = #tpu.dot_dimension_numbers<[1], [0], [0], [1], [0, 0, 1, 1], [], []>} : vector<32x32xf32>, vector<32x32xf32>, vector<32x32xf32> -> vector<32x32xf32>
    %c0_99 = arith.constant 0 : index
    %c0_100 = arith.constant 0 : index
    %166 = vector.load %arg15[%c0_99, %c0_100] : memref<1x32xf32, #tpu.memory_space<vmem>>, vector<1x32xf32>
    %167 = vector.broadcast %166 : vector<1x32xf32> to vector<32x32xf32>
    %168 = arith.addf %165, %167 : vector<32x32xf32>
    %169 = arith.addf %72, %168 : vector<32x32xf32>
    %c0_101 = arith.constant 0 : index
    %c0_102 = arith.constant 0 : index
    %170 = vector.load %arg16[%c0_101, %c0_102] : memref<2x32xf32, #tpu.memory_space<vmem>>, vector<2x32xf32>
    %171 = vector.extract_strided_slice %170 {offsets = [0, 0], sizes = [1, 32], strides = [1, 1]} : vector<2x32xf32> to vector<1x32xf32>
    %172 = vector.extract_strided_slice %170 {offsets = [1, 0], sizes = [1, 32], strides = [1, 1]} : vector<2x32xf32> to vector<1x32xf32>
    %cst_103 = arith.constant dense<0.000000e+00> : vector<32xf32>
    %173 = vector.multi_reduction <add>, %169, %cst_103 [1] : vector<32x32xf32> to vector<32xf32>
    %174 = vector.shape_cast %173 : vector<32xf32> to vector<32x1xf32>
    %cst_104 = arith.constant 3.200000e+01 : f32
    %175 = vector.broadcast %cst_104 : f32 to vector<32x1xf32>
    %176 = arith.divf %174, %175 : vector<32x1xf32>
    %177 = vector.broadcast %176 : vector<32x1xf32> to vector<32x32xf32>
    %178 = arith.subf %169, %177 : vector<32x32xf32>
    %179 = arith.mulf %178, %178 : vector<32x32xf32>
    %cst_105 = arith.constant dense<0.000000e+00> : vector<32xf32>
    %180 = vector.multi_reduction <add>, %179, %cst_105 [1] : vector<32x32xf32> to vector<32xf32>
    %181 = vector.shape_cast %180 : vector<32xf32> to vector<32x1xf32>
    %cst_106 = arith.constant 3.200000e+01 : f32
    %182 = vector.broadcast %cst_106 : f32 to vector<32x1xf32>
    %183 = arith.divf %181, %182 : vector<32x1xf32>
    %184 = vector.broadcast %176 : vector<32x1xf32> to vector<32x32xf32>
    %185 = arith.subf %169, %184 : vector<32x32xf32>
    %cst_107 = arith.constant 9.99999974E-6 : f32
    %186 = vector.broadcast %cst_107 : f32 to vector<32x1xf32>
    %187 = arith.addf %183, %186 : vector<32x1xf32>
    %188 = math.rsqrt %187 : vector<32x1xf32>
    %189 = vector.broadcast %188 : vector<32x1xf32> to vector<32x32xf32>
    %190 = arith.mulf %185, %189 : vector<32x32xf32>
    %191 = vector.broadcast %171 : vector<1x32xf32> to vector<32x32xf32>
    %192 = arith.mulf %190, %191 : vector<32x32xf32>
    %193 = vector.broadcast %172 : vector<1x32xf32> to vector<32x32xf32>
    %194 = arith.addf %192, %193 : vector<32x32xf32>
    %c0_108 = arith.constant 0 : index
    %c0_109 = arith.constant 0 : index
    %195 = vector.load %arg17[%c0_108, %c0_109] : memref<32x64xf32, #tpu.memory_space<vmem>>, vector<32x64xf32>
    %cst_110 = arith.constant dense<0.000000e+00> : vector<32x64xf32>
    %196 = tpu.matmul %194, %195, %cst_110 {dimension_numbers = #tpu.dot_dimension_numbers<[1], [0], [0], [1], [0, 0, 1, 1], [], []>} : vector<32x32xf32>, vector<32x64xf32>, vector<32x64xf32> -> vector<32x64xf32>
    %c0_111 = arith.constant 0 : index
    %c0_112 = arith.constant 0 : index
    %197 = vector.load %arg18[%c0_111, %c0_112] : memref<1x64xf32, #tpu.memory_space<vmem>>, vector<1x64xf32>
    %198 = vector.broadcast %197 : vector<1x64xf32> to vector<32x64xf32>
    %199 = arith.addf %196, %198 : vector<32x64xf32>
    %cst_113 = arith.constant 0.000000e+00 : f32
    %200 = vector.broadcast %cst_113 : f32 to vector<32x64xf32>
    %201 = arith.maximumf %199, %200 : vector<32x64xf32>
    %c0_114 = arith.constant 0 : index
    %c0_115 = arith.constant 0 : index
    %202 = vector.load %arg19[%c0_114, %c0_115] : memref<64x32xf32, #tpu.memory_space<vmem>>, vector<64x32xf32>
    %cst_116 = arith.constant dense<0.000000e+00> : vector<32x32xf32>
    %203 = tpu.matmul %201, %202, %cst_116 {dimension_numbers = #tpu.dot_dimension_numbers<[1], [0], [0], [1], [0, 0, 1, 1], [], []>} : vector<32x64xf32>, vector<64x32xf32>, vector<32x32xf32> -> vector<32x32xf32>
    %c0_117 = arith.constant 0 : index
    %c0_118 = arith.constant 0 : index
    %204 = vector.load %arg20[%c0_117, %c0_118] : memref<1x32xf32, #tpu.memory_space<vmem>>, vector<1x32xf32>
    %205 = vector.broadcast %204 : vector<1x32xf32> to vector<32x32xf32>
    %206 = arith.addf %203, %205 : vector<32x32xf32>
    %207 = arith.addf %194, %206 : vector<32x32xf32>
    %c0_119 = arith.constant 0 : index
    %c0_120 = arith.constant 0 : index
    %208 = vector.load %arg21[%c0_119, %c0_120] : memref<2x32xf32, #tpu.memory_space<vmem>>, vector<2x32xf32>
    %209 = vector.extract_strided_slice %208 {offsets = [0, 0], sizes = [1, 32], strides = [1, 1]} : vector<2x32xf32> to vector<1x32xf32>
    %210 = vector.extract_strided_slice %208 {offsets = [1, 0], sizes = [1, 32], strides = [1, 1]} : vector<2x32xf32> to vector<1x32xf32>
    %cst_121 = arith.constant dense<0.000000e+00> : vector<32xf32>
    %211 = vector.multi_reduction <add>, %207, %cst_121 [1] : vector<32x32xf32> to vector<32xf32>
    %212 = vector.shape_cast %211 : vector<32xf32> to vector<32x1xf32>
    %cst_122 = arith.constant 3.200000e+01 : f32
    %213 = vector.broadcast %cst_122 : f32 to vector<32x1xf32>
    %214 = arith.divf %212, %213 : vector<32x1xf32>
    %215 = vector.broadcast %214 : vector<32x1xf32> to vector<32x32xf32>
    %216 = arith.subf %207, %215 : vector<32x32xf32>
    %217 = arith.mulf %216, %216 : vector<32x32xf32>
    %cst_123 = arith.constant dense<0.000000e+00> : vector<32xf32>
    %218 = vector.multi_reduction <add>, %217, %cst_123 [1] : vector<32x32xf32> to vector<32xf32>
    %219 = vector.shape_cast %218 : vector<32xf32> to vector<32x1xf32>
    %cst_124 = arith.constant 3.200000e+01 : f32
    %220 = vector.broadcast %cst_124 : f32 to vector<32x1xf32>
    %221 = arith.divf %219, %220 : vector<32x1xf32>
    %222 = vector.broadcast %214 : vector<32x1xf32> to vector<32x32xf32>
    %223 = arith.subf %207, %222 : vector<32x32xf32>
    %cst_125 = arith.constant 9.99999974E-6 : f32
    %224 = vector.broadcast %cst_125 : f32 to vector<32x1xf32>
    %225 = arith.addf %221, %224 : vector<32x1xf32>
    %226 = math.rsqrt %225 : vector<32x1xf32>
    %227 = vector.broadcast %226 : vector<32x1xf32> to vector<32x32xf32>
    %228 = arith.mulf %223, %227 : vector<32x32xf32>
    %229 = vector.broadcast %209 : vector<1x32xf32> to vector<32x32xf32>
    %230 = arith.mulf %228, %229 : vector<32x32xf32>
    %231 = vector.broadcast %210 : vector<1x32xf32> to vector<32x32xf32>
    %232 = arith.addf %230, %231 : vector<32x32xf32>
    %c0_126 = arith.constant 0 : index
    %c0_127 = arith.constant 0 : index
    %c0_128 = arith.constant 0 : index
    %233 = vector.load %arg22[%c0_126, %c0_127, %c0_128] : memref<1x32x32xf32, #tpu.memory_space<vmem>>, vector<1x32x32xf32>
    %234 = vector.shape_cast %233 : vector<1x32x32xf32> to vector<32x32xf32>
    %235 = vector.shape_cast %232 : vector<32x32xf32> to vector<1x32x32xf32>
    tpu.vector_store %arg22[%c0_126, %c0_127, %c0_128], %235 {strides = array<i32>} : memref<1x32x32xf32, #tpu.memory_space<vmem>>, vector<1x32x32xf32>,
    return
  }
  func.func @transform_0(%arg0: i32) -> (i32, i32, i32) {
    %c0_i32 = arith.constant 0 : i32
    %c0_i32_0 = arith.constant 0 : i32
    %c0_i32_1 = arith.constant 0 : i32
    return %arg0, %c0_i32, %c0_i32_0 : i32, i32, i32
  }
  func.func @transform_1(%arg0: i32) -> (i32, i32, i32) {
    %c0_i32 = arith.constant 0 : i32
    %c0_i32_0 = arith.constant 0 : i32
    %c0_i32_1 = arith.constant 0 : i32
    return %arg0, %c0_i32, %c0_i32_0 : i32, i32, i32
  }
  func.func @transform_2(%arg0: i32) -> (i32, i32) {
    %c0_i32 = arith.constant 0 : i32
    %c0_i32_0 = arith.constant 0 : i32
    %c0_i32_1 = arith.constant 0 : i32
    return %c0_i32, %c0_i32_0 : i32, i32
  }
  func.func @transform_3(%arg0: i32) -> (i32, i32) {
    %c0_i32 = arith.constant 0 : i32
    %c0_i32_0 = arith.constant 0 : i32
    %c0_i32_1 = arith.constant 0 : i32
    return %c0_i32, %c0_i32_0 : i32, i32
  }
  func.func @transform_4(%arg0: i32) -> (i32, i32, i32) {
    %c0_i32 = arith.constant 0 : i32
    %c0_i32_0 = arith.constant 0 : i32
    %c0_i32_1 = arith.constant 0 : i32
    %c0_i32_2 = arith.constant 0 : i32
    return %c0_i32, %c0_i32_0, %c0_i32_1 : i32, i32, i32
  }
  func.func @transform_5(%arg0: i32) -> (i32, i32, i32) {
    %c0_i32 = arith.constant 0 : i32
    %c0_i32_0 = arith.constant 0 : i32
    %c0_i32_1 = arith.constant 0 : i32
    %c0_i32_2 = arith.constant 0 : i32
    return %c0_i32, %c0_i32_0, %c0_i32_1 : i32, i32, i32
  }
  func.func @transform_6(%arg0: i32) -> (i32, i32, i32) {
    %c0_i32 = arith.constant 0 : i32
    %c0_i32_0 = arith.constant 0 : i32
    %c0_i32_1 = arith.constant 0 : i32
    %c0_i32_2 = arith.constant 0 : i32
    return %c0_i32, %c0_i32_0, %c0_i32_1 : i32, i32, i32
  }
  func.func @transform_7(%arg0: i32) -> (i32, i32, i32) {
    %c0_i32 = arith.constant 0 : i32
    %c0_i32_0 = arith.constant 0 : i32
    %c0_i32_1 = arith.constant 0 : i32
    %c0_i32_2 = arith.constant 0 : i32
    return %c0_i32, %c0_i32_0, %c0_i32_1 : i32, i32, i32
  }
  func.func @transform_8(%arg0: i32) -> (i32, i32, i32) {
    %c0_i32 = arith.constant 0 : i32
    %c0_i32_0 = arith.constant 0 : i32
    %c0_i32_1 = arith.constant 0 : i32
    %c0_i32_2 = arith.constant 0 : i32
    return %c0_i32, %c0_i32_0, %c0_i32_1 : i32, i32, i32
  }
  func.func @transform_9(%arg0: i32) -> (i32, i32) {
    %c0_i32 = arith.constant 0 : i32
    %c0_i32_0 = arith.constant 0 : i32
    %c0_i32_1 = arith.constant 0 : i32
    return %c0_i32, %c0_i32_0 : i32, i32
  }
  func.func @transform_10(%arg0: i32) -> (i32, i32) {
    %c0_i32 = arith.constant 0 : i32
    %c0_i32_0 = arith.constant 0 : i32
    %c0_i32_1 = arith.constant 0 : i32
    return %c0_i32, %c0_i32_0 : i32, i32
  }
  func.func @transform_11(%arg0: i32) -> (i32, i32) {
    %c0_i32 = arith.constant 0 : i32
    %c0_i32_0 = arith.constant 0 : i32
    %c0_i32_1 = arith.constant 0 : i32
    return %c0_i32, %c0_i32_0 : i32, i32
  }
  func.func @transform_12(%arg0: i32) -> (i32, i32) {
    %c0_i32 = arith.constant 0 : i32
    %c0_i32_0 = arith.constant 0 : i32
    %c0_i32_1 = arith.constant 0 : i32
    return %c0_i32, %c0_i32_0 : i32, i32
  }
  func.func @transform_13(%arg0: i32) -> (i32, i32) {
    %c0_i32 = arith.constant 0 : i32
    %c0_i32_0 = arith.constant 0 : i32
    %c0_i32_1 = arith.constant 0 : i32
    return %c0_i32, %c0_i32_0 : i32, i32
  }
  func.func @transform_14(%arg0: i32) -> (i32, i32) {
    %c0_i32 = arith.constant 0 : i32
    %c0_i32_0 = arith.constant 0 : i32
    %c0_i32_1 = arith.constant 0 : i32
    return %c0_i32, %c0_i32_0 : i32, i32
  }
  func.func @transform_15(%arg0: i32) -> (i32, i32) {
    %c0_i32 = arith.constant 0 : i32
    %c0_i32_0 = arith.constant 0 : i32
    %c0_i32_1 = arith.constant 0 : i32
    return %c0_i32, %c0_i32_0 : i32, i32
  }
  func.func @transform_16(%arg0: i32) -> (i32, i32) {
    %c0_i32 = arith.constant 0 : i32
    %c0_i32_0 = arith.constant 0 : i32
    %c0_i32_1 = arith.constant 0 : i32
    return %c0_i32, %c0_i32_0 : i32, i32
  }
  func.func @transform_17(%arg0: i32) -> (i32, i32) {
    %c0_i32 = arith.constant 0 : i32
    %c0_i32_0 = arith.constant 0 : i32
    %c0_i32_1 = arith.constant 0 : i32
    return %c0_i32, %c0_i32_0 : i32, i32
  }
  func.func @transform_18(%arg0: i32) -> (i32, i32) {
    %c0_i32 = arith.constant 0 : i32
    %c0_i32_0 = arith.constant 0 : i32
    %c0_i32_1 = arith.constant 0 : i32
    return %c0_i32, %c0_i32_0 : i32, i32
  }
  func.func @transform_19(%arg0: i32) -> (i32, i32) {
    %c0_i32 = arith.constant 0 : i32
    %c0_i32_0 = arith.constant 0 : i32
    %c0_i32_1 = arith.constant 0 : i32
    return %c0_i32, %c0_i32_0 : i32, i32
  }
  func.func @transform_20(%arg0: i32) -> (i32, i32) {
    %c0_i32 = arith.constant 0 : i32
    %c0_i32_0 = arith.constant 0 : i32
    %c0_i32_1 = arith.constant 0 : i32
    return %c0_i32, %c0_i32_0 : i32, i32
  }
  func.func @transform_21(%arg0: i32) -> (i32, i32, i32) {
    %c0_i32 = arith.constant 0 : i32
    %c0_i32_0 = arith.constant 0 : i32
    %c0_i32_1 = arith.constant 0 : i32
    return %arg0, %c0_i32, %c0_i32_0 : i32, i32, i32
  }
}

</mosaic_0001>

<llo_original>
// kernel: _lambda_.1
$region0: #{_lambda_.1}
  #allocation0 [shape = 'u32[]', space=smem, size = 0x4, offset = 0x4, fixed_abs, tag = 'smem constant byte address 0x4 - core index']
  #allocation1 [shape = 'u32[72,128]{1,0:T(1,128)}', space=vmem, size = 0x9000, scoped, tag = 'internal scratch']
  %s0 = inlined_call_operand.hbm [shape: f32[2,8,32], index: 0, kind: input, shape index: {}]
  %s1 = inlined_call_operand.hbm [shape: f32[2,16,32], index: 1, kind: input, shape index: {}]
  %s2 = inlined_call_operand.hbm [shape: f32[32,128], index: 2, kind: input, shape index: {}]
  %s3 = inlined_call_operand.vmem [shape: f32[1,128], index: 3, kind: input, shape index: {}]
  %s4 = inlined_call_operand.hbm [shape: f32[4,8,8], index: 4, kind: input, shape index: {}]
  %s5 = inlined_call_operand.hbm [shape: f32[4,8,8], index: 5, kind: input, shape index: {}]
  %s6 = inlined_call_operand.hbm [shape: f32[16,32,16], index: 6, kind: input, shape index: {}]
  %s7 = inlined_call_operand.hbm [shape: f32[16,32,16], index: 7, kind: input, shape index: {}]
  %s8 = inlined_call_operand.hbm [shape: f32[4,32,16], index: 8, kind: input, shape index: {}]
  %s9 = inlined_call_operand.hbm [shape: f32[32,32], index: 9, kind: input, shape index: {}]
  %s10 = inlined_call_operand.vmem [shape: f32[1,32], index: 10, kind: input, shape index: {}, may-alias: {10,14,19}]
  %s11 = inlined_call_operand.hbm [shape: f32[32,64], index: 11, kind: input, shape index: {}]
  %s12 = inlined_call_operand.vmem [shape: f32[1,64], index: 12, kind: input, shape index: {}, may-alias: {12,17}]
  %s13 = inlined_call_operand.hbm [shape: f32[32,32], index: 13, kind: input, shape index: {}]
  %s14 = inlined_call_operand.vmem [shape: f32[1,32], index: 14, kind: input, shape index: {}, may-alias: {10,14,19}]
  %s15 = inlined_call_operand.vmem [shape: f32[2,32], index: 15, kind: input, shape index: {}, may-alias: {15,20}]
  %s16 = inlined_call_operand.hbm [shape: f32[32,64], index: 16, kind: input, shape index: {}]
  %s17 = inlined_call_operand.vmem [shape: f32[1,64], index: 17, kind: input, shape index: {}, may-alias: {12,17}]
  %s18 = inlined_call_operand.hbm [shape: f32[64,32], index: 18, kind: input, shape index: {}]
  %s19 = inlined_call_operand.vmem [shape: f32[1,32], index: 19, kind: input, shape index: {}, may-alias: {10,14,19}]
  %s20 = inlined_call_operand.vmem [shape: f32[2,32], index: 20, kind: input, shape index: {}, may-alias: {15,20}]
  %s21 = inlined_call_operand.hbm [shape: f32[2,32,32], index: 21, kind: output, shape index: {}]
  %s22 = sld [smem:[#allocation0]]
  $region169: #{_lambda_.1} parent=0
    _
  %s24 = ssub.s32 1, %s22
  %s25 = scalar_select 0, %s24, %s22
  $region1: #{_lambda_.1} parent=0
    #allocation2 [shape = 'u8[8192]{0}', space=vmem, size = 0x2000, scoped, tag = 'input window, operand 0']
    #allocation3 [shape = 's32[2]{0}', space=sflag, size = 0x8, scoped, tag = 'scoped memory for _lambda_.1']
    #allocation4 [shape = 's32[2]{0}', space=sflag, size = 0x8, scoped, tag = 'scoped memory for _lambda_.1']
    #allocation5 [shape = 'u8[16384]{0}', space=vmem, size = 0x4000, scoped, tag = 'input window, operand 1']
    #allocation6 [shape = 's32[2]{0}', space=sflag, size = 0x8, scoped, tag = 'scoped memory for _lambda_.1']
    #allocation7 [shape = 'u8[16384]{0}', space=vmem, size = 0x4000, scoped, tag = 'input window, operand 2, single buffered']
    #allocation8 [shape = 'u8[16384]{0}', space=vmem, size = 0x4000, scoped, tag = 'input window, operand 4, single buffered']
    #allocation9 [shape = 's32[1]{0}', space=sflag, size = 0x4, scoped, tag = 'scoped memory for _lambda_.1']
    #allocation10 [shape = 'u8[16384]{0}', space=vmem, size = 0x4000, scoped, tag = 'input window, operand 5, single buffered']
    #allocation11 [shape = 'u8[262144]{0}', space=vmem, size = 0x40000, scoped, tag = 'input window, operand 6, single buffered']
    #allocation12 [shape = 's32[1]{0}', space=sflag, size = 0x4, scoped, tag = 'scoped memory for _lambda_.1']
    #allocation13 [shape = 'u8[262144]{0}', space=vmem, size = 0x40000, scoped, tag = 'input window, operand 7, single buffered']
    #allocation14 [shape = 'u8[65536]{0}', space=vmem, size = 0x10000, scoped, tag = 'input window, operand 8, single buffered']
    #allocation15 [shape = 's32[1]{0}', space=sflag, size = 0x4, scoped, tag = 'scoped memory for _lambda_.1']
    #allocation16 [shape = 'u8[16384]{0}', space=vmem, size = 0x4000, scoped, tag = 'input window, operand 9, single buffered']
    #allocation17 [shape = 'u8[16384]{0}', space=vmem, size = 0x4000, scoped, tag = 'input window, operand 11, single buffered']
    #allocation18 [shape = 's32[1]{0}', space=sflag, size = 0x4, scoped, tag = 'scoped memory for _lambda_.1']
    #allocation19 [shape = 'u8[16384]{0}', space=vmem, size = 0x4000, scoped, tag = 'input window, operand 13, single buffered']
    #allocation20 [shape = 'u8[16384]{0}', space=vmem, size = 0x4000, scoped, tag = 'input window, operand 16, single buffered']
    #allocation21 [shape = 's32[1]{0}', space=sflag, size = 0x4, scoped, tag = 'scoped memory for _lambda_.1']
    #allocation22 [shape = 'u8[32768]{0}', space=vmem, size = 0x8000, scoped, tag = 'input window, operand 18, single buffered']
    #allocation23 [shape = 'u8[32768]{0}', space=vmem, size = 0x8000, scoped, tag = 'output window, operand 0']
    %26 = vsyncpa [#allocation3], 0
    %s27 = scalar_lea.sflag [#allocation3], 1
    %28 = vsyncpa %s27, 0
    %29 = vsyncpa [#allocation6], 0
    %s30 = scalar_lea.sflag [#allocation6], 1
    %31 = vsyncpa %s30, 0
    %32 = vsyncpa [#allocation9], 0
    %33 = vsyncpa [#allocation12], 0
    %34 = vsyncpa [#allocation15], 0
    %35 = vsyncpa [#allocation18], 0
    %36 = vsyncpa [#allocation21], 0
    %37 = vsyncpa [#allocation4], 0
    %s38 = scalar_lea.sflag [#allocation4], 1
    %39 = vsyncpa %s38, 0
    loop: start=0, step=1, limit=4
    $region2: #{_lambda_.1} parent=1 // loop_pre_header
      _
    $region3: #{_lambda_.1} parent=1 // loop_header
      %s41 = sphi 0, %s45
      %p42 = scmp.ge.s32.totalorder %s41, 4
      %s51 = sphi 0, %s53
      %s54 = sphi 0, %s51
      %s55 = sphi 0, %s54
      %s71 = sphi 0, %s55
      %s77 = sphi 0, %s79
      %s80 = sphi 0, %s77
      %s81 = sphi 0, %s80
      %s97 = sphi 0, %s81
      %s101 = sphi 0, %s101
      %s103 = sphi 0, %s101
      %s104 = sphi 0, %s103
      %s118 = sphi 0, %s104
      %s122 = sphi 0, %s122
      %s124 = sphi 0, %s122
      %s125 = sphi 0, %s124
      %s139 = sphi 0, %s125
      %s143 = sphi 0, %s143
      %s145 = sphi 0, %s143
      %s146 = sphi 0, %s145
      %s160 = sphi 0, %s146
      %s164 = sphi 0, %s164
      %s166 = sphi 0, %s164
      %s167 = sphi 0, %s166
      %s181 = sphi 0, %s167
      %s185 = sphi 0, %s185
      %s187 = sphi 0, %s185
      %s188 = sphi 0, %s187
      %s202 = sphi 0, %s188
      %s206 = sphi 0, %s206
      %s208 = sphi 0, %s206
      %s209 = sphi 0, %s208
      %s223 = sphi 0, %s209
      %s227 = sphi 0, %s227
      %s229 = sphi 0, %s227
      %s230 = sphi 0, %s229
      %s244 = sphi 0, %s230
      %s248 = sphi 0, %s248
      %s250 = sphi 0, %s248
      %s251 = sphi 0, %s250
      %s265 = sphi 0, %s251
      %s269 = sphi 0, %s269
      %s271 = sphi 0, %s269
      %s272 = sphi 0, %s271
      %s286 = sphi 0, %s272
      %s290 = sphi 0, %s290
      %s292 = sphi 0, %s290
      %s293 = sphi 0, %s292
      %s307 = sphi 0, %s293
      %s311 = sphi 0, %s311
      %s313 = sphi 0, %s311
      %s314 = sphi 0, %s313
      %s328 = sphi 0, %s314
      %s332 = sphi 0, %s332
      %s334 = sphi 0, %s332
      %s335 = sphi 0, %s334
      %s349 = sphi 0, %s335
      %s353 = sphi 0, %s353
      %s355 = sphi 0, %s353
      %s356 = sphi 0, %s355
      %s370 = sphi 0, %s356
      %s374 = sphi 0, %s374
      %s376 = sphi 0, %s374
      %s377 = sphi 0, %s376
      %s391 = sphi 0, %s377
      %s395 = sphi 0, %s395
      %s397 = sphi 0, %s395
      %s398 = sphi 0, %s397
      %s412 = sphi 0, %s398
      %s416 = sphi 0, %s416
      %s418 = sphi 0, %s416
      %s419 = sphi 0, %s418
      %s433 = sphi 0, %s419
      %s437 = sphi 0, %s437
      %s439 = sphi 0, %s437
      %s440 = sphi 0, %s439
      %s454 = sphi 0, %s440
      %s458 = sphi 0, %s458
      %s460 = sphi 0, %s458
      %s461 = sphi 0, %s460
      %s475 = sphi 0, %s461
      %s479 = sphi 0, %s479
      %s481 = sphi 0, %s479
      %s482 = sphi 0, %s481
      %s496 = sphi 0, %s482
      %s502 = sphi 0, %s504
      %s505 = sphi 0, %s502
      %s506 = sphi 0, %s505
      %s522 = sphi 0, %s506
    $region4: #{_lambda_.1} parent=1 // loop_header_branch
      %44 = sbr.rel (%p42) target = $region8
    $region5: #{_lambda_.1} parent=1 // loop_body
      %s46 = ssub.s32 %s41, 1
      %s47 = ssub.s32 %s41, 2
      %s48 = sadd.s32 %s41, 1
      %s49 = ssub.s32 %s41, %s48
      %p50 = scmp.eq.s32.totalorder %s49, 0
      %s52 = sadd.s32 %s51, 1
      %s53 = scalar_select %p50, %s51, %s52
      %p56 = pneg %p50
      %p57 = scmp.eq.s32.totalorder %s41, 1
      %p58 = por %p56, %p57
      %p59 = scmp.ne.s32.totalorder %s51, %s54
      %p60 = scmp.eq.s32.totalorder %s41, 0
      %p61 = por %p59, %p60
      %p62 = scmp.ne.s32.totalorder %s51, %s54
      %p63 = scmp.eq.s32.totalorder %s46, 1
      %p64 = por %p62, %p63
      %p65 = scmp.ne.s32.totalorder %s54, %s55
      %p66 = scmp.eq.s32.totalorder %s46, 0
      %p67 = por %p65, %p66
      %p68 = scmp.ne.s32.totalorder %s54, %s55
      %p69 = scmp.eq.s32.totalorder %s47, 1
      %p70 = por %p68, %p69
      %p72 = scmp.ne.s32.totalorder %s55, %s71
      %p73 = scmp.eq.s32.totalorder %s47, 0
      %p74 = por %p72, %p73
      %s75 = ssub.s32 %s41, %s48
      %p76 = scmp.eq.s32.totalorder %s75, 0
      %s78 = sadd.s32 %s77, 1
      %s79 = scalar_select %p76, %s77, %s78
      %p82 = pneg %p76
      %p83 = scmp.eq.s32.totalorder %s41, 1
      %p84 = por %p82, %p83
      %p85 = scmp.ne.s32.totalorder %s77, %s80
      %p86 = scmp.eq.s32.totalorder %s41, 0
      %p87 = por %p85, %p86
      %p88 = scmp.ne.s32.totalorder %s77, %s80
      %p89 = scmp.eq.s32.totalorder %s46, 1
      %p90 = por %p88, %p89
      %p91 = scmp.ne.s32.totalorder %s80, %s81
      %p92 = scmp.eq.s32.totalorder %s46, 0
      %p93 = por %p91, %p92
      %p94 = scmp.ne.s32.totalorder %s80, %s81
      %p95 = scmp.eq.s32.totalorder %s47, 1
      %p96 = por %p94, %p95
      %p98 = scmp.ne.s32.totalorder %s81, %s97
      %p99 = scmp.eq.s32.totalorder %s47, 0
      %p100 = por %p98, %p99
      %s102 = sadd.s32 %s101, 1
      %p105 = scmp.eq.s32.totalorder %s41, 1
      %p106 = scmp.ne.s32.totalorder %s101, %s103
      %p107 = scmp.eq.s32.totalorder %s41, 0
      %p108 = por %p106, %p107
      %p109 = scmp.ne.s32.totalorder %s101, %s103
      %p110 = scmp.eq.s32.totalorder %s46, 1
      %p111 = por %p109, %p110
      %p112 = scmp.ne.s32.totalorder %s103, %s104
      %p113 = scmp.eq.s32.totalorder %s46, 0
      %p114 = por %p112, %p113
      %p115 = scmp.ne.s32.totalorder %s103, %s104
      %p116 = scmp.eq.s32.totalorder %s47, 1
      %p117 = por %p115, %p116
      %p119 = scmp.ne.s32.totalorder %s104, %s118
      %p120 = scmp.eq.s32.totalorder %s47, 0
      %p121 = por %p119, %p120
      %s123 = sadd.s32 %s122, 1
      %p126 = scmp.eq.s32.totalorder %s41, 1
      %p127 = scmp.ne.s32.totalorder %s122, %s124
      %p128 = scmp.eq.s32.totalorder %s41, 0
      %p129 = por %p127, %p128
      %p130 = scmp.ne.s32.totalorder %s122, %s124
      %p131 = scmp.eq.s32.totalorder %s46, 1
      %p132 = por %p130, %p131
      %p133 = scmp.ne.s32.totalorder %s124, %s125
      %p134 = scmp.eq.s32.totalorder %s46, 0
      %p135 = por %p133, %p134
      %p136 = scmp.ne.s32.totalorder %s124, %s125
      %p137 = scmp.eq.s32.totalorder %s47, 1
      %p138 = por %p136, %p137
      %p140 = scmp.ne.s32.totalorder %s125, %s139
      %p141 = scmp.eq.s32.totalorder %s47, 0
      %p142 = por %p140, %p141
      %s144 = sadd.s32 %s143, 1
      %p147 = scmp.eq.s32.totalorder %s41, 1
      %p148 = scmp.ne.s32.totalorder %s143, %s145
      %p149 = scmp.eq.s32.totalorder %s41, 0
      %p150 = por %p148, %p149
      %p151 = scmp.ne.s32.totalorder %s143, %s145
      %p152 = scmp.eq.s32.totalorder %s46, 1
      %p153 = por %p151, %p152
      %p154 = scmp.ne.s32.totalorder %s145, %s146
      %p155 = scmp.eq.s32.totalorder %s46, 0
      %p156 = por %p154, %p155
      %p157 = scmp.ne.s32.totalorder %s145, %s146
      %p158 = scmp.eq.s32.totalorder %s47, 1
      %p159 = por %p157, %p158
      %p161 = scmp.ne.s32.totalorder %s146, %s160
      %p162 = scmp.eq.s32.totalorder %s47, 0
      %p163 = por %p161, %p162
      %s165 = sadd.s32 %s164, 1
      %p168 = scmp.eq.s32.totalorder %s41, 1
      %p169 = scmp.ne.s32.totalorder %s164, %s166
      %p170 = scmp.eq.s32.totalorder %s41, 0
      %p171 = por %p169, %p170
      %p172 = scmp.ne.s32.totalorder %s164, %s166
      %p173 = scmp.eq.s32.totalorder %s46, 1
      %p174 = por %p172, %p173
      %p175 = scmp.ne.s32.totalorder %s166, %s167
      %p176 = scmp.eq.s32.totalorder %s46, 0
      %p177 = por %p175, %p176
      %p178 = scmp.ne.s32.totalorder %s166, %s167
      %p179 = scmp.eq.s32.totalorder %s47, 1
      %p180 = por %p178, %p179
      %p182 = scmp.ne.s32.totalorder %s167, %s181
      %p183 = scmp.eq.s32.totalorder %s47, 0
      %p184 = por %p182, %p183
      %s186 = sadd.s32 %s185, 1
      %p189 = scmp.eq.s32.totalorder %s41, 1
      %p190 = scmp.ne.s32.totalorder %s185, %s187
      %p191 = scmp.eq.s32.totalorder %s41, 0
      %p192 = por %p190, %p191
      %p193 = scmp.ne.s32.totalorder %s185, %s187
      %p194 = scmp.eq.s32.totalorder %s46, 1
      %p195 = por %p193, %p194
      %p196 = scmp.ne.s32.totalorder %s187, %s188
      %p197 = scmp.eq.s32.totalorder %s46, 0
      %p198 = por %p196, %p197
      %p199 = scmp.ne.s32.totalorder %s187, %s188
      %p200 = scmp.eq.s32.totalorder %s47, 1
      %p201 = por %p199, %p200
      %p203 = scmp.ne.s32.totalorder %s188, %s202
      %p204 = scmp.eq.s32.totalorder %s47, 0
      %p205 = por %p203, %p204
      %s207 = sadd.s32 %s206, 1
      %p210 = scmp.eq.s32.totalorder %s41, 1
      %p211 = scmp.ne.s32.totalorder %s206, %s208
      %p212 = scmp.eq.s32.totalorder %s41, 0
      %p213 = por %p211, %p212
      %p214 = scmp.ne.s32.totalorder %s206, %s208
      %p215 = scmp.eq.s32.totalorder %s46, 1
      %p216 = por %p214, %p215
      %p217 = scmp.ne.s32.totalorder %s208, %s209
      %p218 = scmp.eq.s32.totalorder %s46, 0
      %p219 = por %p217, %p218
      %p220 = scmp.ne.s32.totalorder %s208, %s209
      %p221 = scmp.eq.s32.totalorder %s47, 1
      %p222 = por %p220, %p221
      %p224 = scmp.ne.s32.totalorder %s209, %s223
      %p225 = scmp.eq.s32.totalorder %s47, 0
      %p226 = por %p224, %p225
      %s228 = sadd.s32 %s227, 1
      %p231 = scmp.eq.s32.totalorder %s41, 1
      %p232 = scmp.ne.s32.totalorder %s227, %s229
      %p233 = scmp.eq.s32.totalorder %s41, 0
      %p234 = por %p232, %p233
      %p235 = scmp.ne.s32.totalorder %s227, %s229
      %p236 = scmp.eq.s32.totalorder %s46, 1
      %p237 = por %p235, %p236
      %p238 = scmp.ne.s32.totalorder %s229, %s230
      %p239 = scmp.eq.s32.totalorder %s46, 0
      %p240 = por %p238, %p239
      %p241 = scmp.ne.s32.totalorder %s229, %s230
      %p242 = scmp.eq.s32.totalorder %s47, 1
      %p243 = por %p241, %p242
      %p245 = scmp.ne.s32.totalorder %s230, %s244
      %p246 = scmp.eq.s32.totalorder %s47, 0
      %p247 = por %p245, %p246
      %s249 = sadd.s32 %s248, 1
      %p252 = scmp.eq.s32.totalorder %s41, 1
      %p253 = scmp.ne.s32.totalorder %s248, %s250
      %p254 = scmp.eq.s32.totalorder %s41, 0
      %p255 = por %p253, %p254
      %p256 = scmp.ne.s32.totalorder %s248, %s250
      %p257 = scmp.eq.s32.totalorder %s46, 1
      %p258 = por %p256, %p257
      %p259 = scmp.ne.s32.totalorder %s250, %s251
      %p260 = scmp.eq.s32.totalorder %s46, 0
      %p261 = por %p259, %p260
      %p262 = scmp.ne.s32.totalorder %s250, %s251
      %p263 = scmp.eq.s32.totalorder %s47, 1
      %p264 = por %p262, %p263
      %p266 = scmp.ne.s32.totalorder %s251, %s265
      %p267 = scmp.eq.s32.totalorder %s47, 0
      %p268 = por %p266, %p267
      %s270 = sadd.s32 %s269, 1
      %p273 = scmp.eq.s32.totalorder %s41, 1
      %p274 = scmp.ne.s32.totalorder %s269, %s271
      %p275 = scmp.eq.s32.totalorder %s41, 0
      %p276 = por %p274, %p275
      %p277 = scmp.ne.s32.totalorder %s269, %s271
      %p278 = scmp.eq.s32.totalorder %s46, 1
      %p279 = por %p277, %p278
      %p280 = scmp.ne.s32.totalorder %s271, %s272
      %p281 = scmp.eq.s32.totalorder %s46, 0
      %p282 = por %p280, %p281
      %p283 = scmp.ne.s32.totalorder %s271, %s272
      %p284 = scmp.eq.s32.totalorder %s47, 1
      %p285 = por %p283, %p284
      %p287 = scmp.ne.s32.totalorder %s272, %s286
      %p288 = scmp.eq.s32.totalorder %s47, 0
      %p289 = por %p287, %p288
      %s291 = sadd.s32 %s290, 1
      %p294 = scmp.eq.s32.totalorder %s41, 1
      %p295 = scmp.ne.s32.totalorder %s290, %s292
      %p296 = scmp.eq.s32.totalorder %s41, 0
      %p297 = por %p295, %p296
      %p298 = scmp.ne.s32.totalorder %s290, %s292
      %p299 = scmp.eq.s32.totalorder %s46, 1
      %p300 = por %p298, %p299
      %p301 = scmp.ne.s32.totalorder %s292, %s293
      %p302 = scmp.eq.s32.totalorder %s46, 0
      %p303 = por %p301, %p302
      %p304 = scmp.ne.s32.totalorder %s292, %s293
      %p305 = scmp.eq.s32.totalorder %s47, 1
      %p306 = por %p304, %p305
      %p308 = scmp.ne.s32.totalorder %s293, %s307
      %p309 = scmp.eq.s32.totalorder %s47, 0
      %p310 = por %p308, %p309
      %s312 = sadd.s32 %s311, 1
      %p315 = scmp.eq.s32.totalorder %s41, 1
      %p316 = scmp.ne.s32.totalorder %s311, %s313
      %p317 = scmp.eq.s32.totalorder %s41, 0
      %p318 = por %p316, %p317
      %p319 = scmp.ne.s32.totalorder %s311, %s313
      %p320 = scmp.eq.s32.totalorder %s46, 1
      %p321 = por %p319, %p320
      %p322 = scmp.ne.s32.totalorder %s313, %s314
      %p323 = scmp.eq.s32.totalorder %s46, 0
      %p324 = por %p322, %p323
      %p325 = scmp.ne.s32.totalorder %s313, %s314
      %p326 = scmp.eq.s32.totalorder %s47, 1
      %p327 = por %p325, %p326
      %p329 = scmp.ne.s32.totalorder %s314, %s328
      %p330 = scmp.eq.s32.totalorder %s47, 0
      %p331 = por %p329, %p330
      %s333 = sadd.s32 %s332, 1
      %p336 = scmp.eq.s32.totalorder %s41, 1
      %p337 = scmp.ne.s32.totalorder %s332, %s334
      %p338 = scmp.eq.s32.totalorder %s41, 0
      %p339 = por %p337, %p338
      %p340 = scmp.ne.s32.totalorder %s332, %s334
      %p341 = scmp.eq.s32.totalorder %s46, 1
      %p342 = por %p340, %p341
      %p343 = scmp.ne.s32.totalorder %s334, %s335
      %p344 = scmp.eq.s32.totalorder %s46, 0
      %p345 = por %p343, %p344
      %p346 = scmp.ne.s32.totalorder %s334, %s335
      %p347 = scmp.eq.s32.totalorder %s47, 1
      %p348 = por %p346, %p347
      %p350 = scmp.ne.s32.totalorder %s335, %s349
      %p351 = scmp.eq.s32.totalorder %s47, 0
      %p352 = por %p350, %p351
      %s354 = sadd.s32 %s353, 1
      %p357 = scmp.eq.s32.totalorder %s41, 1
      %p358 = scmp.ne.s32.totalorder %s353, %s355
      %p359 = scmp.eq.s32.totalorder %s41, 0
      %p360 = por %p358, %p359
      %p361 = scmp.ne.s32.totalorder %s353, %s355
      %p362 = scmp.eq.s32.totalorder %s46, 1
      %p363 = por %p361, %p362
      %p364 = scmp.ne.s32.totalorder %s355, %s356
      %p365 = scmp.eq.s32.totalorder %s46, 0
      %p366 = por %p364, %p365
      %p367 = scmp.ne.s32.totalorder %s355, %s356
      %p368 = scmp.eq.s32.totalorder %s47, 1
      %p369 = por %p367, %p368
      %p371 = scmp.ne.s32.totalorder %s356, %s370
      %p372 = scmp.eq.s32.totalorder %s47, 0
      %p373 = por %p371, %p372
      %s375 = sadd.s32 %s374, 1
      %p378 = scmp.eq.s32.totalorder %s41, 1
      %p379 = scmp.ne.s32.totalorder %s374, %s376
      %p380 = scmp.eq.s32.totalorder %s41, 0
      %p381 = por %p379, %p380
      %p382 = scmp.ne.s32.totalorder %s374, %s376
      %p383 = scmp.eq.s32.totalorder %s46, 1
      %p384 = por %p382, %p383
      %p385 = scmp.ne.s32.totalorder %s376, %s377
      %p386 = scmp.eq.s32.totalorder %s46, 0
      %p387 = por %p385, %p386
      %p388 = scmp.ne.s32.totalorder %s376, %s377
      %p389 = scmp.eq.s32.totalorder %s47, 1
      %p390 = por %p388, %p389
      %p392 = scmp.ne.s32.totalorder %s377, %s391
      %p393 = scmp.eq.s32.totalorder %s47, 0
      %p394 = por %p392, %p393
      %s396 = sadd.s32 %s395, 1
      %p399 = scmp.eq.s32.totalorder %s41, 1
      %p400 = scmp.ne.s32.totalorder %s395, %s397
      %p401 = scmp.eq.s32.totalorder %s41, 0
      %p402 = por %p400, %p401
      %p403 = scmp.ne.s32.totalorder %s395, %s397
      %p404 = scmp.eq.s32.totalorder %s46, 1
      %p405 = por %p403, %p404
      %p406 = scmp.ne.s32.totalorder %s397, %s398
      %p407 = scmp.eq.s32.totalorder %s46, 0
      %p408 = por %p406, %p407
      %p409 = scmp.ne.s32.totalorder %s397, %s398
      %p410 = scmp.eq.s32.totalorder %s47, 1
      %p411 = por %p409, %p410
      %p413 = scmp.ne.s32.totalorder %s398, %s412
      %p414 = scmp.eq.s32.totalorder %s47, 0
      %p415 = por %p413, %p414
      %s417 = sadd.s32 %s416, 1
      %p420 = scmp.eq.s32.totalorder %s41, 1
      %p421 = scmp.ne.s32.totalorder %s416, %s418
      %p422 = scmp.eq.s32.totalorder %s41, 0
      %p423 = por %p421, %p422
      %p424 = scmp.ne.s32.totalorder %s416, %s418
      %p425 = scmp.eq.s32.totalorder %s46, 1
      %p426 = por %p424, %p425
      %p427 = scmp.ne.s32.totalorder %s418, %s419
      %p428 = scmp.eq.s32.totalorder %s46, 0
      %p429 = por %p427, %p428
      %p430 = scmp.ne.s32.totalorder %s418, %s419
      %p431 = scmp.eq.s32.totalorder %s47, 1
      %p432 = por %p430, %p431
      %p434 = scmp.ne.s32.totalorder %s419, %s433
      %p435 = scmp.eq.s32.totalorder %s47, 0
      %p436 = por %p434, %p435
      %s438 = sadd.s32 %s437, 1
      %p441 = scmp.eq.s32.totalorder %s41, 1
      %p442 = scmp.ne.s32.totalorder %s437, %s439
      %p443 = scmp.eq.s32.totalorder %s41, 0
      %p444 = por %p442, %p443
      %p445 = scmp.ne.s32.totalorder %s437, %s439
      %p446 = scmp.eq.s32.totalorder %s46, 1
      %p447 = por %p445, %p446
      %p448 = scmp.ne.s32.totalorder %s439, %s440
      %p449 = scmp.eq.s32.totalorder %s46, 0
      %p450 = por %p448, %p449
      %p451 = scmp.ne.s32.totalorder %s439, %s440
      %p452 = scmp.eq.s32.totalorder %s47, 1
      %p453 = por %p451, %p452
      %p455 = scmp.ne.s32.totalorder %s440, %s454
      %p456 = scmp.eq.s32.totalorder %s47, 0
      %p457 = por %p455, %p456
      %s459 = sadd.s32 %s458, 1
      %p462 = scmp.eq.s32.totalorder %s41, 1
      %p463 = scmp.ne.s32.totalorder %s458, %s460
      %p464 = scmp.eq.s32.totalorder %s41, 0
      %p465 = por %p463, %p464
      %p466 = scmp.ne.s32.totalorder %s458, %s460
      %p467 = scmp.eq.s32.totalorder %s46, 1
      %p468 = por %p466, %p467
      %p469 = scmp.ne.s32.totalorder %s460, %s461
      %p470 = scmp.eq.s32.totalorder %s46, 0
      %p471 = por %p469, %p470
      %p472 = scmp.ne.s32.totalorder %s460, %s461
      %p473 = scmp.eq.s32.totalorder %s47, 1
      %p474 = por %p472, %p473
      %p476 = scmp.ne.s32.totalorder %s461, %s475
      %p477 = scmp.eq.s32.totalorder %s47, 0
      %p478 = por %p476, %p477
      %s480 = sadd.s32 %s479, 1
      %p483 = scmp.eq.s32.totalorder %s41, 1
      %p484 = scmp.ne.s32.totalorder %s479, %s481
      %p485 = scmp.eq.s32.totalorder %s41, 0
      %p486 = por %p484, %p485
      %p487 = scmp.ne.s32.totalorder %s479, %s481
      %p488 = scmp.eq.s32.totalorder %s46, 1
      %p489 = por %p487, %p488
      %p490 = scmp.ne.s32.totalorder %s481, %s482
      %p491 = scmp.eq.s32.totalorder %s46, 0
      %p492 = por %p490, %p491
      %p493 = scmp.ne.s32.totalorder %s481, %s482
      %p494 = scmp.eq.s32.totalorder %s47, 1
      %p495 = por %p493, %p494
      %p497 = scmp.ne.s32.totalorder %s482, %s496
      %p498 = scmp.eq.s32.totalorder %s47, 0
      %p499 = por %p497, %p498
      %s500 = ssub.s32 %s41, %s48
      %p501 = scmp.eq.s32.totalorder %s500, 0
      %s503 = sadd.s32 %s502, 1
      %s504 = scalar_select %p501, %s502, %s503
      %p507 = pneg %p501
      %p508 = scmp.eq.s32.totalorder %s41, 1
      %p509 = por %p507, %p508
      %p510 = scmp.ne.s32.totalorder %s502, %s505
      %p511 = scmp.eq.s32.totalorder %s41, 0
      %p512 = por %p510, %p511
      %p513 = scmp.ne.s32.totalorder %s502, %s505
      %p514 = scmp.eq.s32.totalorder %s46, 1
      %p515 = por %p513, %p514
      %p516 = scmp.ne.s32.totalorder %s505, %s506
      %p517 = scmp.eq.s32.totalorder %s46, 0
      %p518 = por %p516, %p517
      %p519 = scmp.ne.s32.totalorder %s505, %s506
      %p520 = scmp.eq.s32.totalorder %s47, 1
      %p521 = por %p519, %p520
      %p523 = scmp.ne.s32.totalorder %s506, %s522
      %p524 = scmp.eq.s32.totalorder %s47, 0
      %p525 = por %p523, %p524
      %p526 = scmp.le.s32.totalorder 1, %s41
      %p527 = scmp.lt.s32.totalorder %s41, 3
      %p528 = pnand %p526, %p527
      %p529 = pneg %p528
      // Predicated region
      $region9: #{_lambda_.1} parent=5 // pred_check
        _
      $region10: #{_lambda_.1} parent=5 // pred_check_branch
        %531 = sbr.rel (%p528) target = $region12
      $region11: #{_lambda_.1} parent=5 // pred_region
        %s532 = ssub.s32 %s41, 1
        // Predicated region
        $region13: #{_lambda_.1} parent=11 // pred_check
          %p533 = pneg %p114
        $region14: #{_lambda_.1} parent=11 // pred_check_branch
          %535 = sbr.rel (%p533) target = $region16
        $region15: #{_lambda_.1} parent=11 // pred_region
          %537 = vsyncadd [#allocation6], 0
          %s538 = sshll.u32 %s2, 4
          %s539 = int_to_ptr.hbm [resolvable:$true] %s538
          %s540 = sshll.u32 [#allocation7], 4
          %s541 = int_to_ptr.vmem [resolvable:$true] %s540
          %546 = dma.hbm_to_vmem [thread:$0]  %s539, 512, %s541, [#allocation6], 128, 128, 8
        $region16: #{_lambda_.1} parent=11 // pred_fallthru
          _
        // Predicated region
        $region17: #{_lambda_.1} parent=11 // pred_check
          %p547 = pneg %p135
        $region18: #{_lambda_.1} parent=11 // pred_check_branch
          %549 = sbr.rel (%p547) target = $region20
        $region19: #{_lambda_.1} parent=11 // pred_region
          _
        $region20: #{_lambda_.1} parent=11 // pred_fallthru
          _
        // Predicated region
        $region21: #{_lambda_.1} parent=11 // pred_check
          %p550 = pneg %p156
        $region22: #{_lambda_.1} parent=11 // pred_check_branch
          %552 = sbr.rel (%p550) target = $region24
        $region23: #{_lambda_.1} parent=11 // pred_region
          %554 = vsyncadd [#allocation9], 0
          %s555 = sshll.u32 %s4, 4
          %s556 = int_to_ptr.hbm [resolvable:$true] %s555
          %s557 = sshll.u32 [#allocation8], 4
          %s558 = int_to_ptr.vmem [resolvable:$true] %s557
          %563 = dma.hbm_to_vmem [thread:$0]  %s556, 512, %s558, [#allocation9], 128, 128, 8
        $region24: #{_lambda_.1} parent=11 // pred_fallthru
          _
        // Predicated region
        $region25: #{_lambda_.1} parent=11 // pred_check
          %p564 = pneg %p177
        $region26: #{_lambda_.1} parent=11 // pred_check_branch
          %566 = sbr.rel (%p564) target = $region28
        $region27: #{_lambda_.1} parent=11 // pred_region
          %568 = vsyncadd [#allocation9], 0
          %s569 = sshll.u32 %s5, 4
          %s570 = int_to_ptr.hbm [resolvable:$true] %s569
          %s571 = sshll.u32 [#allocation10], 4
          %s572 = int_to_ptr.vmem [resolvable:$true] %s571
          %577 = dma.hbm_to_vmem [thread:$0]  %s570, 512, %s572, [#allocation9], 128, 128, 8
        $region28: #{_lambda_.1} parent=11 // pred_fallthru
          _
        // Predicated region
        $region29: #{_lambda_.1} parent=11 // pred_check
          %p578 = pneg %p198
        $region30: #{_lambda_.1} parent=11 // pred_check_branch
          %580 = sbr.rel (%p578) target = $region32
        $region31: #{_lambda_.1} parent=11 // pred_region
          %582 = vsyncadd [#allocation12], 0
          %s583 = sshll.u32 %s6, 4
          %s584 = int_to_ptr.hbm [resolvable:$true] %s583
          %s585 = sshll.u32 [#allocation11], 4
          %s586 = int_to_ptr.vmem [resolvable:$true] %s585
          %591 = dma.hbm_to_vmem [thread:$0]  %s584, 8192, %s586, [#allocation12], 128, 128, 8
        $region32: #{_lambda_.1} parent=11 // pred_fallthru
          _
        // Predicated region
        $region33: #{_lambda_.1} parent=11 // pred_check
          %p592 = pneg %p219
        $region34: #{_lambda_.1} parent=11 // pred_check_branch
          %594 = sbr.rel (%p592) target = $region36
        $region35: #{_lambda_.1} parent=11 // pred_region
          %596 = vsyncadd [#allocation12], 0
          %s597 = sshll.u32 %s7, 4
          %s598 = int_to_ptr.hbm [resolvable:$true] %s597
          %s599 = sshll.u32 [#allocation13], 4
          %s600 = int_to_ptr.vmem [resolvable:$true] %s599
          %605 = dma.hbm_to_vmem [thread:$0]  %s598, 8192, %s600, [#allocation12], 128, 128, 8
        $region36: #{_lambda_.1} parent=11 // pred_fallthru
          _
        // Predicated region
        $region37: #{_lambda_.1} parent=11 // pred_check
          %p606 = pneg %p240
        $region38: #{_lambda_.1} parent=11 // pred_check_branch
          %608 = sbr.rel (%p606) target = $region40
        $region39: #{_lambda_.1} parent=11 // pred_region
          %610 = vsyncadd [#allocation15], 0
          %s611 = sshll.u32 %s8, 4
          %s612 = int_to_ptr.hbm [resolvable:$true] %s611
          %s613 = sshll.u32 [#allocation14], 4
          %s614 = int_to_ptr.vmem [resolvable:$true] %s613
          %619 = dma.hbm_to_vmem [thread:$0]  %s612, 2048, %s614, [#allocation15], 128, 128, 8
        $region40: #{_lambda_.1} parent=11 // pred_fallthru
          _
        // Predicated region
        $region41: #{_lambda_.1} parent=11 // pred_check
          %p620 = pneg %p261
        $region42: #{_lambda_.1} parent=11 // pred_check_branch
          %622 = sbr.rel (%p620) target = $region44
        $region43: #{_lambda_.1} parent=11 // pred_region
          %624 = vsyncadd [#allocation15], 0
          %s625 = sshll.u32 %s9, 4
          %s626 = int_to_ptr.hbm [resolvable:$true] %s625
          %s627 = sshll.u32 [#allocation16], 4
          %s628 = int_to_ptr.vmem [resolvable:$true] %s627
          %633 = dma.hbm_to_vmem [thread:$0]  %s626, 512, %s628, [#allocation15], 128, 128, 8
        $region44: #{_lambda_.1} parent=11 // pred_fallthru
          _
        // Predicated region
        $region45: #{_lambda_.1} parent=11 // pred_check
          %p634 = pneg %p282
        $region46: #{_lambda_.1} parent=11 // pred_check_branch
          %636 = sbr.rel (%p634) target = $region48
        $region47: #{_lambda_.1} parent=11 // pred_region
          _
        $region48: #{_lambda_.1} parent=11 // pred_fallthru
          _
        // Predicated region
        $region49: #{_lambda_.1} parent=11 // pred_check
          %p637 = pneg %p303
        $region50: #{_lambda_.1} parent=11 // pred_check_branch
          %639 = sbr.rel (%p637) target = $region52
        $region51: #{_lambda_.1} parent=11 // pred_region
          %641 = vsyncadd [#allocation18], 0
          %s642 = sshll.u32 %s11, 4
          %s643 = int_to_ptr.hbm [resolvable:$true] %s642
          %s644 = sshll.u32 [#allocation17], 4
          %s645 = int_to_ptr.vmem [resolvable:$true] %s644
          %650 = dma.hbm_to_vmem [thread:$0]  %s643, 512, %s645, [#allocation18], 128, 128, 8
        $region52: #{_lambda_.1} parent=11 // pred_fallthru
          _
        // Predicated region
        $region53: #{_lambda_.1} parent=11 // pred_check
          %p651 = pneg %p324
        $region54: #{_lambda_.1} parent=11 // pred_check_branch
          %653 = sbr.rel (%p651) target = $region56
        $region55: #{_lambda_.1} parent=11 // pred_region
          _
        $region56: #{_lambda_.1} parent=11 // pred_fallthru
          _
        // Predicated region
        $region57: #{_lambda_.1} parent=11 // pred_check
          %p654 = pneg %p345
        $region58: #{_lambda_.1} parent=11 // pred_check_branch
          %656 = sbr.rel (%p654) target = $region60
        $region59: #{_lambda_.1} parent=11 // pred_region
          %658 = vsyncadd [#allocation18], 0
          %s659 = sshll.u32 %s13, 4
          %s660 = int_to_ptr.hbm [resolvable:$true] %s659
          %s661 = sshll.u32 [#allocation19], 4
          %s662 = int_to_ptr.vmem [resolvable:$true] %s661
          %667 = dma.hbm_to_vmem [thread:$0]  %s660, 512, %s662, [#allocation18], 128, 128, 8
        $region60: #{_lambda_.1} parent=11 // pred_fallthru
          _
        // Predicated region
        $region61: #{_lambda_.1} parent=11 // pred_check
          %p668 = pneg %p366
        $region62: #{_lambda_.1} parent=11 // pred_check_branch
          %670 = sbr.rel (%p668) target = $region64
        $region63: #{_lambda_.1} parent=11 // pred_region
          _
        $region64: #{_lambda_.1} parent=11 // pred_fallthru
          _
        // Predicated region
        $region65: #{_lambda_.1} parent=11 // pred_check
          %p671 = pneg %p387
        $region66: #{_lambda_.1} parent=11 // pred_check_branch
          %673 = sbr.rel (%p671) target = $region68
        $region67: #{_lambda_.1} parent=11 // pred_region
          _
        $region68: #{_lambda_.1} parent=11 // pred_fallthru
          _
        // Predicated region
        $region69: #{_lambda_.1} parent=11 // pred_check
          %p674 = pneg %p408
        $region70: #{_lambda_.1} parent=11 // pred_check_branch
          %676 = sbr.rel (%p674) target = $region72
        $region71: #{_lambda_.1} parent=11 // pred_region
          %678 = vsyncadd [#allocation21], 0
          %s679 = sshll.u32 %s16, 4
          %s680 = int_to_ptr.hbm [resolvable:$true] %s679
          %s681 = sshll.u32 [#allocation20], 4
          %s682 = int_to_ptr.vmem [resolvable:$true] %s681
          %687 = dma.hbm_to_vmem [thread:$0]  %s680, 512, %s682, [#allocation21], 128, 128, 8
        $region72: #{_lambda_.1} parent=11 // pred_fallthru
          _
        // Predicated region
        $region73: #{_lambda_.1} parent=11 // pred_check
          %p688 = pneg %p429
        $region74: #{_lambda_.1} parent=11 // pred_check_branch
          %690 = sbr.rel (%p688) target = $region76
        $region75: #{_lambda_.1} parent=11 // pred_region
          _
        $region76: #{_lambda_.1} parent=11 // pred_fallthru
          _
        // Predicated region
        $region77: #{_lambda_.1} parent=11 // pred_check
          %p691 = pneg %p450
        $region78: #{_lambda_.1} parent=11 // pred_check_branch
          %693 = sbr.rel (%p691) target = $region80
        $region79: #{_lambda_.1} parent=11 // pred_region
          %695 = vsyncadd [#allocation21], 0
          %s696 = sshll.u32 %s18, 4
          %s697 = int_to_ptr.hbm [resolvable:$true] %s696
          %s698 = sshll.u32 [#allocation22], 4
          %s699 = int_to_ptr.vmem [resolvable:$true] %s698
          %704 = dma.hbm_to_vmem [thread:$0]  %s697, 1024, %s699, [#allocation21], 128, 128, 8
        $region80: #{_lambda_.1} parent=11 // pred_fallthru
          _
        // Predicated region
        $region81: #{_lambda_.1} parent=11 // pred_check
          %p705 = pneg %p471
        $region82: #{_lambda_.1} parent=11 // pred_check_branch
          %707 = sbr.rel (%p705) target = $region84
        $region83: #{_lambda_.1} parent=11 // pred_region
          _
        $region84: #{_lambda_.1} parent=11 // pred_fallthru
          _
        // Predicated region
        $region85: #{_lambda_.1} parent=11 // pred_check
          %p708 = pneg %p492
        $region86: #{_lambda_.1} parent=11 // pred_check_branch
          %710 = sbr.rel (%p708) target = $region88
        $region87: #{_lambda_.1} parent=11 // pred_region
          _
        $region88: #{_lambda_.1} parent=11 // pred_fallthru
          _
      $region12: #{_lambda_.1} parent=5 // pred_fallthru
        _
      %p711 = scmp.lt.s32.totalorder %s41, 2
      // Predicated region
      $region89: #{_lambda_.1} parent=5 // pred_check
        %p712 = pneg %p711
      $region90: #{_lambda_.1} parent=5 // pred_check_branch
        %714 = sbr.rel (%p712) target = $region92
      $region91: #{_lambda_.1} parent=5 // pred_region
        // Predicated region
        $region93: #{_lambda_.1} parent=91 // pred_check
          %p715 = pneg %p61
        $region94: #{_lambda_.1} parent=91 // pred_check_branch
          %717 = sbr.rel (%p715) target = $region96
        $region95: #{_lambda_.1} parent=91 // pred_region
          %s718 = sand.u32 %s51, 1
          %s719 = scalar_lea.sflag [#allocation3], %s718
          %s720 = sand.u32 %s51, 1
          %s721 = smul.addr %s720, 8
          %s722 = scalar_lea.vmem [#allocation2], %s721
          %724 = vsyncadd %s719, 0
          %s725 = smul.addr %s41, 8
          %s726 = scalar_lea.hbm %s0, %s725
          %s728 = sshll.u32 %s726, 4
          %s729 = int_to_ptr.hbm [resolvable:$true] %s728
          %s730 = sshll.u32 %s722, 4
          %s731 = int_to_ptr.vmem [resolvable:$true] %s730
          %733 = dma.hbm_to_vmem [thread:$0]  %s729, 128, %s731, %s719
        $region96: #{_lambda_.1} parent=91 // pred_fallthru
          _
        // Predicated region
        $region97: #{_lambda_.1} parent=91 // pred_check
          %p734 = pneg %p87
        $region98: #{_lambda_.1} parent=91 // pred_check_branch
          %736 = sbr.rel (%p734) target = $region100
        $region99: #{_lambda_.1} parent=91 // pred_region
          %s737 = sand.u32 %s41, 1
          %s738 = scalar_lea.sflag [#allocation6], %s737
          %s739 = sand.u32 %s77, 1
          %s740 = smul.addr %s739, 16
          %s741 = scalar_lea.vmem [#allocation5], %s740
          %743 = vsyncadd %s738, 0
          %s744 = smul.addr %s41, 2
          %s745 = smul.addr %s744, 8
          %s746 = scalar_lea.hbm %s1, %s745
          %s747 = sshll.u32 %s746, 4
          %s748 = int_to_ptr.hbm [resolvable:$true] %s747
          %s749 = sshll.u32 %s741, 4
          %s750 = int_to_ptr.vmem [resolvable:$true] %s749
          %755 = dma.hbm_to_vmem [thread:$0]  %s748, 256, %s750, %s738, 128, 128, 8
        $region100: #{_lambda_.1} parent=91 // pred_fallthru
          _
      $region92: #{_lambda_.1} parent=5 // pred_fallthru
        _
      %p756 = scmp.le.s32.totalorder 1, %s41
      %p757 = scmp.lt.s32.totalorder %s41, 3
      %p758 = pnand %p756, %p757
      %p759 = pneg %p758
      // Predicated region
      $region101: #{_lambda_.1} parent=5 // pred_check
        _
      $region102: #{_lambda_.1} parent=5 // pred_check_branch
        %761 = sbr.rel (%p758) target = $region104
      $region103: #{_lambda_.1} parent=5 // pred_region
        %s762 = ssub.s32 %s41, 1
        %s763 = sand.u32 %s54, 1
        %s764 = scalar_lea.sflag [#allocation3], %s763
        %s765 = sand.u32 %s54, 1
        %s766 = smul.addr %s765, 8
        %s767 = scalar_lea.vmem [#allocation2], %s766
        // Predicated region
        $region105: #{_lambda_.1} parent=103 // pred_check
          %p768 = pneg %p67
        $region106: #{_lambda_.1} parent=103 // pred_check_branch
          %770 = sbr.rel (%p768) target = $region108
        $region107: #{_lambda_.1} parent=103 // pred_region
          %772 = dma.done %s764, 128
        $region108: #{_lambda_.1} parent=103 // pred_fallthru
          _
        %s773 = sand.u32 %s46, 1
        %s774 = scalar_lea.sflag [#allocation6], %s773
        %s775 = sand.u32 %s80, 1
        %s776 = smul.addr %s775, 16
        %s777 = scalar_lea.vmem [#allocation5], %s776
        // Predicated region
        $region109: #{_lambda_.1} parent=103 // pred_check
          %p778 = pneg %p93
        $region110: #{_lambda_.1} parent=103 // pred_check_branch
          %780 = sbr.rel (%p778) target = $region112
        $region111: #{_lambda_.1} parent=103 // pred_region
          %782 = dma.done %s774, 256
        $region112: #{_lambda_.1} parent=103 // pred_fallthru
          _
        // Predicated region
        $region113: #{_lambda_.1} parent=103 // pred_check
          %p783 = pneg %p114
        $region114: #{_lambda_.1} parent=103 // pred_check_branch
          %785 = sbr.rel (%p783) target = $region116
        $region115: #{_lambda_.1} parent=103 // pred_region
          %787 = dma.done [#allocation6], 512
        $region116: #{_lambda_.1} parent=103 // pred_fallthru
          _
        // Predicated region
        $region117: #{_lambda_.1} parent=103 // pred_check
          %p788 = pneg %p156
        $region118: #{_lambda_.1} parent=103 // pred_check_branch
          %790 = sbr.rel (%p788) target = $region120
        $region119: #{_lambda_.1} parent=103 // pred_region
          %792 = dma.done [#allocation9], 512
        $region120: #{_lambda_.1} parent=103 // pred_fallthru
          _
        // Predicated region
        $region121: #{_lambda_.1} parent=103 // pred_check
          %p793 = pneg %p177
        $region122: #{_lambda_.1} parent=103 // pred_check_branch
          %795 = sbr.rel (%p793) target = $region124
        $region123: #{_lambda_.1} parent=103 // pred_region
          %797 = dma.done [#allocation9], 512
        $region124: #{_lambda_.1} parent=103 // pred_fallthru
          _
        // Predicated region
        $region125: #{_lambda_.1} parent=103 // pred_check
          %p798 = pneg %p198
        $region126: #{_lambda_.1} parent=103 // pred_check_branch
          %800 = sbr.rel (%p798) target = $region128
        $region127: #{_lambda_.1} parent=103 // pred_region
          %802 = dma.done [#allocation12], 8192
        $region128: #{_lambda_.1} parent=103 // pred_fallthru
          _
        // Predicated region
        $region129: #{_lambda_.1} parent=103 // pred_check
          %p803 = pneg %p219
        $region130: #{_lambda_.1} parent=103 // pred_check_branch
          %805 = sbr.rel (%p803) target = $region132
        $region131: #{_lambda_.1} parent=103 // pred_region
          %807 = dma.done [#allocation12], 8192
        $region132: #{_lambda_.1} parent=103 // pred_fallthru
          _
        // Predicated region
        $region133: #{_lambda_.1} parent=103 // pred_check
          %p808 = pneg %p240
        $region134: #{_lambda_.1} parent=103 // pred_check_branch
          %810 = sbr.rel (%p808) target = $region136
        $region135: #{_lambda_.1} parent=103 // pred_region
          %812 = dma.done [#allocation15], 2048
        $region136: #{_lambda_.1} parent=103 // pred_fallthru
          _
        // Predicated region
        $region137: #{_lambda_.1} parent=103 // pred_check
          %p813 = pneg %p261
        $region138: #{_lambda_.1} parent=103 // pred_check_branch
          %815 = sbr.rel (%p813) target = $region140
        $region139: #{_lambda_.1} parent=103 // pred_region
          %817 = dma.done [#allocation15], 512
        $region140: #{_lambda_.1} parent=103 // pred_fallthru
          _
        // Predicated region
        $region141: #{_lambda_.1} parent=103 // pred_check
          %p818 = pneg %p303
        $region142: #{_lambda_.1} parent=103 // pred_check_branch
          %820 = sbr.rel (%p818) target = $region144
        $region143: #{_lambda_.1} parent=103 // pred_region
          %822 = dma.done [#allocation18], 512
        $region144: #{_lambda_.1} parent=103 // pred_fallthru
          _
        // Predicated region
        $region145: #{_lambda_.1} parent=103 // pred_check
          %p823 = pneg %p345
        $region146: #{_lambda_.1} parent=103 // pred_check_branch
          %825 = sbr.rel (%p823) target = $region148
        $region147: #{_lambda_.1} parent=103 // pred_region
          %827 = dma.done [#allocation18], 512
        $region148: #{_lambda_.1} parent=103 // pred_fallthru
          _
        // Predicated region
        $region149: #{_lambda_.1} parent=103 // pred_check
          %p828 = pneg %p408
        $region150: #{_lambda_.1} parent=103 // pred_check_branch
          %830 = sbr.rel (%p828) target = $region152
        $region151: #{_lambda_.1} parent=103 // pred_region
          %832 = dma.done [#allocation21], 512
        $region152: #{_lambda_.1} parent=103 // pred_fallthru
          _
        // Predicated region
        $region153: #{_lambda_.1} parent=103 // pred_check
          %p833 = pneg %p450
        $region154: #{_lambda_.1} parent=103 // pred_check_branch
          %835 = sbr.rel (%p833) target = $region156
        $region155: #{_lambda_.1} parent=103 // pred_region
          %837 = dma.done [#allocation21], 1024
        $region156: #{_lambda_.1} parent=103 // pred_fallthru
          _
        %s838 = sand.u32 %s54, 1
        %s839 = scalar_lea.sflag [#allocation3], %s838
        %s840 = sand.u32 %s54, 1
        %s841 = smul.addr %s840, 8
        %s842 = scalar_lea.vmem [#allocation2], %s841
        %p843 = pneg %p67
        %p844 = pneg %p64
        %s845 = sand.u32 %s46, 1
        %s846 = scalar_lea.sflag [#allocation6], %s845
        %s847 = sand.u32 %s80, 1
        %s848 = smul.addr %s847, 16
        %s849 = scalar_lea.vmem [#allocation5], %s848
        %p850 = pneg %p93
        %p851 = pneg %p90
        %p852 = pneg %p114
        %p853 = pneg %p111
        %p854 = pneg %p135
        %p855 = pneg %p132
        %p856 = pneg %p156
        %p857 = pneg %p153
        %p858 = pneg %p177
        %p859 = pneg %p174
        %p860 = pneg %p198
        %p861 = pneg %p195
        %p862 = pneg %p219
        %p863 = pneg %p216
        %p864 = pneg %p240
        %p865 = pneg %p237
        %p866 = pneg %p261
        %p867 = pneg %p258
        %p868 = pneg %p282
        %p869 = pneg %p279
        %p870 = pneg %p303
        %p871 = pneg %p300
        %p872 = pneg %p324
        %p873 = pneg %p321
        %p874 = pneg %p345
        %p875 = pneg %p342
        %p876 = pneg %p366
        %p877 = pneg %p363
        %p878 = pneg %p387
        %p879 = pneg %p384
        %p880 = pneg %p408
        %p881 = pneg %p405
        %p882 = pneg %p429
        %p883 = pneg %p426
        %p884 = pneg %p450
        %p885 = pneg %p447
        %p886 = pneg %p471
        %p887 = pneg %p468
        %p888 = pneg %p492
        %p889 = pneg %p489
        %p890 = pneg %p518
        %p891 = pneg %p515
        %s892 = sand.u32 %s505, 1
        %s893 = scalar_lea.sflag [#allocation4], %s892
        %s894 = sand.u32 %s505, 1
        %s895 = smul.addr %s894, 32
        %s896 = scalar_lea.vmem [#allocation23], %s895
        %v897 = vld [vmem:[%s767] sm:$0xff]
        %v898 = vld [vmem:[%s777] sm:$0xff]
        %v899 = vld [vmem:[%s777 + $0x8] sm:$0xff]
        %v900 = vld [vmem:[#allocation7] sm:$0xff]
        %v901 = vld [vmem:[#allocation7 + $0x8] sm:$0xff]
        %v902 = vld [vmem:[#allocation7 + $0x10] sm:$0xff]
        %v903 = vld [vmem:[#allocation7 + $0x18] sm:$0xff]
        %v904 = vld [vmem:[%s3] sm:$0x1]
        %v906 = vperm.slane %v904, 0
        %vm908 = vcmask 261120
        %v910 = vsel %vm908, %v897, 0
        %912 = vmatpush.msra.mxu0 0.0
        %913 = vmatpush.msra.mxu0 0.0
        %914 = vmatpush.msra.mxu0 0.0
        %915 = vmatpush.msra.mxu0 0.0
        %916 = vmatpush.msra.mxu0 0.0
        %917 = vmatpush.msra.mxu0 0.0
        %918 = vmatpush.msra.mxu0 0.0
        %919 = vmatpush.msra.mxu0 0.0
        %920 = vmatpush.msra.mxu0 0.0
        %921 = vmatpush.msra.mxu0 0.0
        %922 = vmatpush.msra.mxu0 0.0
        %923 = vmatpush.msra.mxu0 0.0
        %924 = vmatpush.msra.mxu0 %v903
        %925 = vmatpush.msra.mxu0 %v902
        %926 = vmatpush.msra.mxu0 %v901
        %927 = vmatpush.msra.mxu0 %v900
        %928 = vmatmul.f32.gmra.mxu0 %v910
        %v929 = vpop.f32.mrf.mxu0
        %v930 = vadd.f32 %v906, %v929
        %931 = vdwg.mxu0
        %v932 = vld [vmem:[#allocation8] sm:$0xff]
        %v933 = vld [vmem:[#allocation10] sm:$0xff]
        %s934 = scalar_lea.vmem [#allocation8], 8
        %v935 = vld [vmem:[%s934] sm:$0xff]
        %937 = vrot.lane.b32.xlu0 %v930, 96
        %v938 = vpop.permute.xlu0 %937
        %vm940 = vcmask 64512
        %v942 = vsel %vm940, %v935, 0
        %944 = vmatpush.msra.mxu0 0.0
        %945 = vmatpush.msra.mxu0 0.0
        %946 = vmatpush.msra.mxu0 0.0
        %947 = vmatpush.msra.mxu0 0.0
        %948 = vmatpush.msra.mxu0 0.0
        %949 = vmatpush.msra.mxu0 0.0
        %950 = vmatpush.msra.mxu0 0.0
        %951 = vmatpush.msra.mxu0 0.0
        %952 = vmatpush.msra.mxu0 0.0
        %953 = vmatpush.msra.mxu0 0.0
        %954 = vmatpush.msra.mxu0 0.0
        %955 = vmatpush.msra.mxu0 0.0
        %956 = vmatpush.msra.mxu0 0.0
        %957 = vmatpush.msra.mxu0 0.0
        %958 = vmatpush.msra.mxu0 0.0
        %959 = vmatpush.msra.mxu0 %v938
        %960 = vmatmul.f32.gmra.mxu0 %v942
        %v961 = vpop.f32.mrf.mxu0
        %v962 = vadd.f32 0.0, %v961
        %963 = vdwg.mxu0
        %v965 = vsel %vm940, %v932, 0
        %967 = vmatpush.msra.mxu0 0.0
        %968 = vmatpush.msra.mxu0 0.0
        %969 = vmatpush.msra.mxu0 0.0
        %970 = vmatpush.msra.mxu0 0.0
        %971 = vmatpush.msra.mxu0 0.0
        %972 = vmatpush.msra.mxu0 0.0
        %973 = vmatpush.msra.mxu0 0.0
        %974 = vmatpush.msra.mxu0 0.0
        %975 = vmatpush.msra.mxu0 0.0
        %976 = vmatpush.msra.mxu0 0.0
        %977 = vmatpush.msra.mxu0 0.0
        %978 = vmatpush.msra.mxu0 0.0
        %979 = vmatpush.msra.mxu0 0.0
        %980 = vmatpush.msra.mxu0 0.0
        %981 = vmatpush.msra.mxu0 0.0
        %982 = vmatpush.msra.mxu0 %v930
        %983 = vmatmul.f32.gmra.mxu0 %v965
        %v984 = vpop.f32.mrf.mxu0
        %v985 = vadd.f32 %v962, %v984
        %986 = vdwg.mxu0
        %s987 = scalar_lea.vmem [#allocation10], 8
        %v988 = vld [vmem:[%s987] sm:$0xff]
        %v990 = vsel %vm940, %v988, 0
        %992 = vmatpush.msra.mxu0 0.0
        %993 = vmatpush.msra.mxu0 0.0
        %994 = vmatpush.msra.mxu0 0.0
        %995 = vmatpush.msra.mxu0 0.0
        %996 = vmatpush.msra.mxu0 0.0
        %997 = vmatpush.msra.mxu0 0.0
        %998 = vmatpush.msra.mxu0 0.0
        %999 = vmatpush.msra.mxu0 0.0
        %1000 = vmatpush.msra.mxu0 0.0
        %1001 = vmatpush.msra.mxu0 0.0
        %1002 = vmatpush.msra.mxu0 0.0
        %1003 = vmatpush.msra.mxu0 0.0
        %1004 = vmatpush.msra.mxu0 0.0
        %1005 = vmatpush.msra.mxu0 0.0
        %1006 = vmatpush.msra.mxu0 0.0
        %1007 = vmatpush.msra.mxu0 %v938
        %1008 = vmatmul.f32.gmra.mxu0 %v990
        %v1009 = vpop.f32.mrf.mxu0
        %v1010 = vadd.f32 0.0, %v1009
        %1011 = vdwg.mxu0
        %v1013 = vsel %vm940, %v933, 0
        %1015 = vmatpush.msra.mxu0 0.0
        %1016 = vmatpush.msra.mxu0 0.0
        %1017 = vmatpush.msra.mxu0 0.0
        %1018 = vmatpush.msra.mxu0 0.0
        %1019 = vmatpush.msra.mxu0 0.0
        %1020 = vmatpush.msra.mxu0 0.0
        %1021 = vmatpush.msra.mxu0 0.0
        %1022 = vmatpush.msra.mxu0 0.0
        %1023 = vmatpush.msra.mxu0 0.0
        %1024 = vmatpush.msra.mxu0 0.0
        %1025 = vmatpush.msra.mxu0 0.0
        %1026 = vmatpush.msra.mxu0 0.0
        %1027 = vmatpush.msra.mxu0 0.0
        %1028 = vmatpush.msra.mxu0 0.0
        %1029 = vmatpush.msra.mxu0 0.0
        %1030 = vmatpush.msra.mxu0 %v930
        %1031 = vmatmul.f32.gmra.mxu0 %v1013
        %v1032 = vpop.f32.mrf.mxu0
        %v1033 = vadd.f32 %v1010, %v1032
        %1034 = vdwg.mxu0
        %s1035 = scalar_lea.vmem [#allocation8], 16
        %v1036 = vld [vmem:[%s1035] sm:$0xff]
        %1037 = vrot.lane.b32.xlu0 %v930, 64
        %v1038 = vpop.permute.xlu0 %1037
        %v1041 = vsel %vm940, %v1036, 0
        %1043 = vmatpush.msra.mxu0 0.0
        %1044 = vmatpush.msra.mxu0 0.0
        %1045 = vmatpush.msra.mxu0 0.0
        %1046 = vmatpush.msra.mxu0 0.0
        %1047 = vmatpush.msra.mxu0 0.0
        %1048 = vmatpush.msra.mxu0 0.0
        %1049 = vmatpush.msra.mxu0 0.0
        %1050 = vmatpush.msra.mxu0 0.0
        %1051 = vmatpush.msra.mxu0 0.0
        %1052 = vmatpush.msra.mxu0 0.0
        %1053 = vmatpush.msra.mxu0 0.0
        %1054 = vmatpush.msra.mxu0 0.0
        %1055 = vmatpush.msra.mxu0 0.0
        %1056 = vmatpush.msra.mxu0 0.0
        %1057 = vmatpush.msra.mxu0 0.0
        %1058 = vmatpush.msra.mxu0 %v1038
        %1059 = vmatmul.f32.gmra.mxu0 %v1041
        %v1060 = vpop.f32.mrf.mxu0
        %v1061 = vadd.f32 0.0, %v1060
        %1062 = vdwg.mxu0
        %v1063 = vadd.f32 %v985, %v1061
        %s1064 = scalar_lea.vmem [#allocation10], 16
        %v1065 = vld [vmem:[%s1064] sm:$0xff]
        %v1067 = vsel %vm940, %v1065, 0
        %1069 = vmatpush.msra.mxu0 0.0
        %1070 = vmatpush.msra.mxu0 0.0
        %1071 = vmatpush.msra.mxu0 0.0
        %1072 = vmatpush.msra.mxu0 0.0
        %1073 = vmatpush.msra.mxu0 0.0
        %1074 = vmatpush.msra.mxu0 0.0
        %1075 = vmatpush.msra.mxu0 0.0
        %1076 = vmatpush.msra.mxu0 0.0
        %1077 = vmatpush.msra.mxu0 0.0
        %1078 = vmatpush.msra.mxu0 0.0
        %1079 = vmatpush.msra.mxu0 0.0
        %1080 = vmatpush.msra.mxu0 0.0
        %1081 = vmatpush.msra.mxu0 0.0
        %1082 = vmatpush.msra.mxu0 0.0
        %1083 = vmatpush.msra.mxu0 0.0
        %1084 = vmatpush.msra.mxu0 %v1038
        %1085 = vmatmul.f32.gmra.mxu0 %v1067
        %v1086 = vpop.f32.mrf.mxu0
        %v1087 = vadd.f32 0.0, %v1086
        %1088 = vdwg.mxu0
        %v1089 = vadd.f32 %v1033, %v1087
        %s1090 = scalar_lea.vmem [#allocation8], 24
        %v1091 = vld [vmem:[%s1090] sm:$0xff]
        %1092 = vrot.lane.b32.xlu0 %v930, 32
        %v1093 = vpop.permute.xlu0 %1092
        %v1096 = vsel %vm940, %v1091, 0
        %1098 = vmatpush.msra.mxu0 0.0
        %1099 = vmatpush.msra.mxu0 0.0
        %1100 = vmatpush.msra.mxu0 0.0
        %1101 = vmatpush.msra.mxu0 0.0
        %1102 = vmatpush.msra.mxu0 0.0
        %1103 = vmatpush.msra.mxu0 0.0
        %1104 = vmatpush.msra.mxu0 0.0
        %1105 = vmatpush.msra.mxu0 0.0
        %1106 = vmatpush.msra.mxu0 0.0
        %1107 = vmatpush.msra.mxu0 0.0
        %1108 = vmatpush.msra.mxu0 0.0
        %1109 = vmatpush.msra.mxu0 0.0
        %1110 = vmatpush.msra.mxu0 0.0
        %1111 = vmatpush.msra.mxu0 0.0
        %1112 = vmatpush.msra.mxu0 0.0
        %1113 = vmatpush.msra.mxu0 %v1093
        %1114 = vmatmul.f32.gmra.mxu0 %v1096
        %v1115 = vpop.f32.mrf.mxu0
        %v1116 = vadd.f32 0.0, %v1115
        %1117 = vdwg.mxu0
        %v1118 = vadd.f32 %v1063, %v1116
        %s1119 = scalar_lea.vmem [#allocation10], 24
        %v1120 = vld [vmem:[%s1119] sm:$0xff]
        %v1122 = vsel %vm940, %v1120, 0
        %1124 = vmatpush.msra.mxu0 0.0
        %1125 = vmatpush.msra.mxu0 0.0
        %1126 = vmatpush.msra.mxu0 0.0
        %1127 = vmatpush.msra.mxu0 0.0
        %1128 = vmatpush.msra.mxu0 0.0
        %1129 = vmatpush.msra.mxu0 0.0
        %1130 = vmatpush.msra.mxu0 0.0
        %1131 = vmatpush.msra.mxu0 0.0
        %1132 = vmatpush.msra.mxu0 0.0
        %1133 = vmatpush.msra.mxu0 0.0
        %1134 = vmatpush.msra.mxu0 0.0
        %1135 = vmatpush.msra.mxu0 0.0
        %1136 = vmatpush.msra.mxu0 0.0
        %1137 = vmatpush.msra.mxu0 0.0
        %1138 = vmatpush.msra.mxu0 0.0
        %1139 = vmatpush.msra.mxu0 %v1093
        %1140 = vmatmul.f32.gmra.mxu0 %v1122
        %v1141 = vpop.f32.mrf.mxu0
        %v1142 = vadd.f32 0.0, %v1141
        %1143 = vdwg.mxu0
        %v1144 = vadd.f32 %v1089, %v1142
        %v1145 = vperm.slane %v1118, 0
        %v1146 = vlaneseq
        %v1147 = vshrl.u32 %v1146, 7
        %1149 = vset.pattern.permute.xlu0 %v1147
        %1150 = vperm.xlu0 %1149, %v1145
        %v1151 = vpop.permute.xlu0 %1150
        %v1152 = vlaneseq
        %v1153 = vshrl.u32 %v1152, 7
        %v1154 = vadd.s32 %v1153, 8
        %1155 = vset.pattern.permute.xlu0 %v1154
        %1156 = vperm.xlu0 %1155, %v1145
        %v1157 = vpop.permute.xlu0 %1156
        %v1158 = vlaneseq
        %v1159 = vshrl.u32 %v1158, 7
        %v1160 = vadd.s32 %v1159, 16
        %1161 = vset.pattern.permute.xlu0 %v1160
        %1162 = vperm.xlu0 %1161, %v1145
        %v1163 = vpop.permute.xlu0 %1162
        %v1164 = vlaneseq
        %v1165 = vshrl.u32 %v1164, 7
        %v1166 = vadd.s32 %v1165, 24
        %1167 = vset.pattern.permute.xlu0 %v1166
        %1168 = vperm.xlu0 %1167, %v1145
        %v1169 = vpop.permute.xlu0 %1168
        %v1170 = vperm.slane %v1118, 1
        %v1171 = vlaneseq
        %v1172 = vshrl.u32 %v1171, 7
        %1174 = vset.pattern.permute.xlu0 %v1172
        %1175 = vperm.xlu0 %1174, %v1170
        %v1176 = vpop.permute.xlu0 %1175
        %v1177 = vlaneseq
        %v1178 = vshrl.u32 %v1177, 7
        %v1179 = vadd.s32 %v1178, 8
        %1180 = vset.pattern.permute.xlu0 %v1179
        %1181 = vperm.xlu0 %1180, %v1170
        %v1182 = vpop.permute.xlu0 %1181
        %v1183 = vlaneseq
        %v1184 = vshrl.u32 %v1183, 7
        %v1185 = vadd.s32 %v1184, 16
        %1186 = vset.pattern.permute.xlu0 %v1185
        %1187 = vperm.xlu0 %1186, %v1170
        %v1188 = vpop.permute.xlu0 %1187
        %v1189 = vlaneseq
        %v1190 = vshrl.u32 %v1189, 7
        %v1191 = vadd.s32 %v1190, 24
        %1192 = vset.pattern.permute.xlu0 %v1191
        %1193 = vperm.xlu0 %1192, %v1170
        %v1194 = vpop.permute.xlu0 %1193
        %v1195 = vperm.slane %v1118, 2
        %v1196 = vlaneseq
        %v1197 = vshrl.u32 %v1196, 7
        %1199 = vset.pattern.permute.xlu0 %v1197
        %1200 = vperm.xlu0 %1199, %v1195
        %v1201 = vpop.permute.xlu0 %1200
        %v1202 = vlaneseq
        %v1203 = vshrl.u32 %v1202, 7
        %v1204 = vadd.s32 %v1203, 8
        %1205 = vset.pattern.permute.xlu0 %v1204
        %1206 = vperm.xlu0 %1205, %v1195
        %v1207 = vpop.permute.xlu0 %1206
        %v1208 = vlaneseq
        %v1209 = vshrl.u32 %v1208, 7
        %v1210 = vadd.s32 %v1209, 16
        %1211 = vset.pattern.permute.xlu0 %v1210
        %1212 = vperm.xlu0 %1211, %v1195
        %v1213 = vpop.permute.xlu0 %1212
        %v1214 = vlaneseq
        %v1215 = vshrl.u32 %v1214, 7
        %v1216 = vadd.s32 %v1215, 24
        %1217 = vset.pattern.permute.xlu0 %v1216
        %1218 = vperm.xlu0 %1217, %v1195
        %v1219 = vpop.permute.xlu0 %1218
        %v1220 = vperm.slane %v1118, 3
        %v1221 = vlaneseq
        %v1222 = vshrl.u32 %v1221, 7
        %1224 = vset.pattern.permute.xlu0 %v1222
        %1225 = vperm.xlu0 %1224, %v1220
        %v1226 = vpop.permute.xlu0 %1225
        %v1227 = vlaneseq
        %v1228 = vshrl.u32 %v1227, 7
        %v1229 = vadd.s32 %v1228, 8
        %1230 = vset.pattern.permute.xlu0 %v1229
        %1231 = vperm.xlu0 %1230, %v1220
        %v1232 = vpop.permute.xlu0 %1231
        %v1233 = vlaneseq
        %v1234 = vshrl.u32 %v1233, 7
        %v1235 = vadd.s32 %v1234, 16
        %1236 = vset.pattern.permute.xlu0 %v1235
        %1237 = vperm.xlu0 %1236, %v1220
        %v1238 = vpop.permute.xlu0 %1237
        %v1239 = vlaneseq
        %v1240 = vshrl.u32 %v1239, 7
        %v1241 = vadd.s32 %v1240, 24
        %1242 = vset.pattern.permute.xlu0 %v1241
        %1243 = vperm.xlu0 %1242, %v1220
        %v1244 = vpop.permute.xlu0 %1243
        %v1245 = vperm.slane %v1118, 4
        %v1246 = vlaneseq
        %v1247 = vshrl.u32 %v1246, 7
        %1249 = vset.pattern.permute.xlu0 %v1247
        %1250 = vperm.xlu0 %1249, %v1245
        %v1251 = vpop.permute.xlu0 %1250
        %v1252 = vlaneseq
        %v1253 = vshrl.u32 %v1252, 7
        %v1254 = vadd.s32 %v1253, 8
        %1255 = vset.pattern.permute.xlu0 %v1254
        %1256 = vperm.xlu0 %1255, %v1245
        %v1257 = vpop.permute.xlu0 %1256
        %v1258 = vlaneseq
        %v1259 = vshrl.u32 %v1258, 7
        %v1260 = vadd.s32 %v1259, 16
        %1261 = vset.pattern.permute.xlu0 %v1260
        %1262 = vperm.xlu0 %1261, %v1245
        %v1263 = vpop.permute.xlu0 %1262
        %v1264 = vlaneseq
        %v1265 = vshrl.u32 %v1264, 7
        %v1266 = vadd.s32 %v1265, 24
        %1267 = vset.pattern.permute.xlu0 %v1266
        %1268 = vperm.xlu0 %1267, %v1245
        %v1269 = vpop.permute.xlu0 %1268
        %v1270 = vperm.slane %v1118, 5
        %v1271 = vlaneseq
        %v1272 = vshrl.u32 %v1271, 7
        %1274 = vset.pattern.permute.xlu0 %v1272
        %1275 = vperm.xlu0 %1274, %v1270
        %v1276 = vpop.permute.xlu0 %1275
        %v1277 = vlaneseq
        %v1278 = vshrl.u32 %v1277, 7
        %v1279 = vadd.s32 %v1278, 8
        %1280 = vset.pattern.permute.xlu0 %v1279
        %1281 = vperm.xlu0 %1280, %v1270
        %v1282 = vpop.permute.xlu0 %1281
        %v1283 = vlaneseq
        %v1284 = vshrl.u32 %v1283, 7
        %v1285 = vadd.s32 %v1284, 16
        %1286 = vset.pattern.permute.xlu0 %v1285
        %1287 = vperm.xlu0 %1286, %v1270
        %v1288 = vpop.permute.xlu0 %1287
        %v1289 = vlaneseq
        %v1290 = vshrl.u32 %v1289, 7
        %v1291 = vadd.s32 %v1290, 24
        %1292 = vset.pattern.permute.xlu0 %v1291
        %1293 = vperm.xlu0 %1292, %v1270
        %v1294 = vpop.permute.xlu0 %1293
        %v1295 = vperm.slane %v1118, 6
        %v1296 = vlaneseq
        %v1297 = vshrl.u32 %v1296, 7
        %1299 = vset.pattern.permute.xlu0 %v1297
        %1300 = vperm.xlu0 %1299, %v1295
        %v1301 = vpop.permute.xlu0 %1300
        %v1302 = vlaneseq
        %v1303 = vshrl.u32 %v1302, 7
        %v1304 = vadd.s32 %v1303, 8
        %1305 = vset.pattern.permute.xlu0 %v1304
        %1306 = vperm.xlu0 %1305, %v1295
        %v1307 = vpop.permute.xlu0 %1306
        %v1308 = vlaneseq
        %v1309 = vshrl.u32 %v1308, 7
        %v1310 = vadd.s32 %v1309, 16
        %1311 = vset.pattern.permute.xlu0 %v1310
        %1312 = vperm.xlu0 %1311, %v1295
        %v1313 = vpop.permute.xlu0 %1312
        %v1314 = vlaneseq
        %v1315 = vshrl.u32 %v1314, 7
        %v1316 = vadd.s32 %v1315, 24
        %1317 = vset.pattern.permute.xlu0 %v1316
        %1318 = vperm.xlu0 %1317, %v1295
        %v1319 = vpop.permute.xlu0 %1318
        %v1320 = vperm.slane %v1118, 7
        %v1321 = vlaneseq
        %v1322 = vshrl.u32 %v1321, 7
        %1324 = vset.pattern.permute.xlu0 %v1322
        %1325 = vperm.xlu0 %1324, %v1320
        %v1326 = vpop.permute.xlu0 %1325
        %v1327 = vlaneseq
        %v1328 = vshrl.u32 %v1327, 7
        %v1329 = vadd.s32 %v1328, 8
        %1330 = vset.pattern.permute.xlu0 %v1329
        %1331 = vperm.xlu0 %1330, %v1320
        %v1332 = vpop.permute.xlu0 %1331
        %v1333 = vlaneseq
        %v1334 = vshrl.u32 %v1333, 7
        %v1335 = vadd.s32 %v1334, 16
        %1336 = vset.pattern.permute.xlu0 %v1335
        %1337 = vperm.xlu0 %1336, %v1320
        %v1338 = vpop.permute.xlu0 %1337
        %v1339 = vlaneseq
        %v1340 = vshrl.u32 %v1339, 7
        %v1341 = vadd.s32 %v1340, 24
        %1342 = vset.pattern.permute.xlu0 %v1341
        %1343 = vperm.xlu0 %1342, %v1320
        %v1344 = vpop.permute.xlu0 %1343
        %v1345 = vperm.slane %v1144, 0
        %v1346 = vlaneseq
        %v1347 = vshrl.u32 %v1346, 7
        %1349 = vset.pattern.permute.xlu0 %v1347
        %1350 = vperm.xlu0 %1349, %v1345
        %v1351 = vpop.permute.xlu0 %1350
        %v1352 = vlaneseq
        %v1353 = vshrl.u32 %v1352, 7
        %v1354 = vadd.s32 %v1353, 8
        %1355 = vset.pattern.permute.xlu0 %v1354
        %1356 = vperm.xlu0 %1355, %v1345
        %v1357 = vpop.permute.xlu0 %1356
        %v1358 = vlaneseq
        %v1359 = vshrl.u32 %v1358, 7
        %v1360 = vadd.s32 %v1359, 16
        %1361 = vset.pattern.permute.xlu0 %v1360
        %1362 = vperm.xlu0 %1361, %v1345
        %v1363 = vpop.permute.xlu0 %1362
        %v1364 = vlaneseq
        %v1365 = vshrl.u32 %v1364, 7
        %v1366 = vadd.s32 %v1365, 24
        %1367 = vset.pattern.permute.xlu0 %v1366
        %1368 = vperm.xlu0 %1367, %v1345
        %v1369 = vpop.permute.xlu0 %1368
        %v1370 = vperm.slane %v1144, 1
        %v1371 = vlaneseq
        %v1372 = vshrl.u32 %v1371, 7
        %1374 = vset.pattern.permute.xlu0 %v1372
        %1375 = vperm.xlu0 %1374, %v1370
        %v1376 = vpop.permute.xlu0 %1375
        %v1377 = vlaneseq
        %v1378 = vshrl.u32 %v1377, 7
        %v1379 = vadd.s32 %v1378, 8
        %1380 = vset.pattern.permute.xlu0 %v1379
        %1381 = vperm.xlu0 %1380, %v1370
        %v1382 = vpop.permute.xlu0 %1381
        %v1383 = vlaneseq
        %v1384 = vshrl.u32 %v1383, 7
        %v1385 = vadd.s32 %v1384, 16
        %1386 = vset.pattern.permute.xlu0 %v1385
        %1387 = vperm.xlu0 %1386, %v1370
        %v1388 = vpop.permute.xlu0 %1387
        %v1389 = vlaneseq
        %v1390 = vshrl.u32 %v1389, 7
        %v1391 = vadd.s32 %v1390, 24
        %1392 = vset.pattern.permute.xlu0 %v1391
        %1393 = vperm.xlu0 %1392, %v1370
        %v1394 = vpop.permute.xlu0 %1393
        %v1395 = vperm.slane %v1144, 2
        %v1396 = vlaneseq
        %v1397 = vshrl.u32 %v1396, 7
        %1399 = vset.pattern.permute.xlu0 %v1397
        %1400 = vperm.xlu0 %1399, %v1395
        %v1401 = vpop.permute.xlu0 %1400
        %v1402 = vlaneseq
        %v1403 = vshrl.u32 %v1402, 7
        %v1404 = vadd.s32 %v1403, 8
        %1405 = vset.pattern.permute.xlu0 %v1404
        %1406 = vperm.xlu0 %1405, %v1395
        %v1407 = vpop.permute.xlu0 %1406
        %v1408 = vlaneseq
        %v1409 = vshrl.u32 %v1408, 7
        %v1410 = vadd.s32 %v1409, 16
        %1411 = vset.pattern.permute.xlu0 %v1410
        %1412 = vperm.xlu0 %1411, %v1395
        %v1413 = vpop.permute.xlu0 %1412
        %v1414 = vlaneseq
        %v1415 = vshrl.u32 %v1414, 7
        %v1416 = vadd.s32 %v1415, 24
        %1417 = vset.pattern.permute.xlu0 %v1416
        %1418 = vperm.xlu0 %1417, %v1395
        %v1419 = vpop.permute.xlu0 %1418
        %v1420 = vperm.slane %v1144, 3
        %v1421 = vlaneseq
        %v1422 = vshrl.u32 %v1421, 7
        %1424 = vset.pattern.permute.xlu0 %v1422
        %1425 = vperm.xlu0 %1424, %v1420
        %v1426 = vpop.permute.xlu0 %1425
        %v1427 = vlaneseq
        %v1428 = vshrl.u32 %v1427, 7
        %v1429 = vadd.s32 %v1428, 8
        %1430 = vset.pattern.permute.xlu0 %v1429
        %1431 = vperm.xlu0 %1430, %v1420
        %v1432 = vpop.permute.xlu0 %1431
        %v1433 = vlaneseq
        %v1434 = vshrl.u32 %v1433, 7
        %v1435 = vadd.s32 %v1434, 16
        %1436 = vset.pattern.permute.xlu0 %v1435
        %1437 = vperm.xlu0 %1436, %v1420
        %v1438 = vpop.permute.xlu0 %1437
        %v1439 = vlaneseq
        %v1440 = vshrl.u32 %v1439, 7
        %v1441 = vadd.s32 %v1440, 24
        %1442 = vset.pattern.permute.xlu0 %v1441
        %1443 = vperm.xlu0 %1442, %v1420
        %v1444 = vpop.permute.xlu0 %1443
        %v1445 = vperm.slane %v1144, 4
        %v1446 = vlaneseq
        %v1447 = vshrl.u32 %v1446, 7
        %1449 = vset.pattern.permute.xlu0 %v1447
        %1450 = vperm.xlu0 %1449, %v1445
        %v1451 = vpop.permute.xlu0 %1450
        %v1452 = vlaneseq
        %v1453 = vshrl.u32 %v1452, 7
        %v1454 = vadd.s32 %v1453, 8
        %1455 = vset.pattern.permute.xlu0 %v1454
        %1456 = vperm.xlu0 %1455, %v1445
        %v1457 = vpop.permute.xlu0 %1456
        %v1458 = vlaneseq
        %v1459 = vshrl.u32 %v1458, 7
        %v1460 = vadd.s32 %v1459, 16
        %1461 = vset.pattern.permute.xlu0 %v1460
        %1462 = vperm.xlu0 %1461, %v1445
        %v1463 = vpop.permute.xlu0 %1462
        %v1464 = vlaneseq
        %v1465 = vshrl.u32 %v1464, 7
        %v1466 = vadd.s32 %v1465, 24
        %1467 = vset.pattern.permute.xlu0 %v1466
        %1468 = vperm.xlu0 %1467, %v1445
        %v1469 = vpop.permute.xlu0 %1468
        %v1470 = vperm.slane %v1144, 5
        %v1471 = vlaneseq
        %v1472 = vshrl.u32 %v1471, 7
        %1474 = vset.pattern.permute.xlu0 %v1472
        %1475 = vperm.xlu0 %1474, %v1470
        %v1476 = vpop.permute.xlu0 %1475
        %v1477 = vlaneseq
        %v1478 = vshrl.u32 %v1477, 7
        %v1479 = vadd.s32 %v1478, 8
        %1480 = vset.pattern.permute.xlu0 %v1479
        %1481 = vperm.xlu0 %1480, %v1470
        %v1482 = vpop.permute.xlu0 %1481
        %v1483 = vlaneseq
        %v1484 = vshrl.u32 %v1483, 7
        %v1485 = vadd.s32 %v1484, 16
        %1486 = vset.pattern.permute.xlu0 %v1485
        %1487 = vperm.xlu0 %1486, %v1470
        %v1488 = vpop.permute.xlu0 %1487
        %v1489 = vlaneseq
        %v1490 = vshrl.u32 %v1489, 7
        %v1491 = vadd.s32 %v1490, 24
        %1492 = vset.pattern.permute.xlu0 %v1491
        %1493 = vperm.xlu0 %1492, %v1470
        %v1494 = vpop.permute.xlu0 %1493
        %v1495 = vperm.slane %v1144, 6
        %v1496 = vlaneseq
        %v1497 = vshrl.u32 %v1496, 7
        %1499 = vset.pattern.permute.xlu0 %v1497
        %1500 = vperm.xlu0 %1499, %v1495
        %v1501 = vpop.permute.xlu0 %1500
        %v1502 = vlaneseq
        %v1503 = vshrl.u32 %v1502, 7
        %v1504 = vadd.s32 %v1503, 8
        %1505 = vset.pattern.permute.xlu0 %v1504
        %1506 = vperm.xlu0 %1505, %v1495
        %v1507 = vpop.permute.xlu0 %1506
        %v1508 = vlaneseq
        %v1509 = vshrl.u32 %v1508, 7
        %v1510 = vadd.s32 %v1509, 16
        %1511 = vset.pattern.permute.xlu0 %v1510
        %1512 = vperm.xlu0 %1511, %v1495
        %v1513 = vpop.permute.xlu0 %1512
        %v1514 = vlaneseq
        %v1515 = vshrl.u32 %v1514, 7
        %v1516 = vadd.s32 %v1515, 24
        %1517 = vset.pattern.permute.xlu0 %v1516
        %1518 = vperm.xlu0 %1517, %v1495
        %v1519 = vpop.permute.xlu0 %1518
        %v1520 = vperm.slane %v1144, 7
        %v1521 = vlaneseq
        %v1522 = vshrl.u32 %v1521, 7
        %1524 = vset.pattern.permute.xlu0 %v1522
        %1525 = vperm.xlu0 %1524, %v1520
        %v1526 = vpop.permute.xlu0 %1525
        %v1527 = vlaneseq
        %v1528 = vshrl.u32 %v1527, 7
        %v1529 = vadd.s32 %v1528, 8
        %1530 = vset.pattern.permute.xlu0 %v1529
        %1531 = vperm.xlu0 %1530, %v1520
        %v1532 = vpop.permute.xlu0 %1531
        %v1533 = vlaneseq
        %v1534 = vshrl.u32 %v1533, 7
        %v1535 = vadd.s32 %v1534, 16
        %1536 = vset.pattern.permute.xlu0 %v1535
        %1537 = vperm.xlu0 %1536, %v1520
        %v1538 = vpop.permute.xlu0 %1537
        %v1539 = vlaneseq
        %v1540 = vshrl.u32 %v1539, 7
        %v1541 = vadd.s32 %v1540, 24
        %1542 = vset.pattern.permute.xlu0 %v1541
        %1543 = vperm.xlu0 %1542, %v1520
        %v1544 = vpop.permute.xlu0 %1543
        %v1545 = vld [vmem:[#allocation11] sm:$0xff]
        %v1546 = vld [vmem:[#allocation11 + $0x8] sm:$0xff]
        %v1547 = vld [vmem:[#allocation11 + $0x10] sm:$0xff]
        %v1548 = vld [vmem:[#allocation11 + $0x18] sm:$0xff]
        %v1549 = vld [vmem:[#allocation11 + $0x20] sm:$0xff]
        %v1550 = vld [vmem:[#allocation11 + $0x28] sm:$0xff]
        %v1551 = vld [vmem:[#allocation11 + $0x30] sm:$0xff]
        %v1552 = vld [vmem:[#allocation11 + $0x38] sm:$0xff]
        %v1553 = vld [vmem:[#allocation11 + $0x40] sm:$0xff]
        %v1554 = vld [vmem:[#allocation11 + $0x48] sm:$0xff]
        %v1555 = vld [vmem:[#allocation11 + $0x50] sm:$0xff]
        %v1556 = vld [vmem:[#allocation11 + $0x58] sm:$0xff]
        %v1557 = vld [vmem:[#allocation11 + $0x60] sm:$0xff]
        %v1558 = vld [vmem:[#allocation11 + $0x68] sm:$0xff]
        %v1559 = vld [vmem:[#allocation11 + $0x70] sm:$0xff]
        %v1560 = vld [vmem:[#allocation11 + $0x78] sm:$0xff]
        %v1561 = vld [vmem:[#allocation11 + $0x80] sm:$0xff]
        %v1562 = vld [vmem:[#allocation11 + $0x88] sm:$0xff]
        %v1563 = vld [vmem:[#allocation11 + $0x90] sm:$0xff]
        %v1564 = vld [vmem:[#allocation11 + $0x98] sm:$0xff]
        %v1565 = vld [vmem:[#allocation11 + $0xa0] sm:$0xff]
        %v1566 = vld [vmem:[#allocation11 + $0xa8] sm:$0xff]
        %v1567 = vld [vmem:[#allocation11 + $0xb0] sm:$0xff]
        %v1568 = vld [vmem:[#allocation11 + $0xb8] sm:$0xff]
        %v1569 = vld [vmem:[#allocation11 + $0xc0] sm:$0xff]
        %v1570 = vld [vmem:[#allocation11 + $0xc8] sm:$0xff]
        %v1571 = vld [vmem:[#allocation11 + $0xd0] sm:$0xff]
        %v1572 = vld [vmem:[#allocation11 + $0xd8] sm:$0xff]
        %v1573 = vld [vmem:[#allocation11 + $0xe0] sm:$0xff]
        %v1574 = vld [vmem:[#allocation11 + $0xe8] sm:$0xff]
        %v1575 = vld [vmem:[#allocation11 + $0xf0] sm:$0xff]
        %v1576 = vld [vmem:[#allocation11 + $0xf8] sm:$0xff]
        %v1577 = vld [vmem:[#allocation11 + $0x100] sm:$0xff]
        %v1578 = vld [vmem:[#allocation11 + $0x108] sm:$0xff]
        %v1579 = vld [vmem:[#allocation11 + $0x110] sm:$0xff]
        %v1580 = vld [vmem:[#allocation11 + $0x118] sm:$0xff]
        %v1581 = vld [vmem:[#allocation11 + $0x120] sm:$0xff]
        %v1582 = vld [vmem:[#allocation11 + $0x128] sm:$0xff]
        %v1583 = vld [vmem:[#allocation11 + $0x130] sm:$0xff]
        %v1584 = vld [vmem:[#allocation11 + $0x138] sm:$0xff]
        %v1585 = vld [vmem:[#allocation11 + $0x140] sm:$0xff]
        %v1586 = vld [vmem:[#allocation11 + $0x148] sm:$0xff]
        %v1587 = vld [vmem:[#allocation11 + $0x150] sm:$0xff]
        %v1588 = vld [vmem:[#allocation11 + $0x158] sm:$0xff]
        %v1589 = vld [vmem:[#allocation11 + $0x160] sm:$0xff]
        %v1590 = vld [vmem:[#allocation11 + $0x168] sm:$0xff]
        %v1591 = vld [vmem:[#allocation11 + $0x170] sm:$0xff]
        %v1592 = vld [vmem:[#allocation11 + $0x178] sm:$0xff]
        %v1593 = vld [vmem:[#allocation11 + $0x180] sm:$0xff]
        %v1594 = vld [vmem:[#allocation11 + $0x188] sm:$0xff]
        %v1595 = vld [vmem:[#allocation11 + $0x190] sm:$0xff]
        %v1596 = vld [vmem:[#allocation11 + $0x198] sm:$0xff]
        %v1597 = vld [vmem:[#allocation11 + $0x1a0] sm:$0xff]
        %v1598 = vld [vmem:[#allocation11 + $0x1a8] sm:$0xff]
        %v1599 = vld [vmem:[#allocation11 + $0x1b0] sm:$0xff]
        %v1600 = vld [vmem:[#allocation11 + $0x1b8] sm:$0xff]
        %v1601 = vld [vmem:[#allocation11 + $0x1c0] sm:$0xff]
        %v1602 = vld [vmem:[#allocation11 + $0x1c8] sm:$0xff]
        %v1603 = vld [vmem:[#allocation11 + $0x1d0] sm:$0xff]
        %v1604 = vld [vmem:[#allocation11 + $0x1d8] sm:$0xff]
        %v1605 = vld [vmem:[#allocation11 + $0x1e0] sm:$0xff]
        %v1606 = vld [vmem:[#allocation11 + $0x1e8] sm:$0xff]
        %v1607 = vld [vmem:[#allocation11 + $0x1f0] sm:$0xff]
        %v1608 = vld [vmem:[#allocation11 + $0x1f8] sm:$0xff]
        %v1609 = vmul.f32 %v1151, %v1545
        %v1610 = vmul.f32 %v1157, %v1546
        %v1611 = vmul.f32 %v1163, %v1547
        %v1612 = vmul.f32 %v1169, %v1548
        %v1613 = vmul.f32 %v1176, %v1549
        %v1614 = vmul.f32 %v1182, %v1550
        %v1615 = vmul.f32 %v1188, %v1551
        %v1616 = vmul.f32 %v1194, %v1552
        %v1617 = vmul.f32 %v1201, %v1553
        %v1618 = vmul.f32 %v1207, %v1554
        %v1619 = vmul.f32 %v1213, %v1555
        %v1620 = vmul.f32 %v1219, %v1556
        %v1621 = vmul.f32 %v1226, %v1557
        %v1622 = vmul.f32 %v1232, %v1558
        %v1623 = vmul.f32 %v1238, %v1559
        %v1624 = vmul.f32 %v1244, %v1560
        %v1625 = vmul.f32 %v1251, %v1561
        %v1626 = vmul.f32 %v1257, %v1562
        %v1627 = vmul.f32 %v1263, %v1563
        %v1628 = vmul.f32 %v1269, %v1564
        %v1629 = vmul.f32 %v1276, %v1565
        %v1630 = vmul.f32 %v1282, %v1566
        %v1631 = vmul.f32 %v1288, %v1567
        %v1632 = vmul.f32 %v1294, %v1568
        %v1633 = vmul.f32 %v1301, %v1569
        %v1634 = vmul.f32 %v1307, %v1570
        %v1635 = vmul.f32 %v1313, %v1571
        %v1636 = vmul.f32 %v1319, %v1572
        %v1637 = vmul.f32 %v1326, %v1573
        %v1638 = vmul.f32 %v1332, %v1574
        %v1639 = vmul.f32 %v1338, %v1575
        %v1640 = vmul.f32 %v1344, %v1576
        %v1641 = vmul.f32 %v1351, %v1577
        %v1642 = vmul.f32 %v1357, %v1578
        %v1643 = vmul.f32 %v1363, %v1579
        %v1644 = vmul.f32 %v1369, %v1580
        %v1645 = vmul.f32 %v1376, %v1581
        %v1646 = vmul.f32 %v1382, %v1582
        %v1647 = vmul.f32 %v1388, %v1583
        %v1648 = vmul.f32 %v1394, %v1584
        %v1649 = vmul.f32 %v1401, %v1585
        %v1650 = vmul.f32 %v1407, %v1586
        %v1651 = vmul.f32 %v1413, %v1587
        %v1652 = vmul.f32 %v1419, %v1588
        %v1653 = vmul.f32 %v1426, %v1589
        %v1654 = vmul.f32 %v1432, %v1590
        %v1655 = vmul.f32 %v1438, %v1591
        %v1656 = vmul.f32 %v1444, %v1592
        %v1657 = vmul.f32 %v1451, %v1593
        %v1658 = vmul.f32 %v1457, %v1594
        %v1659 = vmul.f32 %v1463, %v1595
        %v1660 = vmul.f32 %v1469, %v1596
        %v1661 = vmul.f32 %v1476, %v1597
        %v1662 = vmul.f32 %v1482, %v1598
        %v1663 = vmul.f32 %v1488, %v1599
        %v1664 = vmul.f32 %v1494, %v1600
        %v1665 = vmul.f32 %v1501, %v1601
        %v1666 = vmul.f32 %v1507, %v1602
        %v1667 = vmul.f32 %v1513, %v1603
        %v1668 = vmul.f32 %v1519, %v1604
        %v1669 = vmul.f32 %v1526, %v1605
        %v1670 = vmul.f32 %v1532, %v1606
        %v1671 = vmul.f32 %v1538, %v1607
        %v1672 = vmul.f32 %v1544, %v1608
        %vm1673 = vcmask 130048
        %v1674 = vsel %vm1673, %v1609, 0.0
        %v1675 = vsel %vm1673, %v1610, 0.0
        %v1676 = vadd.f32 %v1674, %v1675
        %v1677 = vsel %vm1673, %v1611, 0.0
        %v1678 = vadd.f32 %v1676, %v1677
        %v1679 = vsel %vm1673, %v1612, 0.0
        %v1680 = vadd.f32 %v1678, %v1679
        %v1681 = vrot.slane %v1680, 4
        %v1682 = vadd.f32 %v1680, %v1681
        %v1683 = vrot.slane %v1682, 2
        %v1684 = vadd.f32 %v1682, %v1683
        %v1685 = vrot.slane %v1684, 1
        %v1686 = vadd.f32 %v1684, %v1685
        %v1687 = vsel %vm1673, %v1613, 0.0
        %v1688 = vsel %vm1673, %v1614, 0.0
        %v1689 = vadd.f32 %v1687, %v1688
        %v1690 = vsel %vm1673, %v1615, 0.0
        %v1691 = vadd.f32 %v1689, %v1690
        %v1692 = vsel %vm1673, %v1616, 0.0
        %v1693 = vadd.f32 %v1691, %v1692
        %v1694 = vrot.slane %v1693, 4
        %v1695 = vadd.f32 %v1693, %v1694
        %v1696 = vrot.slane %v1695, 2
        %v1697 = vadd.f32 %v1695, %v1696
        %v1698 = vrot.slane %v1697, 1
        %v1699 = vadd.f32 %v1697, %v1698
        %v1700 = vsel %vm1673, %v1617, 0.0
        %v1701 = vsel %vm1673, %v1618, 0.0
        %v1702 = vadd.f32 %v1700, %v1701
        %v1703 = vsel %vm1673, %v1619, 0.0
        %v1704 = vadd.f32 %v1702, %v1703
        %v1705 = vsel %vm1673, %v1620, 0.0
        %v1706 = vadd.f32 %v1704, %v1705
        %v1707 = vrot.slane %v1706, 4
        %v1708 = vadd.f32 %v1706, %v1707
        %v1709 = vrot.slane %v1708, 2
        %v1710 = vadd.f32 %v1708, %v1709
        %v1711 = vrot.slane %v1710, 1
        %v1712 = vadd.f32 %v1710, %v1711
        %v1713 = vsel %vm1673, %v1621, 0.0
        %v1714 = vsel %vm1673, %v1622, 0.0
        %v1715 = vadd.f32 %v1713, %v1714
        %v1716 = vsel %vm1673, %v1623, 0.0
        %v1717 = vadd.f32 %v1715, %v1716
        %v1718 = vsel %vm1673, %v1624, 0.0
        %v1719 = vadd.f32 %v1717, %v1718
        %v1720 = vrot.slane %v1719, 4
        %v1721 = vadd.f32 %v1719, %v1720
        %v1722 = vrot.slane %v1721, 2
        %v1723 = vadd.f32 %v1721, %v1722
        %v1724 = vrot.slane %v1723, 1
        %v1725 = vadd.f32 %v1723, %v1724
        %v1726 = vsel %vm1673, %v1625, 0.0
        %v1727 = vsel %vm1673, %v1626, 0.0
        %v1728 = vadd.f32 %v1726, %v1727
        %v1729 = vsel %vm1673, %v1627, 0.0
        %v1730 = vadd.f32 %v1728, %v1729
        %v1731 = vsel %vm1673, %v1628, 0.0
        %v1732 = vadd.f32 %v1730, %v1731
        %v1733 = vrot.slane %v1732, 4
        %v1734 = vadd.f32 %v1732, %v1733
        %v1735 = vrot.slane %v1734, 2
        %v1736 = vadd.f32 %v1734, %v1735
        %v1737 = vrot.slane %v1736, 1
        %v1738 = vadd.f32 %v1736, %v1737
        %v1739 = vsel %vm1673, %v1629, 0.0
        %v1740 = vsel %vm1673, %v1630, 0.0
        %v1741 = vadd.f32 %v1739, %v1740
        %v1742 = vsel %vm1673, %v1631, 0.0
        %v1743 = vadd.f32 %v1741, %v1742
        %v1744 = vsel %vm1673, %v1632, 0.0
        %v1745 = vadd.f32 %v1743, %v1744
        %v1746 = vrot.slane %v1745, 4
        %v1747 = vadd.f32 %v1745, %v1746
        %v1748 = vrot.slane %v1747, 2
        %v1749 = vadd.f32 %v1747, %v1748
        %v1750 = vrot.slane %v1749, 1
        %v1751 = vadd.f32 %v1749, %v1750
        %v1752 = vsel %vm1673, %v1633, 0.0
        %v1753 = vsel %vm1673, %v1634, 0.0
        %v1754 = vadd.f32 %v1752, %v1753
        %v1755 = vsel %vm1673, %v1635, 0.0
        %v1756 = vadd.f32 %v1754, %v1755
        %v1757 = vsel %vm1673, %v1636, 0.0
        %v1758 = vadd.f32 %v1756, %v1757
        %v1759 = vrot.slane %v1758, 4
        %v1760 = vadd.f32 %v1758, %v1759
        %v1761 = vrot.slane %v1760, 2
        %v1762 = vadd.f32 %v1760, %v1761
        %v1763 = vrot.slane %v1762, 1
        %v1764 = vadd.f32 %v1762, %v1763
        %v1765 = vsel %vm1673, %v1637, 0.0
        %v1766 = vsel %vm1673, %v1638, 0.0
        %v1767 = vadd.f32 %v1765, %v1766
        %v1768 = vsel %vm1673, %v1639, 0.0
        %v1769 = vadd.f32 %v1767, %v1768
        %v1770 = vsel %vm1673, %v1640, 0.0
        %v1771 = vadd.f32 %v1769, %v1770
        %v1772 = vrot.slane %v1771, 4
        %v1773 = vadd.f32 %v1771, %v1772
        %v1774 = vrot.slane %v1773, 2
        %v1775 = vadd.f32 %v1773, %v1774
        %v1776 = vrot.slane %v1775, 1
        %v1777 = vadd.f32 %v1775, %v1776
        %v1778 = vsel %vm1673, %v1641, 0.0
        %v1779 = vsel %vm1673, %v1642, 0.0
        %v1780 = vadd.f32 %v1778, %v1779
        %v1781 = vsel %vm1673, %v1643, 0.0
        %v1782 = vadd.f32 %v1780, %v1781
        %v1783 = vsel %vm1673, %v1644, 0.0
        %v1784 = vadd.f32 %v1782, %v1783
        %v1785 = vrot.slane %v1784, 4
        %v1786 = vadd.f32 %v1784, %v1785
        %v1787 = vrot.slane %v1786, 2
        %v1788 = vadd.f32 %v1786, %v1787
        %v1789 = vrot.slane %v1788, 1
        %v1790 = vadd.f32 %v1788, %v1789
        %v1791 = vsel %vm1673, %v1645, 0.0
        %v1792 = vsel %vm1673, %v1646, 0.0
        %v1793 = vadd.f32 %v1791, %v1792
        %v1794 = vsel %vm1673, %v1647, 0.0
        %v1795 = vadd.f32 %v1793, %v1794
        %v1796 = vsel %vm1673, %v1648, 0.0
        %v1797 = vadd.f32 %v1795, %v1796
        %v1798 = vrot.slane %v1797, 4
        %v1799 = vadd.f32 %v1797, %v1798
        %v1800 = vrot.slane %v1799, 2
        %v1801 = vadd.f32 %v1799, %v1800
        %v1802 = vrot.slane %v1801, 1
        %v1803 = vadd.f32 %v1801, %v1802
        %v1804 = vsel %vm1673, %v1649, 0.0
        %v1805 = vsel %vm1673, %v1650, 0.0
        %v1806 = vadd.f32 %v1804, %v1805
        %v1807 = vsel %vm1673, %v1651, 0.0
        %v1808 = vadd.f32 %v1806, %v1807
        %v1809 = vsel %vm1673, %v1652, 0.0
        %v1810 = vadd.f32 %v1808, %v1809
        %v1811 = vrot.slane %v1810, 4
        %v1812 = vadd.f32 %v1810, %v1811
        %v1813 = vrot.slane %v1812, 2
        %v1814 = vadd.f32 %v1812, %v1813
        %v1815 = vrot.slane %v1814, 1
        %v1816 = vadd.f32 %v1814, %v1815
        %v1817 = vsel %vm1673, %v1653, 0.0
        %v1818 = vsel %vm1673, %v1654, 0.0
        %v1819 = vadd.f32 %v1817, %v1818
        %v1820 = vsel %vm1673, %v1655, 0.0
        %v1821 = vadd.f32 %v1819, %v1820
        %v1822 = vsel %vm1673, %v1656, 0.0
        %v1823 = vadd.f32 %v1821, %v1822
        %v1824 = vrot.slane %v1823, 4
        %v1825 = vadd.f32 %v1823, %v1824
        %v1826 = vrot.slane %v1825, 2
        %v1827 = vadd.f32 %v1825, %v1826
        %v1828 = vrot.slane %v1827, 1
        %v1829 = vadd.f32 %v1827, %v1828
        %v1830 = vsel %vm1673, %v1657, 0.0
        %v1831 = vsel %vm1673, %v1658, 0.0
        %v1832 = vadd.f32 %v1830, %v1831
        %v1833 = vsel %vm1673, %v1659, 0.0
        %v1834 = vadd.f32 %v1832, %v1833
        %v1835 = vsel %vm1673, %v1660, 0.0
        %v1836 = vadd.f32 %v1834, %v1835
        %v1837 = vrot.slane %v1836, 4
        %v1838 = vadd.f32 %v1836, %v1837
        %v1839 = vrot.slane %v1838, 2
        %v1840 = vadd.f32 %v1838, %v1839
        %v1841 = vrot.slane %v1840, 1
        %v1842 = vadd.f32 %v1840, %v1841
        %v1843 = vsel %vm1673, %v1661, 0.0
        %v1844 = vsel %vm1673, %v1662, 0.0
        %v1845 = vadd.f32 %v1843, %v1844
        %v1846 = vsel %vm1673, %v1663, 0.0
        %v1847 = vadd.f32 %v1845, %v1846
        %v1848 = vsel %vm1673, %v1664, 0.0
        %v1849 = vadd.f32 %v1847, %v1848
        %v1850 = vrot.slane %v1849, 4
        %v1851 = vadd.f32 %v1849, %v1850
        %v1852 = vrot.slane %v1851, 2
        %v1853 = vadd.f32 %v1851, %v1852
        %v1854 = vrot.slane %v1853, 1
        %v1855 = vadd.f32 %v1853, %v1854
        %v1856 = vsel %vm1673, %v1665, 0.0
        %v1857 = vsel %vm1673, %v1666, 0.0
        %v1858 = vadd.f32 %v1856, %v1857
        %v1859 = vsel %vm1673, %v1667, 0.0
        %v1860 = vadd.f32 %v1858, %v1859
        %v1861 = vsel %vm1673, %v1668, 0.0
        %v1862 = vadd.f32 %v1860, %v1861
        %v1863 = vrot.slane %v1862, 4
        %v1864 = vadd.f32 %v1862, %v1863
        %v1865 = vrot.slane %v1864, 2
        %v1866 = vadd.f32 %v1864, %v1865
        %v1867 = vrot.slane %v1866, 1
        %v1868 = vadd.f32 %v1866, %v1867
        %v1869 = vsel %vm1673, %v1669, 0.0
        %v1870 = vsel %vm1673, %v1670, 0.0
        %v1871 = vadd.f32 %v1869, %v1870
        %v1872 = vsel %vm1673, %v1671, 0.0
        %v1873 = vadd.f32 %v1871, %v1872
        %v1874 = vsel %vm1673, %v1672, 0.0
        %v1875 = vadd.f32 %v1873, %v1874
        %v1876 = vrot.slane %v1875, 4
        %v1877 = vadd.f32 %v1875, %v1876
        %v1878 = vrot.slane %v1877, 2
        %v1879 = vadd.f32 %v1877, %v1878
        %v1880 = vrot.slane %v1879, 1
        %v1881 = vadd.f32 %v1879, %v1880
        %v1882 = vld [vmem:[#allocation13] sm:$0xff]
        %v1883 = vld [vmem:[#allocation13 + $0x8] sm:$0xff]
        %v1884 = vld [vmem:[#allocation13 + $0x10] sm:$0xff]
        %v1885 = vld [vmem:[#allocation13 + $0x18] sm:$0xff]
        %v1886 = vld [vmem:[#allocation13 + $0x20] sm:$0xff]
        %v1887 = vld [vmem:[#allocation13 + $0x28] sm:$0xff]
        %v1888 = vld [vmem:[#allocation13 + $0x30] sm:$0xff]
        %v1889 = vld [vmem:[#allocation13 + $0x38] sm:$0xff]
        %v1890 = vld [vmem:[#allocation13 + $0x40] sm:$0xff]
        %v1891 = vld [vmem:[#allocation13 + $0x48] sm:$0xff]
        %v1892 = vld [vmem:[#allocation13 + $0x50] sm:$0xff]
        %v1893 = vld [vmem:[#allocation13 + $0x58] sm:$0xff]
        %v1894 = vld [vmem:[#allocation13 + $0x60] sm:$0xff]
        %v1895 = vld [vmem:[#allocation13 + $0x68] sm:$0xff]
        %v1896 = vld [vmem:[#allocation13 + $0x70] sm:$0xff]
        %v1897 = vld [vmem:[#allocation13 + $0x78] sm:$0xff]
        %v1898 = vld [vmem:[#allocation13 + $0x80] sm:$0xff]
        %v1899 = vld [vmem:[#allocation13 + $0x88] sm:$0xff]
        %v1900 = vld [vmem:[#allocation13 + $0x90] sm:$0xff]
        %v1901 = vld [vmem:[#allocation13 + $0x98] sm:$0xff]
        %v1902 = vld [vmem:[#allocation13 + $0xa0] sm:$0xff]
        %v1903 = vld [vmem:[#allocation13 + $0xa8] sm:$0xff]
        %v1904 = vld [vmem:[#allocation13 + $0xb0] sm:$0xff]
        %v1905 = vld [vmem:[#allocation13 + $0xb8] sm:$0xff]
        %v1906 = vld [vmem:[#allocation13 + $0xc0] sm:$0xff]
        %v1907 = vld [vmem:[#allocation13 + $0xc8] sm:$0xff]
        %v1908 = vld [vmem:[#allocation13 + $0xd0] sm:$0xff]
        %v1909 = vld [vmem:[#allocation13 + $0xd8] sm:$0xff]
        %v1910 = vld [vmem:[#allocation13 + $0xe0] sm:$0xff]
        %v1911 = vld [vmem:[#allocation13 + $0xe8] sm:$0xff]
        %v1912 = vld [vmem:[#allocation13 + $0xf0] sm:$0xff]
        %v1913 = vld [vmem:[#allocation13 + $0xf8] sm:$0xff]
        %v1914 = vld [vmem:[#allocation13 + $0x100] sm:$0xff]
        %v1915 = vld [vmem:[#allocation13 + $0x108] sm:$0xff]
        %v1916 = vld [vmem:[#allocation13 + $0x110] sm:$0xff]
        %v1917 = vld [vmem:[#allocation13 + $0x118] sm:$0xff]
        %v1918 = vld [vmem:[#allocation13 + $0x120] sm:$0xff]
        %v1919 = vld [vmem:[#allocation13 + $0x128] sm:$0xff]
        %v1920 = vld [vmem:[#allocation13 + $0x130] sm:$0xff]
        %v1921 = vld [vmem:[#allocation13 + $0x138] sm:$0xff]
        %v1922 = vld [vmem:[#allocation13 + $0x140] sm:$0xff]
        %v1923 = vld [vmem:[#allocation13 + $0x148] sm:$0xff]
        %v1924 = vld [vmem:[#allocation13 + $0x150] sm:$0xff]
        %v1925 = vld [vmem:[#allocation13 + $0x158] sm:$0xff]
        %v1926 = vld [vmem:[#allocation13 + $0x160] sm:$0xff]
        %v1927 = vld [vmem:[#allocation13 + $0x168] sm:$0xff]
        %v1928 = vld [vmem:[#allocation13 + $0x170] sm:$0xff]
        %v1929 = vld [vmem:[#allocation13 + $0x178] sm:$0xff]
        %v1930 = vld [vmem:[#allocation13 + $0x180] sm:$0xff]
        %v1931 = vld [vmem:[#allocation13 + $0x188] sm:$0xff]
        %v1932 = vld [vmem:[#allocation13 + $0x190] sm:$0xff]
        %v1933 = vld [vmem:[#allocation13 + $0x198] sm:$0xff]
        %v1934 = vld [vmem:[#allocation13 + $0x1a0] sm:$0xff]
        %v1935 = vld [vmem:[#allocation13 + $0x1a8] sm:$0xff]
        %v1936 = vld [vmem:[#allocation13 + $0x1b0] sm:$0xff]
        %v1937 = vld [vmem:[#allocation13 + $0x1b8] sm:$0xff]
        %v1938 = vld [vmem:[#allocation13 + $0x1c0] sm:$0xff]
        %v1939 = vld [vmem:[#allocation13 + $0x1c8] sm:$0xff]
        %v1940 = vld [vmem:[#allocation13 + $0x1d0] sm:$0xff]
        %v1941 = vld [vmem:[#allocation13 + $0x1d8] sm:$0xff]
        %v1942 = vld [vmem:[#allocation13 + $0x1e0] sm:$0xff]
        %v1943 = vld [vmem:[#allocation13 + $0x1e8] sm:$0xff]
        %v1944 = vld [vmem:[#allocation13 + $0x1f0] sm:$0xff]
        %v1945 = vld [vmem:[#allocation13 + $0x1f8] sm:$0xff]
        %v1946 = vmul.f32 %v1151, %v1882
        %v1947 = vmul.f32 %v1157, %v1883
        %v1948 = vmul.f32 %v1163, %v1884
        %v1949 = vmul.f32 %v1169, %v1885
        %v1950 = vmul.f32 %v1176, %v1886
        %v1951 = vmul.f32 %v1182, %v1887
        %v1952 = vmul.f32 %v1188, %v1888
        %v1953 = vmul.f32 %v1194, %v1889
        %v1954 = vmul.f32 %v1201, %v1890
        %v1955 = vmul.f32 %v1207, %v1891
        %v1956 = vmul.f32 %v1213, %v1892
        %v1957 = vmul.f32 %v1219, %v1893
        %v1958 = vmul.f32 %v1226, %v1894
        %v1959 = vmul.f32 %v1232, %v1895
        %v1960 = vmul.f32 %v1238, %v1896
        %v1961 = vmul.f32 %v1244, %v1897
        %v1962 = vmul.f32 %v1251, %v1898
        %v1963 = vmul.f32 %v1257, %v1899
        %v1964 = vmul.f32 %v1263, %v1900
        %v1965 = vmul.f32 %v1269, %v1901
        %v1966 = vmul.f32 %v1276, %v1902
        %v1967 = vmul.f32 %v1282, %v1903
        %v1968 = vmul.f32 %v1288, %v1904
        %v1969 = vmul.f32 %v1294, %v1905
        %v1970 = vmul.f32 %v1301, %v1906
        %v1971 = vmul.f32 %v1307, %v1907
        %v1972 = vmul.f32 %v1313, %v1908
        %v1973 = vmul.f32 %v1319, %v1909
        %v1974 = vmul.f32 %v1326, %v1910
        %v1975 = vmul.f32 %v1332, %v1911
        %v1976 = vmul.f32 %v1338, %v1912
        %v1977 = vmul.f32 %v1344, %v1913
        %v1978 = vmul.f32 %v1351, %v1914
        %v1979 = vmul.f32 %v1357, %v1915
        %v1980 = vmul.f32 %v1363, %v1916
        %v1981 = vmul.f32 %v1369, %v1917
        %v1982 = vmul.f32 %v1376, %v1918
        %v1983 = vmul.f32 %v1382, %v1919
        %v1984 = vmul.f32 %v1388, %v1920
        %v1985 = vmul.f32 %v1394, %v1921
        %v1986 = vmul.f32 %v1401, %v1922
        %v1987 = vmul.f32 %v1407, %v1923
        %v1988 = vmul.f32 %v1413, %v1924
        %v1989 = vmul.f32 %v1419, %v1925
        %v1990 = vmul.f32 %v1426, %v1926
        %v1991 = vmul.f32 %v1432, %v1927
        %v1992 = vmul.f32 %v1438, %v1928
        %v1993 = vmul.f32 %v1444, %v1929
        %v1994 = vmul.f32 %v1451, %v1930
        %v1995 = vmul.f32 %v1457, %v1931
        %v1996 = vmul.f32 %v1463, %v1932
        %v1997 = vmul.f32 %v1469, %v1933
        %v1998 = vmul.f32 %v1476, %v1934
        %v1999 = vmul.f32 %v1482, %v1935
        %v2000 = vmul.f32 %v1488, %v1936
        %v2001 = vmul.f32 %v1494, %v1937
        %v2002 = vmul.f32 %v1501, %v1938
        %v2003 = vmul.f32 %v1507, %v1939
        %v2004 = vmul.f32 %v1513, %v1940
        %v2005 = vmul.f32 %v1519, %v1941
        %v2006 = vmul.f32 %v1526, %v1942
        %v2007 = vmul.f32 %v1532, %v1943
        %v2008 = vmul.f32 %v1538, %v1944
        %v2009 = vmul.f32 %v1544, %v1945
        %v2010 = vsel %vm1673, %v1946, 0.0
        %v2011 = vsel %vm1673, %v1947, 0.0
        %v2012 = vadd.f32 %v2010, %v2011
        %v2013 = vsel %vm1673, %v1948, 0.0
        %v2014 = vadd.f32 %v2012, %v2013
        %v2015 = vsel %vm1673, %v1949, 0.0
        %v2016 = vadd.f32 %v2014, %v2015
        %v2017 = vrot.slane %v2016, 4
        %v2018 = vadd.f32 %v2016, %v2017
        %v2019 = vrot.slane %v2018, 2
        %v2020 = vadd.f32 %v2018, %v2019
        %v2021 = vrot.slane %v2020, 1
        %v2022 = vadd.f32 %v2020, %v2021
        %v2023 = vsel %vm1673, %v1950, 0.0
        %v2024 = vsel %vm1673, %v1951, 0.0
        %v2025 = vadd.f32 %v2023, %v2024
        %v2026 = vsel %vm1673, %v1952, 0.0
        %v2027 = vadd.f32 %v2025, %v2026
        %v2028 = vsel %vm1673, %v1953, 0.0
        %v2029 = vadd.f32 %v2027, %v2028
        %v2030 = vrot.slane %v2029, 4
        %v2031 = vadd.f32 %v2029, %v2030
        %v2032 = vrot.slane %v2031, 2
        %v2033 = vadd.f32 %v2031, %v2032
        %v2034 = vrot.slane %v2033, 1
        %v2035 = vadd.f32 %v2033, %v2034
        %v2036 = vsel %vm1673, %v1954, 0.0
        %v2037 = vsel %vm1673, %v1955, 0.0
        %v2038 = vadd.f32 %v2036, %v2037
        %v2039 = vsel %vm1673, %v1956, 0.0
        %v2040 = vadd.f32 %v2038, %v2039
        %v2041 = vsel %vm1673, %v1957, 0.0
        %v2042 = vadd.f32 %v2040, %v2041
        %v2043 = vrot.slane %v2042, 4
        %v2044 = vadd.f32 %v2042, %v2043
        %v2045 = vrot.slane %v2044, 2
        %v2046 = vadd.f32 %v2044, %v2045
        %v2047 = vrot.slane %v2046, 1
        %v2048 = vadd.f32 %v2046, %v2047
        %v2049 = vsel %vm1673, %v1958, 0.0
        %v2050 = vsel %vm1673, %v1959, 0.0
        %v2051 = vadd.f32 %v2049, %v2050
        %v2052 = vsel %vm1673, %v1960, 0.0
        %v2053 = vadd.f32 %v2051, %v2052
        %v2054 = vsel %vm1673, %v1961, 0.0
        %v2055 = vadd.f32 %v2053, %v2054
        %v2056 = vrot.slane %v2055, 4
        %v2057 = vadd.f32 %v2055, %v2056
        %v2058 = vrot.slane %v2057, 2
        %v2059 = vadd.f32 %v2057, %v2058
        %v2060 = vrot.slane %v2059, 1
        %v2061 = vadd.f32 %v2059, %v2060
        %v2062 = vsel %vm1673, %v1962, 0.0
        %v2063 = vsel %vm1673, %v1963, 0.0
        %v2064 = vadd.f32 %v2062, %v2063
        %v2065 = vsel %vm1673, %v1964, 0.0
        %v2066 = vadd.f32 %v2064, %v2065
        %v2067 = vsel %vm1673, %v1965, 0.0
        %v2068 = vadd.f32 %v2066, %v2067
        %v2069 = vrot.slane %v2068, 4
        %v2070 = vadd.f32 %v2068, %v2069
        %v2071 = vrot.slane %v2070, 2
        %v2072 = vadd.f32 %v2070, %v2071
        %v2073 = vrot.slane %v2072, 1
        %v2074 = vadd.f32 %v2072, %v2073
        %v2075 = vsel %vm1673, %v1966, 0.0
        %v2076 = vsel %vm1673, %v1967, 0.0
        %v2077 = vadd.f32 %v2075, %v2076
        %v2078 = vsel %vm1673, %v1968, 0.0
        %v2079 = vadd.f32 %v2077, %v2078
        %v2080 = vsel %vm1673, %v1969, 0.0
        %v2081 = vadd.f32 %v2079, %v2080
        %v2082 = vrot.slane %v2081, 4
        %v2083 = vadd.f32 %v2081, %v2082
        %v2084 = vrot.slane %v2083, 2
        %v2085 = vadd.f32 %v2083, %v2084
        %v2086 = vrot.slane %v2085, 1
        %v2087 = vadd.f32 %v2085, %v2086
        %v2088 = vsel %vm1673, %v1970, 0.0
        %v2089 = vsel %vm1673, %v1971, 0.0
        %v2090 = vadd.f32 %v2088, %v2089
        %v2091 = vsel %vm1673, %v1972, 0.0
        %v2092 = vadd.f32 %v2090, %v2091
        %v2093 = vsel %vm1673, %v1973, 0.0
        %v2094 = vadd.f32 %v2092, %v2093
        %v2095 = vrot.slane %v2094, 4
        %v2096 = vadd.f32 %v2094, %v2095
        %v2097 = vrot.slane %v2096, 2
        %v2098 = vadd.f32 %v2096, %v2097
        %v2099 = vrot.slane %v2098, 1
        %v2100 = vadd.f32 %v2098, %v2099
        %v2101 = vsel %vm1673, %v1974, 0.0
        %v2102 = vsel %vm1673, %v1975, 0.0
        %v2103 = vadd.f32 %v2101, %v2102
        %v2104 = vsel %vm1673, %v1976, 0.0
        %v2105 = vadd.f32 %v2103, %v2104
        %v2106 = vsel %vm1673, %v1977, 0.0
        %v2107 = vadd.f32 %v2105, %v2106
        %v2108 = vrot.slane %v2107, 4
        %v2109 = vadd.f32 %v2107, %v2108
        %v2110 = vrot.slane %v2109, 2
        %v2111 = vadd.f32 %v2109, %v2110
        %v2112 = vrot.slane %v2111, 1
        %v2113 = vadd.f32 %v2111, %v2112
        %v2114 = vsel %vm1673, %v1978, 0.0
        %v2115 = vsel %vm1673, %v1979, 0.0
        %v2116 = vadd.f32 %v2114, %v2115
        %v2117 = vsel %vm1673, %v1980, 0.0
        %v2118 = vadd.f32 %v2116, %v2117
        %v2119 = vsel %vm1673, %v1981, 0.0
        %v2120 = vadd.f32 %v2118, %v2119
        %v2121 = vrot.slane %v2120, 4
        %v2122 = vadd.f32 %v2120, %v2121
        %v2123 = vrot.slane %v2122, 2
        %v2124 = vadd.f32 %v2122, %v2123
        %v2125 = vrot.slane %v2124, 1
        %v2126 = vadd.f32 %v2124, %v2125
        %v2127 = vsel %vm1673, %v1982, 0.0
        %v2128 = vsel %vm1673, %v1983, 0.0
        %v2129 = vadd.f32 %v2127, %v2128
        %v2130 = vsel %vm1673, %v1984, 0.0
        %v2131 = vadd.f32 %v2129, %v2130
        %v2132 = vsel %vm1673, %v1985, 0.0
        %v2133 = vadd.f32 %v2131, %v2132
        %v2134 = vrot.slane %v2133, 4
        %v2135 = vadd.f32 %v2133, %v2134
        %v2136 = vrot.slane %v2135, 2
        %v2137 = vadd.f32 %v2135, %v2136
        %v2138 = vrot.slane %v2137, 1
        %v2139 = vadd.f32 %v2137, %v2138
        %v2140 = vsel %vm1673, %v1986, 0.0
        %v2141 = vsel %vm1673, %v1987, 0.0
        %v2142 = vadd.f32 %v2140, %v2141
        %v2143 = vsel %vm1673, %v1988, 0.0
        %v2144 = vadd.f32 %v2142, %v2143
        %v2145 = vsel %vm1673, %v1989, 0.0
        %v2146 = vadd.f32 %v2144, %v2145
        %v2147 = vrot.slane %v2146, 4
        %v2148 = vadd.f32 %v2146, %v2147
        %v2149 = vrot.slane %v2148, 2
        %v2150 = vadd.f32 %v2148, %v2149
        %v2151 = vrot.slane %v2150, 1
        %v2152 = vadd.f32 %v2150, %v2151
        %v2153 = vsel %vm1673, %v1990, 0.0
        %v2154 = vsel %vm1673, %v1991, 0.0
        %v2155 = vadd.f32 %v2153, %v2154
        %v2156 = vsel %vm1673, %v1992, 0.0
        %v2157 = vadd.f32 %v2155, %v2156
        %v2158 = vsel %vm1673, %v1993, 0.0
        %v2159 = vadd.f32 %v2157, %v2158
        %v2160 = vrot.slane %v2159, 4
        %v2161 = vadd.f32 %v2159, %v2160
        %v2162 = vrot.slane %v2161, 2
        %v2163 = vadd.f32 %v2161, %v2162
        %v2164 = vrot.slane %v2163, 1
        %v2165 = vadd.f32 %v2163, %v2164
        %v2166 = vsel %vm1673, %v1994, 0.0
        %v2167 = vsel %vm1673, %v1995, 0.0
        %v2168 = vadd.f32 %v2166, %v2167
        %v2169 = vsel %vm1673, %v1996, 0.0
        %v2170 = vadd.f32 %v2168, %v2169
        %v2171 = vsel %vm1673, %v1997, 0.0
        %v2172 = vadd.f32 %v2170, %v2171
        %v2173 = vrot.slane %v2172, 4
        %v2174 = vadd.f32 %v2172, %v2173
        %v2175 = vrot.slane %v2174, 2
        %v2176 = vadd.f32 %v2174, %v2175
        %v2177 = vrot.slane %v2176, 1
        %v2178 = vadd.f32 %v2176, %v2177
        %v2179 = vsel %vm1673, %v1998, 0.0
        %v2180 = vsel %vm1673, %v1999, 0.0
        %v2181 = vadd.f32 %v2179, %v2180
        %v2182 = vsel %vm1673, %v2000, 0.0
        %v2183 = vadd.f32 %v2181, %v2182
        %v2184 = vsel %vm1673, %v2001, 0.0
        %v2185 = vadd.f32 %v2183, %v2184
        %v2186 = vrot.slane %v2185, 4
        %v2187 = vadd.f32 %v2185, %v2186
        %v2188 = vrot.slane %v2187, 2
        %v2189 = vadd.f32 %v2187, %v2188
        %v2190 = vrot.slane %v2189, 1
        %v2191 = vadd.f32 %v2189, %v2190
        %v2192 = vsel %vm1673, %v2002, 0.0
        %v2193 = vsel %vm1673, %v2003, 0.0
        %v2194 = vadd.f32 %v2192, %v2193
        %v2195 = vsel %vm1673, %v2004, 0.0
        %v2196 = vadd.f32 %v2194, %v2195
        %v2197 = vsel %vm1673, %v2005, 0.0
        %v2198 = vadd.f32 %v2196, %v2197
        %v2199 = vrot.slane %v2198, 4
        %v2200 = vadd.f32 %v2198, %v2199
        %v2201 = vrot.slane %v2200, 2
        %v2202 = vadd.f32 %v2200, %v2201
        %v2203 = vrot.slane %v2202, 1
        %v2204 = vadd.f32 %v2202, %v2203
        %v2205 = vsel %vm1673, %v2006, 0.0
        %v2206 = vsel %vm1673, %v2007, 0.0
        %v2207 = vadd.f32 %v2205, %v2206
        %v2208 = vsel %vm1673, %v2008, 0.0
        %v2209 = vadd.f32 %v2207, %v2208
        %v2210 = vsel %vm1673, %v2009, 0.0
        %v2211 = vadd.f32 %v2209, %v2210
        %v2212 = vrot.slane %v2211, 4
        %v2213 = vadd.f32 %v2211, %v2212
        %v2214 = vrot.slane %v2213, 2
        %v2215 = vadd.f32 %v2213, %v2214
        %v2216 = vrot.slane %v2215, 1
        %v2217 = vadd.f32 %v2215, %v2216
        %v2218 = vld [vmem:[#allocation14] sm:$0xff]
        %v2219 = vld [vmem:[#allocation14 + $0x8] sm:$0xff]
        %v2220 = vld [vmem:[#allocation14 + $0x10] sm:$0xff]
        %v2221 = vld [vmem:[#allocation14 + $0x18] sm:$0xff]
        %vm2238 = vcmask 1041409
        %v2239 = vsel %vm2238, %v1699, %v1686
        %vm2240 = vcmask 1042434
        %v2241 = vsel %vm2240, %v1712, %v2239
        %vm2242 = vcmask 1043459
        %v2243 = vsel %vm2242, %v1725, %v2241
        %vm2244 = vcmask 1044484
        %v2245 = vsel %vm2244, %v1738, %v2243
        %vm2246 = vcmask 1045509
        %v2247 = vsel %vm2246, %v1751, %v2245
        %vm2248 = vcmask 1046534
        %v2249 = vsel %vm2248, %v1764, %v2247
        %vm2250 = vcmask 1047559
        %v2251 = vsel %vm2250, %v1777, %v2249
        %v2252 = vsel %vm2238, %v1803, %v1790
        %v2253 = vsel %vm2240, %v1816, %v2252
        %v2254 = vsel %vm2242, %v1829, %v2253
        %v2255 = vsel %vm2244, %v1842, %v2254
        %v2256 = vsel %vm2246, %v1855, %v2255
        %v2257 = vsel %vm2248, %v1868, %v2256
        %v2258 = vsel %vm2250, %v1881, %v2257
        %v2262 = vsel %vm1673, %v2218, 0
        %v2265 = vsel %vm1673, %v2219, 0
        %v2268 = vsel %vm1673, %v2220, 0
        %v2271 = vsel %vm1673, %v2221, 0
        %2273 = vmatpush.msra.mxu0 0.0
        %2274 = vmatpush.msra.mxu0 0.0
        %2275 = vmatpush.msra.mxu0 0.0
        %2276 = vmatpush.msra.mxu0 0.0
        %2277 = vmatpush.msra.mxu0 0.0
        %2278 = vmatpush.msra.mxu0 0.0
        %2279 = vmatpush.msra.mxu0 0.0
        %2280 = vmatpush.msra.mxu0 0.0
        %2281 = vmatpush.msra.mxu0 0.0
        %2282 = vmatpush.msra.mxu0 0.0
        %2283 = vmatpush.msra.mxu0 0.0
        %2284 = vmatpush.msra.mxu0 0.0
        %2285 = vmatpush.msra.mxu0 0.0
        %2286 = vmatpush.msra.mxu0 0.0
        %2287 = vmatpush.msra.mxu0 %v2258
        %2288 = vmatpush.msra.mxu0 %v2251
        %2289 = vmatmul.f32.gmra.mxu0 %v2262
        %v2290 = vpop.f32.mrf.mxu0
        %v2291 = vadd.f32 0.0, %v2290
        %2292 = vmatmul.f32.gmra.mxu0 %v2265
        %v2293 = vpop.f32.mrf.mxu0
        %v2294 = vadd.f32 0.0, %v2293
        %2295 = vmatmul.f32.gmra.mxu0 %v2268
        %v2296 = vpop.f32.mrf.mxu0
        %v2297 = vadd.f32 0.0, %v2296
        %2298 = vmatmul.f32.gmra.mxu0 %v2271
        %v2299 = vpop.f32.mrf.mxu0
        %v2300 = vadd.f32 0.0, %v2299
        %2301 = vdwg.mxu0
        %s2302 = scalar_lea.vmem [#allocation14], 32
        %v2303 = vld [vmem:[%s2302] sm:$0xff]
        %v2304 = vld [vmem:[%s2302 + $0x8] sm:$0xff]
        %v2305 = vld [vmem:[%s2302 + $0x10] sm:$0xff]
        %v2306 = vld [vmem:[%s2302 + $0x18] sm:$0xff]
        %v2323 = vsel %vm2238, %v2035, %v2022
        %v2324 = vsel %vm2240, %v2048, %v2323
        %v2325 = vsel %vm2242, %v2061, %v2324
        %v2326 = vsel %vm2244, %v2074, %v2325
        %v2327 = vsel %vm2246, %v2087, %v2326
        %v2328 = vsel %vm2248, %v2100, %v2327
        %v2329 = vsel %vm2250, %v2113, %v2328
        %v2330 = vsel %vm2238, %v2139, %v2126
        %v2331 = vsel %vm2240, %v2152, %v2330
        %v2332 = vsel %vm2242, %v2165, %v2331
        %v2333 = vsel %vm2244, %v2178, %v2332
        %v2334 = vsel %vm2246, %v2191, %v2333
        %v2335 = vsel %vm2248, %v2204, %v2334
        %v2336 = vsel %vm2250, %v2217, %v2335
        %v2340 = vsel %vm1673, %v2303, 0
        %v2343 = vsel %vm1673, %v2304, 0
        %v2346 = vsel %vm1673, %v2305, 0
        %v2349 = vsel %vm1673, %v2306, 0
        %2351 = vmatpush.msra.mxu0 0.0
        %2352 = vmatpush.msra.mxu0 0.0
        %2353 = vmatpush.msra.mxu0 0.0
        %2354 = vmatpush.msra.mxu0 0.0
        %2355 = vmatpush.msra.mxu0 0.0
        %2356 = vmatpush.msra.mxu0 0.0
        %2357 = vmatpush.msra.mxu0 0.0
        %2358 = vmatpush.msra.mxu0 0.0
        %2359 = vmatpush.msra.mxu0 0.0
        %2360 = vmatpush.msra.mxu0 0.0
        %2361 = vmatpush.msra.mxu0 0.0
        %2362 = vmatpush.msra.mxu0 0.0
        %2363 = vmatpush.msra.mxu0 0.0
        %2364 = vmatpush.msra.mxu0 0.0
        %2365 = vmatpush.msra.mxu0 %v2336
        %2366 = vmatpush.msra.mxu0 %v2329
        %2367 = vmatmul.f32.gmra.mxu0 %v2340
        %v2368 = vpop.f32.mrf.mxu0
        %v2369 = vadd.f32 0.0, %v2368
        %2370 = vmatmul.f32.gmra.mxu0 %v2343
        %v2371 = vpop.f32.mrf.mxu0
        %v2372 = vadd.f32 0.0, %v2371
        %2373 = vmatmul.f32.gmra.mxu0 %v2346
        %v2374 = vpop.f32.mrf.mxu0
        %v2375 = vadd.f32 0.0, %v2374
        %2376 = vmatmul.f32.gmra.mxu0 %v2349
        %v2377 = vpop.f32.mrf.mxu0
        %v2378 = vadd.f32 0.0, %v2377
        %2379 = vdwg.mxu0
        %v2380 = vsub.f32 %v2291, %v2369
        %v2381 = vsub.f32 %v2294, %v2372
        %v2382 = vsub.f32 %v2297, %v2375
        %v2383 = vsub.f32 %v2300, %v2378
        %s2384 = scalar_lea.vmem [#allocation14], 64
        %v2385 = vld [vmem:[%s2384] sm:$0xff]
        %v2386 = vld [vmem:[%s2384 + $0x8] sm:$0xff]
        %v2387 = vld [vmem:[%s2384 + $0x10] sm:$0xff]
        %v2388 = vld [vmem:[%s2384 + $0x18] sm:$0xff]
        %v2390 = vsel %vm1673, %v2385, 0
        %v2393 = vsel %vm1673, %v2386, 0
        %v2396 = vsel %vm1673, %v2387, 0
        %v2399 = vsel %vm1673, %v2388, 0
        %2401 = vmatpush.msra.mxu0 0.0
        %2402 = vmatpush.msra.mxu0 0.0
        %2403 = vmatpush.msra.mxu0 0.0
        %2404 = vmatpush.msra.mxu0 0.0
        %2405 = vmatpush.msra.mxu0 0.0
        %2406 = vmatpush.msra.mxu0 0.0
        %2407 = vmatpush.msra.mxu0 0.0
        %2408 = vmatpush.msra.mxu0 0.0
        %2409 = vmatpush.msra.mxu0 0.0
        %2410 = vmatpush.msra.mxu0 0.0
        %2411 = vmatpush.msra.mxu0 0.0
        %2412 = vmatpush.msra.mxu0 0.0
        %2413 = vmatpush.msra.mxu0 0.0
        %2414 = vmatpush.msra.mxu0 0.0
        %2415 = vmatpush.msra.mxu0 %v2258
        %2416 = vmatpush.msra.mxu0 %v2251
        %2417 = vmatmul.f32.gmra.mxu0 %v2390
        %v2418 = vpop.f32.mrf.mxu0
        %v2419 = vadd.f32 0.0, %v2418
        %2420 = vmatmul.f32.gmra.mxu0 %v2393
        %v2421 = vpop.f32.mrf.mxu0
        %v2422 = vadd.f32 0.0, %v2421
        %2423 = vmatmul.f32.gmra.mxu0 %v2396
        %v2424 = vpop.f32.mrf.mxu0
        %v2425 = vadd.f32 0.0, %v2424
        %2426 = vmatmul.f32.gmra.mxu0 %v2399
        %v2427 = vpop.f32.mrf.mxu0
        %v2428 = vadd.f32 0.0, %v2427
        %2429 = vdwg.mxu0
        %s2430 = scalar_lea.vmem [#allocation14], 96
        %v2431 = vld [vmem:[%s2430] sm:$0xff]
        %v2432 = vld [vmem:[%s2430 + $0x8] sm:$0xff]
        %v2433 = vld [vmem:[%s2430 + $0x10] sm:$0xff]
        %v2434 = vld [vmem:[%s2430 + $0x18] sm:$0xff]
        %v2436 = vsel %vm1673, %v2431, 0
        %v2439 = vsel %vm1673, %v2432, 0
        %v2442 = vsel %vm1673, %v2433, 0
        %v2445 = vsel %vm1673, %v2434, 0
        %2447 = vmatpush.msra.mxu0 0.0
        %2448 = vmatpush.msra.mxu0 0.0
        %2449 = vmatpush.msra.mxu0 0.0
        %2450 = vmatpush.msra.mxu0 0.0
        %2451 = vmatpush.msra.mxu0 0.0
        %2452 = vmatpush.msra.mxu0 0.0
        %2453 = vmatpush.msra.mxu0 0.0
        %2454 = vmatpush.msra.mxu0 0.0
        %2455 = vmatpush.msra.mxu0 0.0
        %2456 = vmatpush.msra.mxu0 0.0
        %2457 = vmatpush.msra.mxu0 0.0
        %2458 = vmatpush.msra.mxu0 0.0
        %2459 = vmatpush.msra.mxu0 0.0
        %2460 = vmatpush.msra.mxu0 0.0
        %2461 = vmatpush.msra.mxu0 %v2336
        %2462 = vmatpush.msra.mxu0 %v2329
        %2463 = vmatmul.f32.gmra.mxu0 %v2436
        %v2464 = vpop.f32.mrf.mxu0
        %v2465 = vadd.f32 0.0, %v2464
        %2466 = vmatmul.f32.gmra.mxu0 %v2439
        %v2467 = vpop.f32.mrf.mxu0
        %v2468 = vadd.f32 0.0, %v2467
        %2469 = vmatmul.f32.gmra.mxu0 %v2442
        %v2470 = vpop.f32.mrf.mxu0
        %v2471 = vadd.f32 0.0, %v2470
        %2472 = vmatmul.f32.gmra.mxu0 %v2445
        %v2473 = vpop.f32.mrf.mxu0
        %v2474 = vadd.f32 0.0, %v2473
        %2475 = vdwg.mxu0
        %v2476 = vsub.f32 %v2419, %v2465
        %v2477 = vsub.f32 %v2422, %v2468
        %v2478 = vsub.f32 %v2425, %v2471
        %v2479 = vsub.f32 %v2428, %v2474
        %2484 = vrot.lane.b32.xlu0 %v2476, 16
        %v2485 = vpop.permute.xlu0 %2484
        %2486 = vrot.lane.b32.xlu0 %v2477, 16
        %v2487 = vpop.permute.xlu0 %2486
        %2488 = vrot.lane.b32.xlu0 %v2478, 16
        %v2489 = vpop.permute.xlu0 %2488
        %2490 = vrot.lane.b32.xlu0 %v2479, 16
        %v2491 = vpop.permute.xlu0 %2490
        %v2496 = vsel %vm1673, %v2380, %v2485
        %v2497 = vsel %vm1673, %v2381, %v2487
        %v2498 = vsel %vm1673, %v2382, %v2489
        %v2499 = vsel %vm1673, %v2383, %v2491
        %v2500 = vld [vmem:[#allocation16] sm:$0xff]
        %v2501 = vld [vmem:[#allocation16 + $0x8] sm:$0xff]
        %v2502 = vld [vmem:[#allocation16 + $0x10] sm:$0xff]
        %v2503 = vld [vmem:[#allocation16 + $0x18] sm:$0xff]
        %v2504 = vld [vmem:[%s10] sm:$0x1]
        %v2506 = vperm.slane %v2504, 0
        %v2509 = vsel %vm908, %v2496, 0
        %v2512 = vsel %vm908, %v2497, 0
        %v2515 = vsel %vm908, %v2498, 0
        %v2518 = vsel %vm908, %v2499, 0
        %2520 = vmatpush.msra.mxu0 0.0
        %2521 = vmatpush.msra.mxu0 0.0
        %2522 = vmatpush.msra.mxu0 0.0
        %2523 = vmatpush.msra.mxu0 0.0
        %2524 = vmatpush.msra.mxu0 0.0
        %2525 = vmatpush.msra.mxu0 0.0
        %2526 = vmatpush.msra.mxu0 0.0
        %2527 = vmatpush.msra.mxu0 0.0
        %2528 = vmatpush.msra.mxu0 0.0
        %2529 = vmatpush.msra.mxu0 0.0
        %2530 = vmatpush.msra.mxu0 0.0
        %2531 = vmatpush.msra.mxu0 0.0
        %2532 = vmatpush.msra.mxu0 %v2503
        %2533 = vmatpush.msra.mxu0 %v2502
        %2534 = vmatpush.msra.mxu0 %v2501
        %2535 = vmatpush.msra.mxu0 %v2500
        %2536 = vmatmul.f32.gmra.mxu0 %v2509
        %v2537 = vpop.f32.mrf.mxu0
        %v2538 = vadd.f32 %v2506, %v2537
        %2539 = vmatmul.f32.gmra.mxu0 %v2512
        %v2540 = vpop.f32.mrf.mxu0
        %v2541 = vadd.f32 %v2506, %v2540
        %2542 = vmatmul.f32.gmra.mxu0 %v2515
        %v2543 = vpop.f32.mrf.mxu0
        %v2544 = vadd.f32 %v2506, %v2543
        %2545 = vmatmul.f32.gmra.mxu0 %v2518
        %v2546 = vpop.f32.mrf.mxu0
        %v2547 = vadd.f32 %v2506, %v2546
        %2548 = vdwg.mxu0
        %v2549 = vld [vmem:[#allocation17] sm:$0xff]
        %v2550 = vld [vmem:[#allocation17 + $0x8] sm:$0xff]
        %v2551 = vld [vmem:[#allocation17 + $0x10] sm:$0xff]
        %v2552 = vld [vmem:[#allocation17 + $0x18] sm:$0xff]
        %v2553 = vld [vmem:[%s12] sm:$0x1]
        %v2555 = vperm.slane %v2553, 0
        %v2558 = vsel %vm908, %v898, 0
        %v2561 = vsel %vm908, %v899, 0
        %2563 = vmatpush.msra.mxu0 0.0
        %2564 = vmatpush.msra.mxu0 0.0
        %2565 = vmatpush.msra.mxu0 0.0
        %2566 = vmatpush.msra.mxu0 0.0
        %2567 = vmatpush.msra.mxu0 0.0
        %2568 = vmatpush.msra.mxu0 0.0
        %2569 = vmatpush.msra.mxu0 0.0
        %2570 = vmatpush.msra.mxu0 0.0
        %2571 = vmatpush.msra.mxu0 0.0
        %2572 = vmatpush.msra.mxu0 0.0
        %2573 = vmatpush.msra.mxu0 0.0
        %2574 = vmatpush.msra.mxu0 0.0
        %2575 = vmatpush.msra.mxu0 %v2552
        %2576 = vmatpush.msra.mxu0 %v2551
        %2577 = vmatpush.msra.mxu0 %v2550
        %2578 = vmatpush.msra.mxu0 %v2549
        %2579 = vmatmul.f32.gmra.mxu0 %v2558
        %v2580 = vpop.f32.mrf.mxu0
        %v2581 = vadd.f32 %v2555, %v2580
        %2582 = vmatmul.f32.gmra.mxu0 %v2561
        %v2583 = vpop.f32.mrf.mxu0
        %v2584 = vadd.f32 %v2555, %v2583
        %2585 = vdwg.mxu0
        %v2586 = vlaneseq
        %v2587 = vshrl.u32 %v2586, 7
        %v2588 = vadd.s32 %v2587, 8
        %v2589 = vadd.s32 %v2587, 16
        %v2590 = vadd.s32 %v2587, 24
        %v2591 = vlaneseq
        %v2592 = vand.u32 %v2591, 127
        %vm2593 = vcmp.gt.s32.totalorder %v2592, %v2587
        %vm2594 = vcmp.gt.s32.totalorder %v2592, %v2588
        %vm2595 = vcmp.gt.s32.totalorder %v2592, %v2589
        %vm2596 = vcmp.gt.s32.totalorder %v2592, %v2590
        %v2597 = vsel %vm2593, -1e+30, 0.0
        %v2598 = vsel %vm2594, -1e+30, 0.0
        %v2599 = vsel %vm2595, -1e+30, 0.0
        %v2600 = vsel %vm2596, -1e+30, 0.0
        %v2601 = vmul.f32 %v2538, 0.35355338
        %v2602 = vmul.f32 %v2541, 0.35355338
        %v2603 = vmul.f32 %v2544, 0.35355338
        %v2604 = vmul.f32 %v2547, 0.35355338
        %v2606 = vsel %vm940, %v2601, 0
        %v2609 = vsel %vm940, %v2602, 0
        %v2612 = vsel %vm940, %v2603, 0
        %v2615 = vsel %vm940, %v2604, 0
        %v2618 = vsel %vm940, %v2581, 0
        %v2621 = vsel %vm940, %v2584, 0
        %2623 = vmatpush.xpose.msra.mxu0 0.0
        %2624 = vmatpush.xpose.msra.mxu0 0.0
        %2625 = vmatpush.xpose.msra.mxu0 0.0
        %2626 = vmatpush.xpose.msra.mxu0 0.0
        %2627 = vmatpush.xpose.msra.mxu0 0.0
        %2628 = vmatpush.xpose.msra.mxu0 0.0
        %2629 = vmatpush.xpose.msra.mxu0 0.0
        %2630 = vmatpush.xpose.msra.mxu0 0.0
        %2631 = vmatpush.xpose.msra.mxu0 0.0
        %2632 = vmatpush.xpose.msra.mxu0 0.0
        %2633 = vmatpush.xpose.msra.mxu0 0.0
        %2634 = vmatpush.xpose.msra.mxu0 0.0
        %2635 = vmatpush.xpose.msra.mxu0 0.0
        %2636 = vmatpush.xpose.msra.mxu0 0.0
        %2637 = vmatpush.xpose.msra.mxu0 %v2621
        %2638 = vmatpush.xpose.msra.mxu0 %v2618
        %2639 = vmatmul.f32.gmra.mxu0 %v2606
        %v2640 = vpop.f32.mrf.mxu0
        %v2641 = vadd.f32 %v2597, %v2640
        %2642 = vmatmul.f32.gmra.mxu0 %v2609
        %v2643 = vpop.f32.mrf.mxu0
        %v2644 = vadd.f32 %v2598, %v2643
        %2645 = vmatmul.f32.gmra.mxu0 %v2612
        %v2646 = vpop.f32.mrf.mxu0
        %v2647 = vadd.f32 %v2599, %v2646
        %2648 = vmatmul.f32.gmra.mxu0 %v2615
        %v2649 = vpop.f32.mrf.mxu0
        %v2650 = vadd.f32 %v2600, %v2649
        %2651 = vdwg.mxu0
        %v2652 = vsel %vm1673, %v2641, -inf
        %2653 = vmax.xlane.f32.xlu0 %v2652
        %v2654 = vpop.xlane.xlu0 %2653
        %v2655 = vsel %vm1673, %v2644, -inf
        %2656 = vmax.xlane.f32.xlu0 %v2655
        %v2657 = vpop.xlane.xlu0 %2656
        %v2658 = vsel %vm1673, %v2647, -inf
        %2659 = vmax.xlane.f32.xlu0 %v2658
        %v2660 = vpop.xlane.xlu0 %2659
        %v2661 = vsel %vm1673, %v2650, -inf
        %2662 = vmax.xlane.f32.xlu0 %v2661
        %v2663 = vpop.xlane.xlu0 %2662
        %v2664 = vsub.f32 %v2641, %v2654
        %v2665 = vsub.f32 %v2644, %v2657
        %v2666 = vsub.f32 %v2647, %v2660
        %v2667 = vsub.f32 %v2650, %v2663
        %v2668 = vmul.f32 %v2664, 1.442695
        %v2669 = vpow.pop %v2668
        %v2670 = vmul.f32 %v2665, 1.442695
        %v2671 = vpow.pop %v2670
        %v2672 = vmul.f32 %v2666, 1.442695
        %v2673 = vpow.pop %v2672
        %v2674 = vmul.f32 %v2667, 1.442695
        %v2675 = vpow.pop %v2674
        %v2676 = vsel %vm1673, %v2669, 0.0
        %2677 = vadd.xlane.f32.xlu0 %v2676
        %v2678 = vpop.xlane.xlu0 %2677
        %v2679 = vsel %vm1673, %v2671, 0.0
        %2680 = vadd.xlane.f32.xlu0 %v2679
        %v2681 = vpop.xlane.xlu0 %2680
        %v2682 = vsel %vm1673, %v2673, 0.0
        %2683 = vadd.xlane.f32.xlu0 %v2682
        %v2684 = vpop.xlane.xlu0 %2683
        %v2685 = vsel %vm1673, %v2675, 0.0
        %2686 = vadd.xlane.f32.xlu0 %v2685
        %v2687 = vpop.xlane.xlu0 %2686
        %v2688 = vrcp.pop %v2678
        %v2689 = vrcp.pop %v2681
        %v2690 = vrcp.pop %v2684
        %v2691 = vrcp.pop %v2687
        %v2692 = vmul.f32 %v2669, %v2688
        %v2693 = vmul.f32 %v2671, %v2689
        %v2694 = vmul.f32 %v2673, %v2690
        %v2695 = vmul.f32 %v2675, %v2691
        %2696 = vrot.lane.b32.xlu0 %v2581, 96
        %v2697 = vpop.permute.xlu0 %2696
        %2698 = vrot.lane.b32.xlu0 %v2584, 96
        %v2699 = vpop.permute.xlu0 %2698
        %v2703 = vsel %vm1673, %v2692, 0
        %v2706 = vsel %vm1673, %v2693, 0
        %v2709 = vsel %vm1673, %v2694, 0
        %v2712 = vsel %vm1673, %v2695, 0
        %2714 = vmatpush.msra.mxu0 0.0
        %2715 = vmatpush.msra.mxu0 0.0
        %2716 = vmatpush.msra.mxu0 0.0
        %2717 = vmatpush.msra.mxu0 0.0
        %2718 = vmatpush.msra.mxu0 0.0
        %2719 = vmatpush.msra.mxu0 0.0
        %2720 = vmatpush.msra.mxu0 0.0
        %2721 = vmatpush.msra.mxu0 0.0
        %2722 = vmatpush.msra.mxu0 0.0
        %2723 = vmatpush.msra.mxu0 0.0
        %2724 = vmatpush.msra.mxu0 0.0
        %2725 = vmatpush.msra.mxu0 0.0
        %2726 = vmatpush.msra.mxu0 0.0
        %2727 = vmatpush.msra.mxu0 0.0
        %2728 = vmatpush.msra.mxu0 %v2699
        %2729 = vmatpush.msra.mxu0 %v2697
        %2730 = vmatmul.f32.gmra.mxu0 %v2703
        %v2731 = vpop.f32.mrf.mxu0
        %v2732 = vadd.f32 0.0, %v2731
        %2733 = vmatmul.f32.gmra.mxu0 %v2706
        %v2734 = vpop.f32.mrf.mxu0
        %v2735 = vadd.f32 0.0, %v2734
        %2736 = vmatmul.f32.gmra.mxu0 %v2709
        %v2737 = vpop.f32.mrf.mxu0
        %v2738 = vadd.f32 0.0, %v2737
        %2739 = vmatmul.f32.gmra.mxu0 %v2712
        %v2740 = vpop.f32.mrf.mxu0
        %v2741 = vadd.f32 0.0, %v2740
        %2742 = vdwg.mxu0
        %2743 = vrot.lane.b32.xlu0 %v2601, 120
        %v2744 = vpop.permute.xlu0 %2743
        %2745 = vrot.lane.b32.xlu0 %v2602, 120
        %v2746 = vpop.permute.xlu0 %2745
        %2747 = vrot.lane.b32.xlu0 %v2603, 120
        %v2748 = vpop.permute.xlu0 %2747
        %2749 = vrot.lane.b32.xlu0 %v2604, 120
        %v2750 = vpop.permute.xlu0 %2749
        %2751 = vrot.lane.b32.xlu0 %v2581, 120
        %v2752 = vpop.permute.xlu0 %2751
        %2753 = vrot.lane.b32.xlu0 %v2584, 120
        %v2754 = vpop.permute.xlu0 %2753
        %v2755 = vsel %vm940, %v2744, 0
        %v2757 = vsel %vm940, %v2746, 0
        %v2759 = vsel %vm940, %v2748, 0
        %v2761 = vsel %vm940, %v2750, 0
        %v2763 = vsel %vm940, %v2752, 0
        %v2765 = vsel %vm940, %v2754, 0
        %2767 = vmatpush.xpose.msra.mxu0 0.0
        %2768 = vmatpush.xpose.msra.mxu0 0.0
        %2769 = vmatpush.xpose.msra.mxu0 0.0
        %2770 = vmatpush.xpose.msra.mxu0 0.0
        %2771 = vmatpush.xpose.msra.mxu0 0.0
        %2772 = vmatpush.xpose.msra.mxu0 0.0
        %2773 = vmatpush.xpose.msra.mxu0 0.0
        %2774 = vmatpush.xpose.msra.mxu0 0.0
        %2775 = vmatpush.xpose.msra.mxu0 0.0
        %2776 = vmatpush.xpose.msra.mxu0 0.0
        %2777 = vmatpush.xpose.msra.mxu0 0.0
        %2778 = vmatpush.xpose.msra.mxu0 0.0
        %2779 = vmatpush.xpose.msra.mxu0 0.0
        %2780 = vmatpush.xpose.msra.mxu0 0.0
        %2781 = vmatpush.xpose.msra.mxu0 %v2765
        %2782 = vmatpush.xpose.msra.mxu0 %v2763
        %2783 = vmatmul.f32.gmra.mxu0 %v2755
        %v2784 = vpop.f32.mrf.mxu0
        %v2785 = vadd.f32 %v2597, %v2784
        %2786 = vmatmul.f32.gmra.mxu0 %v2757
        %v2787 = vpop.f32.mrf.mxu0
        %v2788 = vadd.f32 %v2598, %v2787
        %2789 = vmatmul.f32.gmra.mxu0 %v2759
        %v2790 = vpop.f32.mrf.mxu0
        %v2791 = vadd.f32 %v2599, %v2790
        %2792 = vmatmul.f32.gmra.mxu0 %v2761
        %v2793 = vpop.f32.mrf.mxu0
        %v2794 = vadd.f32 %v2600, %v2793
        %2795 = vdwg.mxu0
        %v2796 = vsel %vm1673, %v2785, -inf
        %2797 = vmax.xlane.f32.xlu0 %v2796
        %v2798 = vpop.xlane.xlu0 %2797
        %v2799 = vsel %vm1673, %v2788, -inf
        %2800 = vmax.xlane.f32.xlu0 %v2799
        %v2801 = vpop.xlane.xlu0 %2800
        %v2802 = vsel %vm1673, %v2791, -inf
        %2803 = vmax.xlane.f32.xlu0 %v2802
        %v2804 = vpop.xlane.xlu0 %2803
        %v2805 = vsel %vm1673, %v2794, -inf
        %2806 = vmax.xlane.f32.xlu0 %v2805
        %v2807 = vpop.xlane.xlu0 %2806
        %v2808 = vsub.f32 %v2785, %v2798
        %v2809 = vsub.f32 %v2788, %v2801
        %v2810 = vsub.f32 %v2791, %v2804
        %v2811 = vsub.f32 %v2794, %v2807
        %v2812 = vmul.f32 %v2808, 1.442695
        %v2813 = vpow.pop %v2812
        %v2814 = vmul.f32 %v2809, 1.442695
        %v2815 = vpow.pop %v2814
        %v2816 = vmul.f32 %v2810, 1.442695
        %v2817 = vpow.pop %v2816
        %v2818 = vmul.f32 %v2811, 1.442695
        %v2819 = vpow.pop %v2818
        %v2820 = vsel %vm1673, %v2813, 0.0
        %2821 = vadd.xlane.f32.xlu0 %v2820
        %v2822 = vpop.xlane.xlu0 %2821
        %v2823 = vsel %vm1673, %v2815, 0.0
        %2824 = vadd.xlane.f32.xlu0 %v2823
        %v2825 = vpop.xlane.xlu0 %2824
        %v2826 = vsel %vm1673, %v2817, 0.0
        %2827 = vadd.xlane.f32.xlu0 %v2826
        %v2828 = vpop.xlane.xlu0 %2827
        %v2829 = vsel %vm1673, %v2819, 0.0
        %2830 = vadd.xlane.f32.xlu0 %v2829
        %v2831 = vpop.xlane.xlu0 %2830
        %v2832 = vrcp.pop %v2822
        %v2833 = vrcp.pop %v2825
        %v2834 = vrcp.pop %v2828
        %v2835 = vrcp.pop %v2831
        %v2836 = vmul.f32 %v2813, %v2832
        %v2837 = vmul.f32 %v2815, %v2833
        %v2838 = vmul.f32 %v2817, %v2834
        %v2839 = vmul.f32 %v2819, %v2835
        %2840 = vrot.lane.b32.xlu0 %v2581, 88
        %v2841 = vpop.permute.xlu0 %2840
        %2842 = vrot.lane.b32.xlu0 %v2584, 88
        %v2843 = vpop.permute.xlu0 %2842
        %v2847 = vsel %vm1673, %v2836, 0
        %v2850 = vsel %vm1673, %v2837, 0
        %v2853 = vsel %vm1673, %v2838, 0
        %v2856 = vsel %vm1673, %v2839, 0
        %2858 = vmatpush.msra.mxu0 0.0
        %2859 = vmatpush.msra.mxu0 0.0
        %2860 = vmatpush.msra.mxu0 0.0
        %2861 = vmatpush.msra.mxu0 0.0
        %2862 = vmatpush.msra.mxu0 0.0
        %2863 = vmatpush.msra.mxu0 0.0
        %2864 = vmatpush.msra.mxu0 0.0
        %2865 = vmatpush.msra.mxu0 0.0
        %2866 = vmatpush.msra.mxu0 0.0
        %2867 = vmatpush.msra.mxu0 0.0
        %2868 = vmatpush.msra.mxu0 0.0
        %2869 = vmatpush.msra.mxu0 0.0
        %2870 = vmatpush.msra.mxu0 0.0
        %2871 = vmatpush.msra.mxu0 0.0
        %2872 = vmatpush.msra.mxu0 %v2843
        %2873 = vmatpush.msra.mxu0 %v2841
        %2874 = vmatmul.f32.gmra.mxu0 %v2847
        %v2875 = vpop.f32.mrf.mxu0
        %v2876 = vadd.f32 0.0, %v2875
        %2877 = vmatmul.f32.gmra.mxu0 %v2850
        %v2878 = vpop.f32.mrf.mxu0
        %v2879 = vadd.f32 0.0, %v2878
        %2880 = vmatmul.f32.gmra.mxu0 %v2853
        %v2881 = vpop.f32.mrf.mxu0
        %v2882 = vadd.f32 0.0, %v2881
        %2883 = vmatmul.f32.gmra.mxu0 %v2856
        %v2884 = vpop.f32.mrf.mxu0
        %v2885 = vadd.f32 0.0, %v2884
        %2886 = vdwg.mxu0
        %2887 = vrot.lane.b32.xlu0 %v2601, 112
        %v2888 = vpop.permute.xlu0 %2887
        %2889 = vrot.lane.b32.xlu0 %v2602, 112
        %v2890 = vpop.permute.xlu0 %2889
        %2891 = vrot.lane.b32.xlu0 %v2603, 112
        %v2892 = vpop.permute.xlu0 %2891
        %2893 = vrot.lane.b32.xlu0 %v2604, 112
        %v2894 = vpop.permute.xlu0 %2893
        %2895 = vrot.lane.b32.xlu0 %v2581, 112
        %v2896 = vpop.permute.xlu0 %2895
        %2897 = vrot.lane.b32.xlu0 %v2584, 112
        %v2898 = vpop.permute.xlu0 %2897
        %v2899 = vsel %vm940, %v2888, 0
        %v2901 = vsel %vm940, %v2890, 0
        %v2903 = vsel %vm940, %v2892, 0
        %v2905 = vsel %vm940, %v2894, 0
        %v2907 = vsel %vm940, %v2896, 0
        %v2909 = vsel %vm940, %v2898, 0
        %2911 = vmatpush.xpose.msra.mxu0 0.0
        %2912 = vmatpush.xpose.msra.mxu0 0.0
        %2913 = vmatpush.xpose.msra.mxu0 0.0
        %2914 = vmatpush.xpose.msra.mxu0 0.0
        %2915 = vmatpush.xpose.msra.mxu0 0.0
        %2916 = vmatpush.xpose.msra.mxu0 0.0
        %2917 = vmatpush.xpose.msra.mxu0 0.0
        %2918 = vmatpush.xpose.msra.mxu0 0.0
        %2919 = vmatpush.xpose.msra.mxu0 0.0
        %2920 = vmatpush.xpose.msra.mxu0 0.0
        %2921 = vmatpush.xpose.msra.mxu0 0.0
        %2922 = vmatpush.xpose.msra.mxu0 0.0
        %2923 = vmatpush.xpose.msra.mxu0 0.0
        %2924 = vmatpush.xpose.msra.mxu0 0.0
        %2925 = vmatpush.xpose.msra.mxu0 %v2909
        %2926 = vmatpush.xpose.msra.mxu0 %v2907
        %2927 = vmatmul.f32.gmra.mxu0 %v2899
        %v2928 = vpop.f32.mrf.mxu0
        %v2929 = vadd.f32 %v2597, %v2928
        %2930 = vmatmul.f32.gmra.mxu0 %v2901
        %v2931 = vpop.f32.mrf.mxu0
        %v2932 = vadd.f32 %v2598, %v2931
        %2933 = vmatmul.f32.gmra.mxu0 %v2903
        %v2934 = vpop.f32.mrf.mxu0
        %v2935 = vadd.f32 %v2599, %v2934
        %2936 = vmatmul.f32.gmra.mxu0 %v2905
        %v2937 = vpop.f32.mrf.mxu0
        %v2938 = vadd.f32 %v2600, %v2937
        %2939 = vdwg.mxu0
        %v2940 = vsel %vm1673, %v2929, -inf
        %2941 = vmax.xlane.f32.xlu0 %v2940
        %v2942 = vpop.xlane.xlu0 %2941
        %v2943 = vsel %vm1673, %v2932, -inf
        %2944 = vmax.xlane.f32.xlu0 %v2943
        %v2945 = vpop.xlane.xlu0 %2944
        %v2946 = vsel %vm1673, %v2935, -inf
        %2947 = vmax.xlane.f32.xlu0 %v2946
        %v2948 = vpop.xlane.xlu0 %2947
        %v2949 = vsel %vm1673, %v2938, -inf
        %2950 = vmax.xlane.f32.xlu0 %v2949
        %v2951 = vpop.xlane.xlu0 %2950
        %v2952 = vsub.f32 %v2929, %v2942
        %v2953 = vsub.f32 %v2932, %v2945
        %v2954 = vsub.f32 %v2935, %v2948
        %v2955 = vsub.f32 %v2938, %v2951
        %v2956 = vmul.f32 %v2952, 1.442695
        %v2957 = vpow.pop %v2956
        %v2958 = vmul.f32 %v2953, 1.442695
        %v2959 = vpow.pop %v2958
        %v2960 = vmul.f32 %v2954, 1.442695
        %v2961 = vpow.pop %v2960
        %v2962 = vmul.f32 %v2955, 1.442695
        %v2963 = vpow.pop %v2962
        %v2964 = vsel %vm1673, %v2957, 0.0
        %2965 = vadd.xlane.f32.xlu0 %v2964
        %v2966 = vpop.xlane.xlu0 %2965
        %v2967 = vsel %vm1673, %v2959, 0.0
        %2968 = vadd.xlane.f32.xlu0 %v2967
        %v2969 = vpop.xlane.xlu0 %2968
        %v2970 = vsel %vm1673, %v2961, 0.0
        %2971 = vadd.xlane.f32.xlu0 %v2970
        %v2972 = vpop.xlane.xlu0 %2971
        %v2973 = vsel %vm1673, %v2963, 0.0
        %2974 = vadd.xlane.f32.xlu0 %v2973
        %v2975 = vpop.xlane.xlu0 %2974
        %v2976 = vrcp.pop %v2966
        %v2977 = vrcp.pop %v2969
        %v2978 = vrcp.pop %v2972
        %v2979 = vrcp.pop %v2975
        %v2980 = vmul.f32 %v2957, %v2976
        %v2981 = vmul.f32 %v2959, %v2977
        %v2982 = vmul.f32 %v2961, %v2978
        %v2983 = vmul.f32 %v2963, %v2979
        %2984 = vrot.lane.b32.xlu0 %v2581, 80
        %v2985 = vpop.permute.xlu0 %2984
        %2986 = vrot.lane.b32.xlu0 %v2584, 80
        %v2987 = vpop.permute.xlu0 %2986
        %v2991 = vsel %vm1673, %v2980, 0
        %v2994 = vsel %vm1673, %v2981, 0
        %v2997 = vsel %vm1673, %v2982, 0
        %v3000 = vsel %vm1673, %v2983, 0
        %3002 = vmatpush.msra.mxu0 0.0
        %3003 = vmatpush.msra.mxu0 0.0
        %3004 = vmatpush.msra.mxu0 0.0
        %3005 = vmatpush.msra.mxu0 0.0
        %3006 = vmatpush.msra.mxu0 0.0
        %3007 = vmatpush.msra.mxu0 0.0
        %3008 = vmatpush.msra.mxu0 0.0
        %3009 = vmatpush.msra.mxu0 0.0
        %3010 = vmatpush.msra.mxu0 0.0
        %3011 = vmatpush.msra.mxu0 0.0
        %3012 = vmatpush.msra.mxu0 0.0
        %3013 = vmatpush.msra.mxu0 0.0
        %3014 = vmatpush.msra.mxu0 0.0
        %3015 = vmatpush.msra.mxu0 0.0
        %3016 = vmatpush.msra.mxu0 %v2987
        %3017 = vmatpush.msra.mxu0 %v2985
        %3018 = vmatmul.f32.gmra.mxu0 %v2991
        %v3019 = vpop.f32.mrf.mxu0
        %v3020 = vadd.f32 0.0, %v3019
        %3021 = vmatmul.f32.gmra.mxu0 %v2994
        %v3022 = vpop.f32.mrf.mxu0
        %v3023 = vadd.f32 0.0, %v3022
        %3024 = vmatmul.f32.gmra.mxu0 %v2997
        %v3025 = vpop.f32.mrf.mxu0
        %v3026 = vadd.f32 0.0, %v3025
        %3027 = vmatmul.f32.gmra.mxu0 %v3000
        %v3028 = vpop.f32.mrf.mxu0
        %v3029 = vadd.f32 0.0, %v3028
        %3030 = vdwg.mxu0
        %3031 = vrot.lane.b32.xlu0 %v2601, 104
        %v3032 = vpop.permute.xlu0 %3031
        %3033 = vrot.lane.b32.xlu0 %v2602, 104
        %v3034 = vpop.permute.xlu0 %3033
        %3035 = vrot.lane.b32.xlu0 %v2603, 104
        %v3036 = vpop.permute.xlu0 %3035
        %3037 = vrot.lane.b32.xlu0 %v2604, 104
        %v3038 = vpop.permute.xlu0 %3037
        %3039 = vrot.lane.b32.xlu0 %v2581, 104
        %v3040 = vpop.permute.xlu0 %3039
        %3041 = vrot.lane.b32.xlu0 %v2584, 104
        %v3042 = vpop.permute.xlu0 %3041
        %v3043 = vsel %vm940, %v3032, 0
        %v3045 = vsel %vm940, %v3034, 0
        %v3047 = vsel %vm940, %v3036, 0
        %v3049 = vsel %vm940, %v3038, 0
        %v3051 = vsel %vm940, %v3040, 0
        %v3053 = vsel %vm940, %v3042, 0
        %3055 = vmatpush.xpose.msra.mxu0 0.0
        %3056 = vmatpush.xpose.msra.mxu0 0.0
        %3057 = vmatpush.xpose.msra.mxu0 0.0
        %3058 = vmatpush.xpose.msra.mxu0 0.0
        %3059 = vmatpush.xpose.msra.mxu0 0.0
        %3060 = vmatpush.xpose.msra.mxu0 0.0
        %3061 = vmatpush.xpose.msra.mxu0 0.0
        %3062 = vmatpush.xpose.msra.mxu0 0.0
        %3063 = vmatpush.xpose.msra.mxu0 0.0
        %3064 = vmatpush.xpose.msra.mxu0 0.0
        %3065 = vmatpush.xpose.msra.mxu0 0.0
        %3066 = vmatpush.xpose.msra.mxu0 0.0
        %3067 = vmatpush.xpose.msra.mxu0 0.0
        %3068 = vmatpush.xpose.msra.mxu0 0.0
        %3069 = vmatpush.xpose.msra.mxu0 %v3053
        %3070 = vmatpush.xpose.msra.mxu0 %v3051
        %3071 = vmatmul.f32.gmra.mxu0 %v3043
        %v3072 = vpop.f32.mrf.mxu0
        %v3073 = vadd.f32 %v2597, %v3072
        %3074 = vmatmul.f32.gmra.mxu0 %v3045
        %v3075 = vpop.f32.mrf.mxu0
        %v3076 = vadd.f32 %v2598, %v3075
        %3077 = vmatmul.f32.gmra.mxu0 %v3047
        %v3078 = vpop.f32.mrf.mxu0
        %v3079 = vadd.f32 %v2599, %v3078
        %3080 = vmatmul.f32.gmra.mxu0 %v3049
        %v3081 = vpop.f32.mrf.mxu0
        %v3082 = vadd.f32 %v2600, %v3081
        %3083 = vdwg.mxu0
        %v3084 = vsel %vm1673, %v3073, -inf
        %3085 = vmax.xlane.f32.xlu0 %v3084
        %v3086 = vpop.xlane.xlu0 %3085
        %v3087 = vsel %vm1673, %v3076, -inf
        %3088 = vmax.xlane.f32.xlu0 %v3087
        %v3089 = vpop.xlane.xlu0 %3088
        %v3090 = vsel %vm1673, %v3079, -inf
        %3091 = vmax.xlane.f32.xlu0 %v3090
        %v3092 = vpop.xlane.xlu0 %3091
        %v3093 = vsel %vm1673, %v3082, -inf
        %3094 = vmax.xlane.f32.xlu0 %v3093
        %v3095 = vpop.xlane.xlu0 %3094
        %v3096 = vsub.f32 %v3073, %v3086
        %v3097 = vsub.f32 %v3076, %v3089
        %v3098 = vsub.f32 %v3079, %v3092
        %v3099 = vsub.f32 %v3082, %v3095
        %v3100 = vmul.f32 %v3096, 1.442695
        %v3101 = vpow.pop %v3100
        %v3102 = vmul.f32 %v3097, 1.442695
        %v3103 = vpow.pop %v3102
        %v3104 = vmul.f32 %v3098, 1.442695
        %v3105 = vpow.pop %v3104
        %v3106 = vmul.f32 %v3099, 1.442695
        %v3107 = vpow.pop %v3106
        %v3108 = vsel %vm1673, %v3101, 0.0
        %3109 = vadd.xlane.f32.xlu0 %v3108
        %v3110 = vpop.xlane.xlu0 %3109
        %v3111 = vsel %vm1673, %v3103, 0.0
        %3112 = vadd.xlane.f32.xlu0 %v3111
        %v3113 = vpop.xlane.xlu0 %3112
        %v3114 = vsel %vm1673, %v3105, 0.0
        %3115 = vadd.xlane.f32.xlu0 %v3114
        %v3116 = vpop.xlane.xlu0 %3115
        %v3117 = vsel %vm1673, %v3107, 0.0
        %3118 = vadd.xlane.f32.xlu0 %v3117
        %v3119 = vpop.xlane.xlu0 %3118
        %v3120 = vrcp.pop %v3110
        %v3121 = vrcp.pop %v3113
        %v3122 = vrcp.pop %v3116
        %v3123 = vrcp.pop %v3119
        %v3124 = vmul.f32 %v3101, %v3120
        %v3125 = vmul.f32 %v3103, %v3121
        %v3126 = vmul.f32 %v3105, %v3122
        %v3127 = vmul.f32 %v3107, %v3123
        %3128 = vrot.lane.b32.xlu0 %v2581, 72
        %v3129 = vpop.permute.xlu0 %3128
        %3130 = vrot.lane.b32.xlu0 %v2584, 72
        %v3131 = vpop.permute.xlu0 %3130
        %v3135 = vsel %vm1673, %v3124, 0
        %v3138 = vsel %vm1673, %v3125, 0
        %v3141 = vsel %vm1673, %v3126, 0
        %v3144 = vsel %vm1673, %v3127, 0
        %3146 = vmatpush.msra.mxu0 0.0
        %3147 = vmatpush.msra.mxu0 0.0
        %3148 = vmatpush.msra.mxu0 0.0
        %3149 = vmatpush.msra.mxu0 0.0
        %3150 = vmatpush.msra.mxu0 0.0
        %3151 = vmatpush.msra.mxu0 0.0
        %3152 = vmatpush.msra.mxu0 0.0
        %3153 = vmatpush.msra.mxu0 0.0
        %3154 = vmatpush.msra.mxu0 0.0
        %3155 = vmatpush.msra.mxu0 0.0
        %3156 = vmatpush.msra.mxu0 0.0
        %3157 = vmatpush.msra.mxu0 0.0
        %3158 = vmatpush.msra.mxu0 0.0
        %3159 = vmatpush.msra.mxu0 0.0
        %3160 = vmatpush.msra.mxu0 %v3131
        %3161 = vmatpush.msra.mxu0 %v3129
        %3162 = vmatmul.f32.gmra.mxu0 %v3135
        %v3163 = vpop.f32.mrf.mxu0
        %v3164 = vadd.f32 0.0, %v3163
        %3165 = vmatmul.f32.gmra.mxu0 %v3138
        %v3166 = vpop.f32.mrf.mxu0
        %v3167 = vadd.f32 0.0, %v3166
        %3168 = vmatmul.f32.gmra.mxu0 %v3141
        %v3169 = vpop.f32.mrf.mxu0
        %v3170 = vadd.f32 0.0, %v3169
        %3171 = vmatmul.f32.gmra.mxu0 %v3144
        %v3172 = vpop.f32.mrf.mxu0
        %v3173 = vadd.f32 0.0, %v3172
        %3174 = vdwg.mxu0
        %3179 = vrot.lane.b32.xlu0 %v2876, 8
        %v3180 = vpop.permute.xlu0 %3179
        %3181 = vrot.lane.b32.xlu0 %v2879, 8
        %v3182 = vpop.permute.xlu0 %3181
        %3183 = vrot.lane.b32.xlu0 %v2882, 8
        %v3184 = vpop.permute.xlu0 %3183
        %3185 = vrot.lane.b32.xlu0 %v2885, 8
        %v3186 = vpop.permute.xlu0 %3185
        %3195 = vrot.lane.b32.xlu0 %v3020, 16
        %v3196 = vpop.permute.xlu0 %3195
        %3197 = vrot.lane.b32.xlu0 %v3023, 16
        %v3198 = vpop.permute.xlu0 %3197
        %3199 = vrot.lane.b32.xlu0 %v3026, 16
        %v3200 = vpop.permute.xlu0 %3199
        %3201 = vrot.lane.b32.xlu0 %v3029, 16
        %v3202 = vpop.permute.xlu0 %3201
        %3211 = vrot.lane.b32.xlu0 %v3164, 24
        %v3212 = vpop.permute.xlu0 %3211
        %3213 = vrot.lane.b32.xlu0 %v3167, 24
        %v3214 = vpop.permute.xlu0 %3213
        %3215 = vrot.lane.b32.xlu0 %v3170, 24
        %v3216 = vpop.permute.xlu0 %3215
        %3217 = vrot.lane.b32.xlu0 %v3173, 24
        %v3218 = vpop.permute.xlu0 %3217
        %v3223 = vsel %vm940, %v2732, %v3180
        %v3224 = vsel %vm940, %v2735, %v3182
        %v3225 = vsel %vm940, %v2738, %v3184
        %v3226 = vsel %vm940, %v2741, %v3186
        %v3227 = vsel %vm1673, %v3223, %v3196
        %v3228 = vsel %vm1673, %v3224, %v3198
        %v3229 = vsel %vm1673, %v3225, %v3200
        %v3230 = vsel %vm1673, %v3226, %v3202
        %vm3231 = vcmask 195584
        %v3232 = vsel %vm3231, %v3227, %v3212
        %v3233 = vsel %vm3231, %v3228, %v3214
        %v3234 = vsel %vm3231, %v3229, %v3216
        %v3235 = vsel %vm3231, %v3230, %v3218
        %v3236 = vld [vmem:[#allocation19] sm:$0xff]
        %v3237 = vld [vmem:[#allocation19 + $0x8] sm:$0xff]
        %v3238 = vld [vmem:[#allocation19 + $0x10] sm:$0xff]
        %v3239 = vld [vmem:[#allocation19 + $0x18] sm:$0xff]
        %v3240 = vld [vmem:[%s14] sm:$0x1]
        %v3242 = vperm.slane %v3240, 0
        %v3245 = vsel %vm908, %v3232, 0
        %v3248 = vsel %vm908, %v3233, 0
        %v3251 = vsel %vm908, %v3234, 0
        %v3254 = vsel %vm908, %v3235, 0
        %3256 = vmatpush.msra.mxu0 0.0
        %3257 = vmatpush.msra.mxu0 0.0
        %3258 = vmatpush.msra.mxu0 0.0
        %3259 = vmatpush.msra.mxu0 0.0
        %3260 = vmatpush.msra.mxu0 0.0
        %3261 = vmatpush.msra.mxu0 0.0
        %3262 = vmatpush.msra.mxu0 0.0
        %3263 = vmatpush.msra.mxu0 0.0
        %3264 = vmatpush.msra.mxu0 0.0
        %3265 = vmatpush.msra.mxu0 0.0
        %3266 = vmatpush.msra.mxu0 0.0
        %3267 = vmatpush.msra.mxu0 0.0
        %3268 = vmatpush.msra.mxu0 %v3239
        %3269 = vmatpush.msra.mxu0 %v3238
        %3270 = vmatpush.msra.mxu0 %v3237
        %3271 = vmatpush.msra.mxu0 %v3236
        %3272 = vmatmul.f32.gmra.mxu0 %v3245
        %v3273 = vpop.f32.mrf.mxu0
        %v3274 = vadd.f32 %v3242, %v3273
        %3275 = vmatmul.f32.gmra.mxu0 %v3248
        %v3276 = vpop.f32.mrf.mxu0
        %v3277 = vadd.f32 %v3242, %v3276
        %3278 = vmatmul.f32.gmra.mxu0 %v3251
        %v3279 = vpop.f32.mrf.mxu0
        %v3280 = vadd.f32 %v3242, %v3279
        %3281 = vmatmul.f32.gmra.mxu0 %v3254
        %v3282 = vpop.f32.mrf.mxu0
        %v3283 = vadd.f32 %v3242, %v3282
        %3284 = vdwg.mxu0
        %v3285 = vadd.f32 %v2496, %v3274
        %v3286 = vadd.f32 %v2497, %v3277
        %v3287 = vadd.f32 %v2498, %v3280
        %v3288 = vadd.f32 %v2499, %v3283
        %v3289 = vld [vmem:[%s15] sm:$0x3]
        %v3290 = vsel %vm908, %v3285, 0.0
        %3291 = vadd.xlane.f32.xlu0 %v3290
        %v3292 = vpop.xlane.xlu0 %3291
        %v3293 = vsel %vm908, %v3286, 0.0
        %3294 = vadd.xlane.f32.xlu0 %v3293
        %v3295 = vpop.xlane.xlu0 %3294
        %v3296 = vsel %vm908, %v3287, 0.0
        %3297 = vadd.xlane.f32.xlu0 %v3296
        %v3298 = vpop.xlane.xlu0 %3297
        %v3299 = vsel %vm908, %v3288, 0.0
        %3300 = vadd.xlane.f32.xlu0 %v3299
        %v3301 = vpop.xlane.xlu0 %3300
        %v3302 = vrcp.pop 32.0
        %v3303 = vmul.f32 32.0, %v3302
        %v3304 = vsub.f32 1.0, %v3303
        %v3305 = vmul.f32 %v3302, %v3304
        %v3306 = vadd.f32 %v3302, %v3305
        %vm3307 = vweird.f32 %v3302
        %v3308 = vsel %vm3307, %v3302, %v3306
        %v3309 = vmul.f32 %v3292, %v3308
        %v3310 = vmul.f32 %v3295, %v3308
        %v3311 = vmul.f32 %v3298, %v3308
        %v3312 = vmul.f32 %v3301, %v3308
        %v3313 = vsub.f32 %v3285, %v3309
        %v3314 = vsub.f32 %v3286, %v3310
        %v3315 = vsub.f32 %v3287, %v3311
        %v3316 = vsub.f32 %v3288, %v3312
        %v3317 = vmul.f32 %v3313, %v3313
        %v3318 = vmul.f32 %v3314, %v3314
        %v3319 = vmul.f32 %v3315, %v3315
        %v3320 = vmul.f32 %v3316, %v3316
        %v3321 = vsel %vm908, %v3317, 0.0
        %3322 = vadd.xlane.f32.xlu0 %v3321
        %v3323 = vpop.xlane.xlu0 %3322
        %v3324 = vsel %vm908, %v3318, 0.0
        %3325 = vadd.xlane.f32.xlu0 %v3324
        %v3326 = vpop.xlane.xlu0 %3325
        %v3327 = vsel %vm908, %v3319, 0.0
        %3328 = vadd.xlane.f32.xlu0 %v3327
        %v3329 = vpop.xlane.xlu0 %3328
        %v3330 = vsel %vm908, %v3320, 0.0
        %3331 = vadd.xlane.f32.xlu0 %v3330
        %v3332 = vpop.xlane.xlu0 %3331
        %v3333 = vmul.f32 %v3323, %v3308
        %v3334 = vmul.f32 %v3326, %v3308
        %v3335 = vmul.f32 %v3329, %v3308
        %v3336 = vmul.f32 %v3332, %v3308
        %v3337 = vadd.f32 %v3333, 1e-05
        %v3338 = vadd.f32 %v3334, 1e-05
        %v3339 = vadd.f32 %v3335, 1e-05
        %v3340 = vadd.f32 %v3336, 1e-05
        %v3341 = vrsqrt.pop %v3337
        %v3342 = vmul.f32 %v3341, %v3337
        %v3343 = vmul.f32 %v3342, %v3341
        %v3344 = vmul.f32 0.5, %v3343
        %v3345 = vsub.f32 1.5, %v3344
        %v3346 = vmul.f32 %v3341, %v3345
        %vm3347 = vweird.f32 %v3337
        %vm3348 = vweird.f32 %v3341
        %vm3349 = vmor %vm3347, %vm3348
        %v3350 = vsel %vm3349, %v3341, %v3346
        %v3351 = vrsqrt.pop %v3338
        %v3352 = vmul.f32 %v3351, %v3338
        %v3353 = vmul.f32 %v3352, %v3351
        %v3354 = vmul.f32 0.5, %v3353
        %v3355 = vsub.f32 1.5, %v3354
        %v3356 = vmul.f32 %v3351, %v3355
        %vm3357 = vweird.f32 %v3338
        %vm3358 = vweird.f32 %v3351
        %vm3359 = vmor %vm3357, %vm3358
        %v3360 = vsel %vm3359, %v3351, %v3356
        %v3361 = vrsqrt.pop %v3339
        %v3362 = vmul.f32 %v3361, %v3339
        %v3363 = vmul.f32 %v3362, %v3361
        %v3364 = vmul.f32 0.5, %v3363
        %v3365 = vsub.f32 1.5, %v3364
        %v3366 = vmul.f32 %v3361, %v3365
        %vm3367 = vweird.f32 %v3339
        %vm3368 = vweird.f32 %v3361
        %vm3369 = vmor %vm3367, %vm3368
        %v3370 = vsel %vm3369, %v3361, %v3366
        %v3371 = vrsqrt.pop %v3340
        %v3372 = vmul.f32 %v3371, %v3340
        %v3373 = vmul.f32 %v3372, %v3371
        %v3374 = vmul.f32 0.5, %v3373
        %v3375 = vsub.f32 1.5, %v3374
        %v3376 = vmul.f32 %v3371, %v3375
        %vm3377 = vweird.f32 %v3340
        %vm3378 = vweird.f32 %v3371
        %vm3379 = vmor %vm3377, %vm3378
        %v3380 = vsel %vm3379, %v3371, %v3376
        %v3381 = vmul.f32 %v3313, %v3350
        %v3382 = vmul.f32 %v3314, %v3360
        %v3383 = vmul.f32 %v3315, %v3370
        %v3384 = vmul.f32 %v3316, %v3380
        %v3385 = vperm.slane %v3289, 0
        %v3386 = vmul.f32 %v3381, %v3385
        %v3387 = vmul.f32 %v3382, %v3385
        %v3388 = vmul.f32 %v3383, %v3385
        %v3389 = vmul.f32 %v3384, %v3385
        %v3390 = vperm.slane %v3289, 1
        %v3391 = vadd.f32 %v3386, %v3390
        %v3392 = vadd.f32 %v3387, %v3390
        %v3393 = vadd.f32 %v3388, %v3390
        %v3394 = vadd.f32 %v3389, %v3390
        %v3395 = vld [vmem:[#allocation20] sm:$0xff]
        %v3396 = vld [vmem:[#allocation20 + $0x8] sm:$0xff]
        %v3397 = vld [vmem:[#allocation20 + $0x10] sm:$0xff]
        %v3398 = vld [vmem:[#allocation20 + $0x18] sm:$0xff]
        %v3399 = vld [vmem:[%s17] sm:$0x1]
        %v3401 = vperm.slane %v3399, 0
        %v3404 = vsel %vm908, %v3391, 0
        %v3407 = vsel %vm908, %v3392, 0
        %v3410 = vsel %vm908, %v3393, 0
        %v3413 = vsel %vm908, %v3394, 0
        %3415 = vmatpush.msra.mxu0 0.0
        %3416 = vmatpush.msra.mxu0 0.0
        %3417 = vmatpush.msra.mxu0 0.0
        %3418 = vmatpush.msra.mxu0 0.0
        %3419 = vmatpush.msra.mxu0 0.0
        %3420 = vmatpush.msra.mxu0 0.0
        %3421 = vmatpush.msra.mxu0 0.0
        %3422 = vmatpush.msra.mxu0 0.0
        %3423 = vmatpush.msra.mxu0 0.0
        %3424 = vmatpush.msra.mxu0 0.0
        %3425 = vmatpush.msra.mxu0 0.0
        %3426 = vmatpush.msra.mxu0 0.0
        %3427 = vmatpush.msra.mxu0 %v3398
        %3428 = vmatpush.msra.mxu0 %v3397
        %3429 = vmatpush.msra.mxu0 %v3396
        %3430 = vmatpush.msra.mxu0 %v3395
        %3431 = vmatmul.f32.gmra.mxu0 %v3404
        %v3432 = vpop.f32.mrf.mxu0
        %v3433 = vadd.f32 %v3401, %v3432
        %3434 = vmatmul.f32.gmra.mxu0 %v3407
        %v3435 = vpop.f32.mrf.mxu0
        %v3436 = vadd.f32 %v3401, %v3435
        %3437 = vmatmul.f32.gmra.mxu0 %v3410
        %v3438 = vpop.f32.mrf.mxu0
        %v3439 = vadd.f32 %v3401, %v3438
        %3440 = vmatmul.f32.gmra.mxu0 %v3413
        %v3441 = vpop.f32.mrf.mxu0
        %v3442 = vadd.f32 %v3401, %v3441
        %3443 = vdwg.mxu0
        %v3444 = vmax.f32 %v3433, 0.0
        %v3445 = vmax.f32 %v3436, 0.0
        %v3446 = vmax.f32 %v3439, 0.0
        %v3447 = vmax.f32 %v3442, 0.0
        %v3448 = vld [vmem:[#allocation22] sm:$0xff]
        %v3449 = vld [vmem:[#allocation22 + $0x8] sm:$0xff]
        %v3450 = vld [vmem:[#allocation22 + $0x10] sm:$0xff]
        %v3451 = vld [vmem:[#allocation22 + $0x18] sm:$0xff]
        %v3452 = vld [vmem:[#allocation22 + $0x20] sm:$0xff]
        %v3453 = vld [vmem:[#allocation22 + $0x28] sm:$0xff]
        %v3454 = vld [vmem:[#allocation22 + $0x30] sm:$0xff]
        %v3455 = vld [vmem:[#allocation22 + $0x38] sm:$0xff]
        %v3456 = vld [vmem:[%s19] sm:$0x1]
        %v3458 = vperm.slane %v3456, 0
        %vm3460 = vcmask 523264
        %v3462 = vsel %vm3460, %v3444, 0
        %v3465 = vsel %vm3460, %v3445, 0
        %v3468 = vsel %vm3460, %v3446, 0
        %v3471 = vsel %vm3460, %v3447, 0
        %3473 = vmatpush.msra.mxu0 0.0
        %3474 = vmatpush.msra.mxu0 0.0
        %3475 = vmatpush.msra.mxu0 0.0
        %3476 = vmatpush.msra.mxu0 0.0
        %3477 = vmatpush.msra.mxu0 0.0
        %3478 = vmatpush.msra.mxu0 0.0
        %3479 = vmatpush.msra.mxu0 0.0
        %3480 = vmatpush.msra.mxu0 0.0
        %3481 = vmatpush.msra.mxu0 %v3455
        %3482 = vmatpush.msra.mxu0 %v3454
        %3483 = vmatpush.msra.mxu0 %v3453
        %3484 = vmatpush.msra.mxu0 %v3452
        %3485 = vmatpush.msra.mxu0 %v3451
        %3486 = vmatpush.msra.mxu0 %v3450
        %3487 = vmatpush.msra.mxu0 %v3449
        %3488 = vmatpush.msra.mxu0 %v3448
        %3489 = vmatmul.f32.gmra.mxu0 %v3462
        %v3490 = vpop.f32.mrf.mxu0
        %v3491 = vadd.f32 %v3458, %v3490
        %3492 = vmatmul.f32.gmra.mxu0 %v3465
        %v3493 = vpop.f32.mrf.mxu0
        %v3494 = vadd.f32 %v3458, %v3493
        %3495 = vmatmul.f32.gmra.mxu0 %v3468
        %v3496 = vpop.f32.mrf.mxu0
        %v3497 = vadd.f32 %v3458, %v3496
        %3498 = vmatmul.f32.gmra.mxu0 %v3471
        %v3499 = vpop.f32.mrf.mxu0
        %v3500 = vadd.f32 %v3458, %v3499
        %3501 = vdwg.mxu0
        %v3502 = vadd.f32 %v3391, %v3491
        %v3503 = vadd.f32 %v3392, %v3494
        %v3504 = vadd.f32 %v3393, %v3497
        %v3505 = vadd.f32 %v3394, %v3500
        %v3506 = vld [vmem:[%s20] sm:$0x3]
        %v3507 = vsel %vm908, %v3502, 0.0
        %3508 = vadd.xlane.f32.xlu0 %v3507
        %v3509 = vpop.xlane.xlu0 %3508
        %v3510 = vsel %vm908, %v3503, 0.0
        %3511 = vadd.xlane.f32.xlu0 %v3510
        %v3512 = vpop.xlane.xlu0 %3511
        %v3513 = vsel %vm908, %v3504, 0.0
        %3514 = vadd.xlane.f32.xlu0 %v3513
        %v3515 = vpop.xlane.xlu0 %3514
        %v3516 = vsel %vm908, %v3505, 0.0
        %3517 = vadd.xlane.f32.xlu0 %v3516
        %v3518 = vpop.xlane.xlu0 %3517
        %v3519 = vmul.f32 %v3509, %v3308
        %v3520 = vmul.f32 %v3512, %v3308
        %v3521 = vmul.f32 %v3515, %v3308
        %v3522 = vmul.f32 %v3518, %v3308
        %v3523 = vsub.f32 %v3502, %v3519
        %v3524 = vsub.f32 %v3503, %v3520
        %v3525 = vsub.f32 %v3504, %v3521
        %v3526 = vsub.f32 %v3505, %v3522
        %v3527 = vmul.f32 %v3523, %v3523
        %v3528 = vmul.f32 %v3524, %v3524
        %v3529 = vmul.f32 %v3525, %v3525
        %v3530 = vmul.f32 %v3526, %v3526
        %v3531 = vsel %vm908, %v3527, 0.0
        %3532 = vadd.xlane.f32.xlu0 %v3531
        %v3533 = vpop.xlane.xlu0 %3532
        %v3534 = vsel %vm908, %v3528, 0.0
        %3535 = vadd.xlane.f32.xlu0 %v3534
        %v3536 = vpop.xlane.xlu0 %3535
        %v3537 = vsel %vm908, %v3529, 0.0
        %3538 = vadd.xlane.f32.xlu0 %v3537
        %v3539 = vpop.xlane.xlu0 %3538
        %v3540 = vsel %vm908, %v3530, 0.0
        %3541 = vadd.xlane.f32.xlu0 %v3540
        %v3542 = vpop.xlane.xlu0 %3541
        %v3543 = vmul.f32 %v3533, %v3308
        %v3544 = vmul.f32 %v3536, %v3308
        %v3545 = vmul.f32 %v3539, %v3308
        %v3546 = vmul.f32 %v3542, %v3308
        %v3547 = vadd.f32 %v3543, 1e-05
        %v3548 = vadd.f32 %v3544, 1e-05
        %v3549 = vadd.f32 %v3545, 1e-05
        %v3550 = vadd.f32 %v3546, 1e-05
        %v3551 = vrsqrt.pop %v3547
        %v3552 = vmul.f32 %v3551, %v3547
        %v3553 = vmul.f32 %v3552, %v3551
        %v3554 = vmul.f32 0.5, %v3553
        %v3555 = vsub.f32 1.5, %v3554
        %v3556 = vmul.f32 %v3551, %v3555
        %vm3557 = vweird.f32 %v3547
        %vm3558 = vweird.f32 %v3551
        %vm3559 = vmor %vm3557, %vm3558
        %v3560 = vsel %vm3559, %v3551, %v3556
        %v3561 = vrsqrt.pop %v3548
        %v3562 = vmul.f32 %v3561, %v3548
        %v3563 = vmul.f32 %v3562, %v3561
        %v3564 = vmul.f32 0.5, %v3563
        %v3565 = vsub.f32 1.5, %v3564
        %v3566 = vmul.f32 %v3561, %v3565
        %vm3567 = vweird.f32 %v3548
        %vm3568 = vweird.f32 %v3561
        %vm3569 = vmor %vm3567, %vm3568
        %v3570 = vsel %vm3569, %v3561, %v3566
        %v3571 = vrsqrt.pop %v3549
        %v3572 = vmul.f32 %v3571, %v3549
        %v3573 = vmul.f32 %v3572, %v3571
        %v3574 = vmul.f32 0.5, %v3573
        %v3575 = vsub.f32 1.5, %v3574
        %v3576 = vmul.f32 %v3571, %v3575
        %vm3577 = vweird.f32 %v3549
        %vm3578 = vweird.f32 %v3571
        %vm3579 = vmor %vm3577, %vm3578
        %v3580 = vsel %vm3579, %v3571, %v3576
        %v3581 = vrsqrt.pop %v3550
        %v3582 = vmul.f32 %v3581, %v3550
        %v3583 = vmul.f32 %v3582, %v3581
        %v3584 = vmul.f32 0.5, %v3583
        %v3585 = vsub.f32 1.5, %v3584
        %v3586 = vmul.f32 %v3581, %v3585
        %vm3587 = vweird.f32 %v3550
        %vm3588 = vweird.f32 %v3581
        %vm3589 = vmor %vm3587, %vm3588
        %v3590 = vsel %vm3589, %v3581, %v3586
        %v3591 = vmul.f32 %v3523, %v3560
        %v3592 = vmul.f32 %v3524, %v3570
        %v3593 = vmul.f32 %v3525, %v3580
        %v3594 = vmul.f32 %v3526, %v3590
        %v3595 = vperm.slane %v3506, 0
        %v3596 = vmul.f32 %v3591, %v3595
        %v3597 = vmul.f32 %v3592, %v3595
        %v3598 = vmul.f32 %v3593, %v3595
        %v3599 = vmul.f32 %v3594, %v3595
        %v3600 = vperm.slane %v3506, 1
        %v3601 = vadd.f32 %v3596, %v3600
        %v3602 = vadd.f32 %v3597, %v3600
        %v3603 = vadd.f32 %v3598, %v3600
        %v3604 = vadd.f32 %v3599, %v3600
        %3605 = vst.msk [vmem:[%s896] sm:$0xff] %vm908, %v3601
        %3606 = vst.msk [vmem:[%s896 + $0x8] sm:$0xff] %vm908, %v3602
        %3607 = vst.msk [vmem:[%s896 + $0x10] sm:$0xff] %vm908, %v3603
        %3608 = vst.msk [vmem:[%s896 + $0x18] sm:$0xff] %vm908, %v3604
        %s3609 = sand.u32 %s505, 1
        %s3610 = scalar_lea.sflag [#allocation4], %s3609
        %s3611 = sand.u32 %s505, 1
        %s3612 = smul.addr %s3611, 32
        %s3613 = scalar_lea.vmem [#allocation23], %s3612
        // Predicated region
        $region157: #{_lambda_.1} parent=103 // pred_check
          %p3614 = pneg %p515
        $region158: #{_lambda_.1} parent=103 // pred_check_branch
          %3616 = sbr.rel (%p3614) target = $region160
        $region159: #{_lambda_.1} parent=103 // pred_region
          %3618 = vsyncadd %s3610, 0
          %s3619 = smul.addr %s46, 4
          %s3620 = smul.addr %s3619, 8
          %s3621 = scalar_lea.hbm %s21, %s3620
          %s3622 = sshll.u32 %s3613, 4
          %s3623 = int_to_ptr.vmem [resolvable:$true] %s3622
          %s3624 = sshll.u32 %s3621, 4
          %s3625 = int_to_ptr.hbm [resolvable:$true] %s3624
          %3630 = dma.vmem_to_hbm [thread:$0]  %s3623, 512, %s3625, %s3610, 128, 128, 8
        $region160: #{_lambda_.1} parent=103 // pred_fallthru
          _
      $region104: #{_lambda_.1} parent=5 // pred_fallthru
        _
      %p3631 = scmp.le.s32.totalorder 2, %s41
      // Predicated region
      $region161: #{_lambda_.1} parent=5 // pred_check
        %p3632 = pneg %p3631
      $region162: #{_lambda_.1} parent=5 // pred_check_branch
        %3634 = sbr.rel (%p3632) target = $region164
      $region163: #{_lambda_.1} parent=5 // pred_region
        %s3635 = ssub.s32 %s41, 2
        // Predicated region
        $region165: #{_lambda_.1} parent=163 // pred_check
          %p3636 = pneg %p521
        $region166: #{_lambda_.1} parent=163 // pred_check_branch
          %3638 = sbr.rel (%p3636) target = $region168
        $region167: #{_lambda_.1} parent=163 // pred_region
          %s3639 = sand.u32 %s506, 1
          %s3640 = scalar_lea.sflag [#allocation4], %s3639
          %s3641 = sand.u32 %s506, 1
          %s3642 = smul.addr %s3641, 32
          %s3643 = scalar_lea.vmem [#allocation23], %s3642
          %3645 = dma.done %s3640, 512
        $region168: #{_lambda_.1} parent=163 // pred_fallthru
          _
      $region164: #{_lambda_.1} parent=5 // pred_fallthru
        _
    $region6: #{_lambda_.1} parent=1 // loop_footer
      %s45 = sadd.s32 1, %s41
    $region7: #{_lambda_.1} parent=1 // loop_footer_branch
      %40 = sbr.rel target = $region3
    $region8: #{_lambda_.1} parent=1 // loop_exit
      _
    %3646 = vsyncpa [#allocation3], 1
    %s3647 = scalar_lea.sflag [#allocation3], 1
    %3648 = vsyncpa %s3647, 1
    %3649 = vsyncpa [#allocation6], 1
    %s3650 = scalar_lea.sflag [#allocation6], 1
    %3651 = vsyncpa %s3650, 1
    %3652 = vsyncpa [#allocation9], 1
    %3653 = vsyncpa [#allocation12], 1
    %3654 = vsyncpa [#allocation15], 1
    %3655 = vsyncpa [#allocation18], 1
    %3656 = vsyncpa [#allocation21], 1
    %3657 = vsyncpa [#allocation4], 1
    %s3658 = scalar_lea.sflag [#allocation4], 1
    %3659 = vsyncpa %s3658, 1

</llo_original>
